<compile_context>
chip_gen: v5e
topology: v5e:2x2
jax: 0.10.0
libtpu: 0.0.40
codegen_flags: <defaults>
</compile_context>

<pallas_src>
import functools
import math

import jax
import jax.numpy as jnp
from jax import lax
from jax.experimental import pallas as pl
from jax.experimental.pallas import tpu as pltpu


# ---------------------------------------------------------------------------
# Helpers
# ---------------------------------------------------------------------------
def _ln_math(x, w, b, eps):
    mean = jnp.mean(x, axis=-1, keepdims=True)
    xc = x - mean
    var = jnp.mean(xc * xc, axis=-1, keepdims=True)
    return xc * lax.rsqrt(var + eps) * w + b


def _row_tile(m):
    """Row tile: big when M is big, otherwise >=2 row tiles for v7x's 2nd TC."""
    if m >= 256:
        return 128
    if m >= 16:
        return max(8, ((m // 2) // 8) * 8)
    return 8


def _col_tile(n, cap=512):
    if n <= cap:
        return n
    for t in (512, 384, 256, 128):
        if n % t == 0:
            return t
    return 128


# ---------------------------------------------------------------------------
# Kernel 1: fused  x * sqrt(d_model) + positional_encoding  (grid over batch)
# ---------------------------------------------------------------------------
def _scale_add_pe_kernel(x_ref, pe_ref, o_ref, *, scale):
    o_ref[...] = x_ref[...] * scale + pe_ref[...]


def scale_add_positional_encoding(x, pe, scale):
    """x: (B, L, D); pe: (L, D).  Returns x*scale + pe (broadcast over batch)."""
    B, L, D = x.shape
    return pl.pallas_call(
        functools.partial(_scale_add_pe_kernel, scale=scale),
        out_shape=jax.ShapeDtypeStruct((B, L, D), x.dtype),
        grid_spec=pltpu.PrefetchScalarGridSpec(
            num_scalar_prefetch=0,
            grid=(B,),
            in_specs=[
                pl.BlockSpec((1, L, D), lambda b: (b, 0, 0)),
                pl.BlockSpec((L, D), lambda b: (0, 0)),
            ],
            out_specs=pl.BlockSpec((1, L, D), lambda b: (b, 0, 0)),
        ),
        compiler_params=pltpu.CompilerParams(dimension_semantics=("parallel",)),
    )(x, pe)


# ---------------------------------------------------------------------------
# Kernel 2: fused linear  (bf16 MXU, f32 acc)  with optional fusions:
#   - input LayerNorm prologue (ln_in)          [requires single K tile]
#   - bias + ReLU epilogue
#   - residual-add + LayerNorm epilogue (ln)    [requires tn == N]
# ---------------------------------------------------------------------------
def _linear_kernel(*refs, activation, fuse_res_ln, fuse_in_ln, eps):
    it = iter(refs)
    a_ref = next(it)
    w_ref = next(it)
    b_ref = next(it)
    if fuse_in_ln:
        li_w = next(it)
        li_b = next(it)
    if fuse_res_ln:
        r_ref = next(it)
        lo_w = next(it)
        lo_b = next(it)
    o_ref = next(it)
    acc_ref = next(it)

    k = pl.program_id(2)

    @pl.when(k == 0)
    def _():
        acc_ref[...] = jnp.zeros_like(acc_ref)

    a = a_ref[...].astype(jnp.float32)
    if fuse_in_ln:
        a = _ln_math(a, li_w[...], li_b[...], eps)
    acc_ref[...] += jnp.dot(a.astype(jnp.bfloat16), w_ref[...],
                            preferred_element_type=jnp.float32)

    @pl.when(k == pl.num_programs(2) - 1)
    def _():
        out = acc_ref[...] + b_ref[...]
        if activation == "relu":
            out = jnp.maximum(out, 0.0)
        if fuse_res_ln:
            out = _ln_math(out + r_ref[...].astype(jnp.float32),
                           lo_w[...], lo_b[...], eps)
        o_ref[...] = out.astype(o_ref.dtype)


def linear(x2d, w, b, *, activation=None, residual=None, ln=None, ln_in=None,
           eps=1e-5):
    """out = [ReLU](LN_in(x) @ w + b); if ln: out = LN(residual + out)."""
    M, K = x2d.shape
    Kw, N = w.shape
    assert K == Kw
    fuse_res_ln = ln is not None
    fuse_in_ln = ln_in is not None

    tm = _row_tile(M)
    Mp = pl.cdiv(M, tm) * tm
    Kp = pl.cdiv(K, 128) * 128
    Np = pl.cdiv(N, 128) * 128
    if fuse_in_ln:
        assert Kp == K, "input-LN fusion needs K to be a multiple of 128"
    if fuse_res_ln:
        assert Np == N, "residual+LN fusion needs N to be a multiple of 128"

    tk = Kp if fuse_in_ln else _col_tile(Kp)
    tn = Np if fuse_res_ln else _col_tile(Np)

    x_p = jnp.pad(x2d, ((0, Mp - M), (0, Kp - K))) if (Mp != M or Kp != K) else x2d
    w_p = jnp.pad(w, ((0, Kp - K), (0, Np - N))) if (Kp != K or Np != N) else w
    w_p = w_p.astype(jnp.bfloat16)      # halve weight DMA, feed the MXU fast path
    b_p = b.reshape(1, N).astype(jnp.float32)
    if Np != N:
        b_p = jnp.pad(b_p, ((0, 0), (0, Np - N)))

    in_specs = [
        pl.BlockSpec((tm, tk), lambda i, j, k: (i, k)),
        pl.BlockSpec((tk, tn), lambda i, j, k: (k, j)),
        pl.BlockSpec((1, tn), lambda i, j, k: (0, j)),
    ]
    args = [x_p, w_p, b_p]
    if fuse_in_ln:
        li_w, li_b = ln_in
        in_specs += [pl.BlockSpec((1, tk), lambda i, j, k: (0, k)),
                     pl.BlockSpec((1, tk), lambda i, j, k: (0, k))]
        args += [li_w.reshape(1, K).astype(jnp.float32),
                 li_b.reshape(1, K).astype(jnp.float32)]
    if fuse_res_ln:
        lo_w, lo_b = ln
        r_p = residual if Mp == M else jnp.pad(residual, ((0, Mp - M), (0, 0)))
        in_specs += [pl.BlockSpec((tm, tn), lambda i, j, k: (i, j)),
                     pl.BlockSpec((1, tn), lambda i, j, k: (0, j)),
                     pl.BlockSpec((1, tn), lambda i, j, k: (0, j))]
        args += [r_p, lo_w.reshape(1, N).astype(jnp.float32),
                 lo_b.reshape(1, N).astype(jnp.float32)]

    grid = (Mp // tm, Np // tn, Kp // tk)
    out = pl.pallas_call(
        functools.partial(_linear_kernel, activation=activation,
                          fuse_res_ln=fuse_res_ln, fuse_in_ln=fuse_in_ln, eps=eps),
        out_shape=jax.ShapeDtypeStruct((Mp, Np), jnp.float32),
        grid_spec=pltpu.PrefetchScalarGridSpec(
            num_scalar_prefetch=0,
            grid=grid,
            in_specs=in_specs,
            out_specs=pl.BlockSpec((tm, tn), lambda i, j, k: (i, j)),
            scratch_shapes=[pltpu.VMEM((tm, tn), jnp.float32)],
        ),
        compiler_params=pltpu.CompilerParams(
            dimension_semantics=("parallel", "parallel", "arbitrary")),
    )(*args)
    if Mp != M or Np != N:
        out = out[:M, :N]
    return out


# ---------------------------------------------------------------------------
# Kernel 3: fused multi-head attention, heads handled in-kernel, grid over B.
# Output is written as (1, Lq, D=128): lane-dense store.
# ---------------------------------------------------------------------------
def _mha_kernel(q_ref, k_ref, v_ref, o_ref, *, num_heads, scale, causal):
    q = q_ref[0].astype(jnp.float32)   # (Lq, D)
    k = k_ref[0].astype(jnp.float32)   # (Lk, D)
    v = v_ref[0].astype(jnp.float32)   # (Lk, D)
    Lq, D = q.shape
    Lk = k.shape[0]
    Dh = D // num_heads
    if causal:
        row = lax.broadcasted_iota(jnp.int32, (Lq, Lk), 0)
        col = lax.broadcasted_iota(jnp.int32, (Lq, Lk), 1)
        keep = col <= row
    outs = []
    for h in range(num_heads):          # static unroll over heads
        sl = slice(h * Dh, (h + 1) * Dh)
        qh = q[:, sl].astype(jnp.bfloat16)
        kh = k[:, sl].astype(jnp.bfloat16)
        vh = v[:, sl].astype(jnp.bfloat16)
        s = lax.dot_general(qh, kh, (((1,), (1,)), ((), ())),
                            preferred_element_type=jnp.float32) * scale
        if causal:
            s = jnp.where(keep, s, -1e30)   # mask applied on f32 scores (safe)
        m = jnp.max(s, axis=-1, keepdims=True)
        p = jnp.exp(s - m)
        denom = jnp.sum(p, axis=-1, keepdims=True)
        oh = jnp.dot(p.astype(jnp.bfloat16), vh,
                     preferred_element_type=jnp.float32)
        outs.append(oh * pl.reciprocal(denom, approx=True))
    o_ref[0] = jnp.concatenate(outs, axis=-1).astype(o_ref.dtype)


def multi_head_attention(q, k, v, *, num_heads, causal=False):
    """q: (B, Lq, D); k, v: (B, Lk, D).  Returns (B, Lq, D), heads merged."""
    # TODO(synk): switch to a flash-style KV-tiled online-softmax grid for long
    # sequences; at these shapes the whole (L, L) scores fit VMEM per batch.
    B, Lq, D = q.shape
    Lk = k.shape[1]
    scale = 1.0 / math.sqrt(D // num_heads)
    return pl.pallas_call(
        functools.partial(_mha_kernel, num_heads=num_heads, scale=scale,
                          causal=causal),
        out_shape=jax.ShapeDtypeStruct((B, Lq, D), q.dtype),
        grid_spec=pltpu.PrefetchScalarGridSpec(
            num_scalar_prefetch=0,
            grid=(B,),
            in_specs=[
                pl.BlockSpec((1, Lq, D), lambda b: (b, 0, 0)),
                pl.BlockSpec((1, Lk, D), lambda b: (b, 0, 0)),
                pl.BlockSpec((1, Lk, D), lambda b: (b, 0, 0)),
            ],
            out_specs=pl.BlockSpec((1, Lq, D), lambda b: (b, 0, 0)),
        ),
        compiler_params=pltpu.CompilerParams(dimension_semantics=("parallel",)),
    )(q, k, v)


# ---------------------------------------------------------------------------
# Kernel 4: fused FFN  out = LN(x + relu(x@w1+b1)@w2 + b2)   (one kernel)
# ---------------------------------------------------------------------------
def _ffn_kernel(x_ref, w1_ref, b1_ref, w2_ref, b2_ref, lw_ref, lb_ref, o_ref,
                *, eps):
    x = x_ref[...].astype(jnp.float32)                      # (tm, D)
    h = jnp.dot(x.astype(jnp.bfloat16), w1_ref[...],
                preferred_element_type=jnp.float32) + b1_ref[...]
    h = jnp.maximum(h, 0.0)                                 # hidden stays on-chip
    y = jnp.dot(h.astype(jnp.bfloat16), w2_ref[...],
                preferred_element_type=jnp.float32) + b2_ref[...]
    o_ref[...] = _ln_math(x + y, lw_ref[...], lb_ref[...], eps).astype(o_ref.dtype)


def ffn_ln(x2d, w1, b1, w2, b2, ln_w, ln_b, *, eps=1e-5):
    M, D = x2d.shape
    F = w1.shape[1]
    assert D % 128 == 0 and F % 128 == 0
    # TODO(synk): tile the dff dimension for very large dim_feedforward.
    tm = _row_tile(M)
    Mp = pl.cdiv(M, tm) * tm
    x_p = jnp.pad(x2d, ((0, Mp - M), (0, 0))) if Mp != M else x2d
    out = pl.pallas_call(
        functools.partial(_ffn_kernel, eps=eps),
        out_shape=jax.ShapeDtypeStruct((Mp, D), jnp.float32),
        grid_spec=pltpu.PrefetchScalarGridSpec(
            num_scalar_prefetch=0,
            grid=(Mp // tm,),
            in_specs=[
                pl.BlockSpec((tm, D), lambda i: (i, 0)),
                pl.BlockSpec((D, F), lambda i: (0, 0)),
                pl.BlockSpec((1, F), lambda i: (0, 0)),
                pl.BlockSpec((F, D), lambda i: (0, 0)),
                pl.BlockSpec((1, D), lambda i: (0, 0)),
                pl.BlockSpec((1, D), lambda i: (0, 0)),
                pl.BlockSpec((1, D), lambda i: (0, 0)),
            ],
            out_specs=pl.BlockSpec((tm, D), lambda i: (i, 0)),
        ),
        compiler_params=pltpu.CompilerParams(dimension_semantics=("parallel",)),
    )(x_p,
      w1.astype(jnp.bfloat16), b1.reshape(1, F).astype(jnp.float32),
      w2.astype(jnp.bfloat16), b2.reshape(1, D).astype(jnp.float32),
      ln_w.reshape(1, D).astype(jnp.float32),
      ln_b.reshape(1, D).astype(jnp.float32))
    return out[:M] if Mp != M else out


# ---------------------------------------------------------------------------
# Kernel 5: standalone row-tiled LayerNorm (encoder-stack final norm)
# ---------------------------------------------------------------------------
def _layernorm_kernel(x_ref, w_ref, b_ref, o_ref, *, eps):
    o_ref[...] = _ln_math(x_ref[...].astype(jnp.float32), w_ref[...], b_ref[...],
                          eps).astype(o_ref.dtype)


def layernorm2d(x2d, w, b, *, eps=1e-5):
    R, D = x2d.shape
    tr = _row_tile(R)
    Rp = pl.cdiv(R, tr) * tr
    x_p = jnp.pad(x2d, ((0, Rp - R), (0, 0))) if Rp != R else x2d
    out = pl.pallas_call(
        functools.partial(_layernorm_kernel, eps=eps),
        out_shape=jax.ShapeDtypeStruct((Rp, D), jnp.float32),
        grid_spec=pltpu.PrefetchScalarGridSpec(
            num_scalar_prefetch=0,
            grid=(Rp // tr,),
            in_specs=[pl.BlockSpec((tr, D), lambda i: (i, 0)),
                      pl.BlockSpec((1, D), lambda i: (0, 0)),
                      pl.BlockSpec((1, D), lambda i: (0, 0))],
            out_specs=pl.BlockSpec((tr, D), lambda i: (i, 0)),
        ),
        compiler_params=pltpu.CompilerParams(dimension_semantics=("parallel",)),
    )(x_p, w.reshape(1, D).astype(jnp.float32), b.reshape(1, D).astype(jnp.float32))
    return out[:R] if Rp != R else out


def layernorm3d(x, w, b, *, eps=1e-5):
    B, L, D = x.shape
    return layernorm2d(x.reshape(B * L, D), w, b, eps=eps).reshape(B, L, D)


# ---------------------------------------------------------------------------
# Model assembly (glue: reshapes / slices / embedding gather)
# ---------------------------------------------------------------------------
def _self_attention(x, p, num_heads, causal):
    B, L, D = x.shape
    x2 = x.reshape(B * L, D)
    qkv = linear(x2, p["w_qkv"], p["b_qkv"])          # packed QKV: one N=3D matmul
    q = qkv[:, :D].reshape(B, L, D)
    k = qkv[:, D:2 * D].reshape(B, L, D)
    v = qkv[:, 2 * D:].reshape(B, L, D)
    return multi_head_attention(q, k, v, num_heads=num_heads, causal=causal)


def _cross_attention(x, mem, p, num_heads):
    B, Lq, D = x.shape
    Lk = mem.shape[1]
    q = linear(x.reshape(B * Lq, D), p["wq"], p["bq"]).reshape(B, Lq, D)
    kv = linear(mem.reshape(B * Lk, D), p["w_kv"], p["b_kv"])   # packed K/V
    k = kv[:, :D].reshape(B, Lk, D)
    v = kv[:, D:].reshape(B, Lk, D)
    return multi_head_attention(q, k, v, num_heads=num_heads, causal=False)


def _encoder_layer(x, p, num_heads):
    B, L, D = x.shape
    x2 = x.reshape(B * L, D)
    a = _self_attention(x, p["self_attn"], num_heads, causal=False)
    # attention output projection + residual + LN1, fused epilogue
    x2 = linear(a.reshape(B * L, D), p["self_attn"]["wo"], p["self_attn"]["bo"],
                residual=x2, ln=(p["ln1_w"], p["ln1_b"]))
    # fused FFN (+ residual + LN2)
    x2 = ffn_ln(x2, p["w1"], p["b1"], p["w2"], p["b2"], p["ln2_w"], p["ln2_b"])
    return x2.reshape(B, L, D)


def _decoder_layer(x, mem, p, num_heads, causal):
    B, L, D = x.shape
    x2 = x.reshape(B * L, D)
    a = _self_attention(x, p["self_attn"], num_heads, causal=causal)
    x2 = linear(a.reshape(B * L, D), p["self_attn"]["wo"], p["self_attn"]["bo"],
                residual=x2, ln=(p["ln1_w"], p["ln1_b"]))
    c = _cross_attention(x2.reshape(B, L, D), mem, p["cross_attn"], num_heads)
    x2 = linear(c.reshape(B * L, D), p["cross_attn"]["wo"], p["cross_attn"]["bo"],
                residual=x2, ln=(p["ln2_w"], p["ln2_b"]))
    x2 = ffn_ln(x2, p["w1"], p["b1"], p["w2"], p["b2"], p["ln3_w"], p["ln3_b"])
    return x2.reshape(B, L, D)


def transformer_forward(params, src_ids, tgt_ids, *, num_heads, causal_tgt=True):
    """Pallas-kernel forward of the PyTorch Transformer module (eval mode).

    causal_tgt=True corresponds to passing
    tgt_mask = generate_square_subsequent_mask(L_tgt) to the PyTorch forward.
    """
    D = params["enc_emb"].shape[1]
    scale = math.sqrt(D)
    B, Ls = src_ids.shape
    _, Lt = tgt_ids.shape

    # Token-embedding gather (data-dependent) stays XLA glue; the sqrt(d_model)
    # scale + sinusoidal PE add is a fused Pallas kernel.
    src = jnp.take(params["enc_emb"], src_ids, axis=0)
    src = scale_add_positional_encoding(src, params["pe"][:Ls], scale)
    tgt = jnp.take(params["dec_emb"], tgt_ids, axis=0)
    tgt = scale_add_positional_encoding(tgt, params["pe"][:Lt], scale)

    mem = src
    for lp in params["encoder_layers"]:
        mem = _encoder_layer(mem, lp, num_heads)
    mem = layernorm3d(mem, params["enc_norm_w"], params["enc_norm_b"])

    out = tgt
    for lp in params["decoder_layers"]:
        out = _decoder_layer(out, mem, lp, num_heads, causal=causal_tgt)

    # Final decoder-stack LayerNorm folded into the fc_out prologue.
    logits = linear(out.reshape(B * Lt, D), params["fc_w"], params["fc_b"],
                    ln_in=(params["dec_norm_w"], params["dec_norm_b"]))
    return logits.reshape(B, Lt, -1)


# ---------------------------------------------------------------------------
# Parameter init (deterministic, xavier-uniform like the module's _init_weights)
# ---------------------------------------------------------------------------
def _xavier_uniform(key, shape):
    a = math.sqrt(6.0 / (shape[0] + shape[1]))
    return jax.random.uniform(key, shape, jnp.float32, minval=-a, maxval=a)


def sinusoidal_positional_encoding(max_seq_length, d_model):
    position = jnp.arange(max_seq_length, dtype=jnp.float32)[:, None]
    div_term = jnp.exp(jnp.arange(0, d_model, 2, dtype=jnp.float32)
                       * (-(math.log(10000.0) / d_model)))
    pe = jnp.zeros((max_seq_length, d_model), dtype=jnp.float32)
    pe = pe.at[:, 0::2].set(jnp.sin(position * div_term))
    pe = pe.at[:, 1::2].set(jnp.cos(position * div_term))
    return pe


def _init_self_attn(key, d):
    k1, k2, k3, k4 = jax.random.split(key, 4)
    w_qkv = jnp.concatenate([_xavier_uniform(k1, (d, d)),
                             _xavier_uniform(k2, (d, d)),
                             _xavier_uniform(k3, (d, d))], axis=1)
    return {"w_qkv": w_qkv, "b_qkv": jnp.zeros((3 * d,), jnp.float32),
            "wo": _xavier_uniform(k4, (d, d)), "bo": jnp.zeros((d,), jnp.float32)}


def _init_cross_attn(key, d):
    k1, k2, k3, k4 = jax.random.split(key, 4)
    w_kv = jnp.concatenate([_xavier_uniform(k2, (d, d)),
                            _xavier_uniform(k3, (d, d))], axis=1)
    return {"wq": _xavier_uniform(k1, (d, d)), "bq": jnp.zeros((d,), jnp.float32),
            "w_kv": w_kv, "b_kv": jnp.zeros((2 * d,), jnp.float32),
            "wo": _xavier_uniform(k4, (d, d)), "bo": jnp.zeros((d,), jnp.float32)}


def _init_encoder_layer(key, d, dff):
    ka, k1, k2 = jax.random.split(key, 3)
    one, zero = jnp.ones((d,), jnp.float32), jnp.zeros((d,), jnp.float32)
    return {"self_attn": _init_self_attn(ka, d),
            "ln1_w": one, "ln1_b": zero,
            "w1": _xavier_uniform(k1, (d, dff)), "b1": jnp.zeros((dff,), jnp.float32),
            "w2": _xavier_uniform(k2, (dff, d)), "b2": zero,
            "ln2_w": one, "ln2_b": zero}


def _init_decoder_layer(key, d, dff):
    ksa, kca, k1, k2 = jax.random.split(key, 4)
    one, zero = jnp.ones((d,), jnp.float32), jnp.zeros((d,), jnp.float32)
    return {"self_attn": _init_self_attn(ksa, d),
            "cross_attn": _init_cross_attn(kca, d),
            "ln1_w": one, "ln1_b": zero,
            "ln2_w": one, "ln2_b": zero,
            "w1": _xavier_uniform(k1, (d, dff)), "b1": jnp.zeros((dff,), jnp.float32),
            "w2": _xavier_uniform(k2, (dff, d)), "b2": zero,
            "ln3_w": one, "ln3_b": zero}


def init_transformer_params(key, *, vocab_size, d_model, num_encoder_layers,
                            num_decoder_layers, dim_feedforward, max_seq_length):
    n = 3 + num_encoder_layers + num_decoder_layers
    keys = jax.random.split(key, n)
    one, zero = jnp.ones((d_model,), jnp.float32), jnp.zeros((d_model,), jnp.float32)
    return {
        "enc_emb": _xavier_uniform(keys[0], (vocab_size, d_model)),
        "dec_emb": _xavier_uniform(keys[1], (vocab_size, d_model)),
        "fc_w": _xavier_uniform(keys[2], (d_model, vocab_size)),
        "fc_b": jnp.zeros((vocab_size,), jnp.float32),
        "pe": sinusoidal_positional_encoding(max_seq_length, d_model),
        "encoder_layers": [_init_encoder_layer(keys[3 + i], d_model, dim_feedforward)
                           for i in range(num_encoder_layers)],
        "decoder_layers": [_init_decoder_layer(keys[3 + num_encoder_layers + i],
                                               d_model, dim_feedforward)
                           for i in range(num_decoder_layers)],
        "enc_norm_w": one, "enc_norm_b": zero,
        "dec_norm_w": one, "dec_norm_b": zero,
    }


# ---------------------------------------------------------------------------
# Pure-JAX reference (same math, bf16 MXU operands / f32 accumulation, exact
# division instead of the approx reciprocal) for correctness checking.
# ---------------------------------------------------------------------------
def _ref_dot(a, b):
    return jnp.dot(a.astype(jnp.bfloat16), b.astype(jnp.bfloat16),
                   preferred_element_type=jnp.float32)


def _ref_ln(x, w, b, eps=1e-5):
    mean = jnp.mean(x, axis=-1, keepdims=True)
    xc = x - mean
    var = jnp.mean(xc * xc, axis=-1, keepdims=True)
    return xc * lax.rsqrt(var + eps) * w + b


def _ref_mha(q, k, v, num_heads, causal):
    B, Lq, D = q.shape
    Lk = k.shape[1]
    Dh = D // num_heads
    scale = 1.0 / math.sqrt(Dh)
    outs = []
    for h in range(num_heads):
        sl = slice(h * Dh, (h + 1) * Dh)
        s = jnp.einsum("bqd,bkd->bqk",
                       q[..., sl].astype(jnp.bfloat16),
                       k[..., sl].astype(jnp.bfloat16),
                       preferred_element_type=jnp.float32) * scale
        if causal:
            row = lax.broadcasted_iota(jnp.int32, (Lq, Lk), 0)
            col = lax.broadcasted_iota(jnp.int32, (Lq, Lk), 1)
            s = jnp.where((col <= row)[None], s, -1e30)
        m = jnp.max(s, axis=-1, keepdims=True)
        p = jnp.exp(s - m)
        den = jnp.sum(p, axis=-1, keepdims=True)
        o = jnp.einsum("bqk,bkd->bqd", p.astype(jnp.bfloat16),
                       v[..., sl].astype(jnp.bfloat16),
                       preferred_element_type=jnp.float32) / den
        outs.append(o)
    return jnp.concatenate(outs, axis=-1)


def transformer_forward_ref(params, src_ids, tgt_ids, *, num_heads, causal_tgt=True):
    D = params["enc_emb"].shape[1]
    scale = math.sqrt(D)
    Ls, Lt = src_ids.shape[1], tgt_ids.shape[1]
    src = jnp.take(params["enc_emb"], src_ids, axis=0) * scale + params["pe"][:Ls][None]
    tgt = jnp.take(params["dec_emb"], tgt_ids, axis=0) * scale + params["pe"][:Lt][None]

    mem = src
    for p in params["encoder_layers"]:
        sa = p["self_attn"]
        qkv = _ref_dot(mem, sa["w_qkv"]) + sa["b_qkv"]
        q, k, v = qkv[..., :D], qkv[..., D:2 * D], qkv[..., 2 * D:]
        a = _ref_mha(q, k, v, num_heads, False)
        mem = _ref_ln(mem + _ref_dot(a, sa["wo"]) + sa["bo"], p["ln1_w"], p["ln1_b"])
        h = jnp.maximum(_ref_dot(mem, p["w1"]) + p["b1"], 0.0)
        mem = _ref_ln(mem + _ref_dot(h, p["w2"]) + p["b2"], p["ln2_w"], p["ln2_b"])
    mem = _ref_ln(mem, params["enc_norm_w"], params["enc_norm_b"])

    out = tgt
    for p in params["decoder_layers"]:
        sa, ca = p["self_attn"], p["cross_attn"]
        qkv = _ref_dot(out, sa["w_qkv"]) + sa["b_qkv"]
        q, k, v = qkv[..., :D], qkv[..., D:2 * D], qkv[..., 2 * D:]
        a = _ref_mha(q, k, v, num_heads, causal_tgt)
        out = _ref_ln(out + _ref_dot(a, sa["wo"]) + sa["bo"], p["ln1_w"], p["ln1_b"])
        qc = _ref_dot(out, ca["wq"]) + ca["bq"]
        kv = _ref_dot(mem, ca["w_kv"]) + ca["b_kv"]
        kc, vc = kv[..., :D], kv[..., D:]
        c = _ref_mha(qc, kc, vc, num_heads, False)
        out = _ref_ln(out + _ref_dot(c, ca["wo"]) + ca["bo"], p["ln2_w"], p["ln2_b"])
        h = jnp.maximum(_ref_dot(out, p["w1"]) + p["b1"], 0.0)
        out = _ref_ln(out + _ref_dot(h, p["w2"]) + p["b2"], p["ln3_w"], p["ln3_b"])
    out = _ref_ln(out, params["dec_norm_w"], params["dec_norm_b"])
    return _ref_dot(out, params["fc_w"]) + params["fc_b"]


# ---------------------------------------------------------------------------
if __name__ == "__main__":
    # Small but lane-dense config (d_model multiple of 128).
    vocab_size = 128
    d_model = 128
    num_heads = 4
    num_encoder_layers = 2
    num_decoder_layers = 2
    dim_feedforward = 256
    max_seq_length = 100
    B, L_src, L_tgt = 2, 8, 8

    root = jax.random.PRNGKey(0)
    k_params, k_src, k_tgt = jax.random.split(root, 3)
    params = init_transformer_params(
        k_params, vocab_size=vocab_size, d_model=d_model,
        num_encoder_layers=num_encoder_layers, num_decoder_layers=num_decoder_layers,
        dim_feedforward=dim_feedforward, max_seq_length=max_seq_length)

    src_ids = jax.random.randint(k_src, (B, L_src), 0, vocab_size, dtype=jnp.int32)
    tgt_ids = jax.random.randint(k_tgt, (B, L_tgt), 0, vocab_size, dtype=jnp.int32)

    fwd = jax.jit(functools.partial(transformer_forward,
                                    num_heads=num_heads, causal_tgt=True))
    logits = jax.block_until_ready(fwd(params, src_ids, tgt_ids))

    assert logits.shape == (B, L_tgt, vocab_size)
    assert bool(jnp.all(jnp.isfinite(logits)))

    ref = jax.block_until_ready(
        transformer_forward_ref(params, src_ids, tgt_ids,
                                num_heads=num_heads, causal_tgt=True))
    max_err = float(jnp.max(jnp.abs(logits - ref)))
    # Tolerance covers the approx-reciprocal softmax denominator and bf16 MXU
    # rounding-order differences; structural errors would be O(1).
    assert jnp.allclose(logits, ref, atol=5e-2, rtol=5e-2), \
        f"mismatch vs reference (max abs err {max_err})"

    print("KERNEL_OK")
</pallas_src>

<mosaic_0001>
module attributes {stable_mosaic.version = 11 : i64} {
  func.func @_scale_add_pe_kernel(%arg0: i32, %arg1: memref<1x8x128xf32, #tpu.memory_space<vmem>>, %arg2: memref<8x128xf32, #tpu.memory_space<vmem>>, %arg3: memref<1x8x128xf32, #tpu.memory_space<vmem>>) attributes {dimension_semantics = [#tpu.dimension_semantics<parallel>], iteration_bounds = array<i64: 2>, scalar_prefetch = 0 : i64, scratch_operands = 0 : i64, tpu.core_type = #tpu.core_type<tc>, window_params = [{transform_indices = @transform_0, window_bounds = array<i64: 1, 8, 128>}, {pipeline_mode = #tpu.pipeline_mode<synchronous>, transform_indices = @transform_1, window_bounds = array<i64: 8, 128>}, {transform_indices = @transform_2, window_bounds = array<i64: 1, 8, 128>}]} {
    %c0 = arith.constant 0 : index
    %c0_0 = arith.constant 0 : index
    %c0_1 = arith.constant 0 : index
    %0 = vector.load %arg1[%c0, %c0_0, %c0_1] : memref<1x8x128xf32, #tpu.memory_space<vmem>>, vector<1x8x128xf32>
    %cst = arith.constant 11.3137083 : f32
    %1 = vector.broadcast %cst : f32 to vector<1x8x128xf32>
    %2 = arith.mulf %0, %1 : vector<1x8x128xf32>
    %c0_2 = arith.constant 0 : index
    %c0_3 = arith.constant 0 : index
    %3 = vector.load %arg2[%c0_2, %c0_3] : memref<8x128xf32, #tpu.memory_space<vmem>>, vector<8x128xf32>
    %4 = vector.shape_cast %3 : vector<8x128xf32> to vector<1x8x128xf32>
    %5 = arith.addf %2, %4 : vector<1x8x128xf32>
    %c0_4 = arith.constant 0 : index
    %c0_5 = arith.constant 0 : index
    %c0_6 = arith.constant 0 : index
    %6 = vector.load %arg3[%c0_4, %c0_5, %c0_6] : memref<1x8x128xf32, #tpu.memory_space<vmem>>, vector<1x8x128xf32>
    tpu.vector_store %arg3[%c0_4, %c0_5, %c0_6], %5 {strides = array<i32>} : memref<1x8x128xf32, #tpu.memory_space<vmem>>, vector<1x8x128xf32>,
    return
  }
  func.func @transform_0(%arg0: i32) -> (i32, i32, i32) {
    %c0_i32 = arith.constant 0 : i32
    %c0_i32_0 = arith.constant 0 : i32
    %c0_i32_1 = arith.constant 0 : i32
    return %arg0, %c0_i32, %c0_i32_0 : i32, i32, i32
  }
  func.func @transform_1(%arg0: i32) -> (i32, i32) {
    %c0_i32 = arith.constant 0 : i32
    %c0_i32_0 = arith.constant 0 : i32
    %c0_i32_1 = arith.constant 0 : i32
    return %c0_i32, %c0_i32_0 : i32, i32
  }
  func.func @transform_2(%arg0: i32) -> (i32, i32, i32) {
    %c0_i32 = arith.constant 0 : i32
    %c0_i32_0 = arith.constant 0 : i32
    %c0_i32_1 = arith.constant 0 : i32
    return %arg0, %c0_i32, %c0_i32_0 : i32, i32, i32
  }
}

module attributes {stable_mosaic.version = 11 : i64} {
  func.func @_linear_kernel(%arg0: i32, %arg1: i32, %arg2: i32, %arg3: memref<8x128xf32, #tpu.memory_space<vmem>>, %arg4: memref<128x384xbf16, #tpu.memory_space<vmem>>, %arg5: memref<1x384xf32, #tpu.memory_space<vmem>>, %arg6: memref<8x384xf32, #tpu.memory_space<vmem>>, %arg7: memref<8x384xf32, #tpu.memory_space<vmem>>) attributes {dimension_semantics = [#tpu.dimension_semantics<parallel>, #tpu.dimension_semantics<parallel>, #tpu.dimension_semantics<arbitrary>], iteration_bounds = array<i64: 2, 1, 1>, scalar_prefetch = 0 : i64, scratch_operands = 1 : i64, tpu.core_type = #tpu.core_type<tc>, window_params = [{transform_indices = @transform_0, window_bounds = array<i64: 8, 128>}, {transform_indices = @transform_1, window_bounds = array<i64: 128, 384>}, {transform_indices = @transform_2, window_bounds = array<i64: 1, 384>}, {transform_indices = @transform_3, window_bounds = array<i64: 8, 384>}]} {
    %c0_i32 = arith.constant 0 : i32
    %0 = arith.cmpi eq, %arg2, %c0_i32 : i32
    %1 = arith.extui %0 : i1 to i32
    %c0_i32_0 = arith.constant 0 : i32
    %2 = arith.cmpi ne, %1, %c0_i32_0 : i32
    scf.if %2 {
      %cst_10 = arith.constant 0.000000e+00 : f32
      %13 = vector.broadcast %cst_10 : f32 to vector<8x384xf32>
      %c0_11 = arith.constant 0 : index
      %c0_12 = arith.constant 0 : index
      %14 = vector.load %arg7[%c0_11, %c0_12] : memref<8x384xf32, #tpu.memory_space<vmem>>, vector<8x384xf32>
      tpu.vector_store %arg7[%c0_11, %c0_12], %13 {strides = array<i32>} : memref<8x384xf32, #tpu.memory_space<vmem>>, vector<8x384xf32>,
    } else {
    }
    %c0 = arith.constant 0 : index
    %c0_1 = arith.constant 0 : index
    %3 = vector.load %arg3[%c0, %c0_1] : memref<8x128xf32, #tpu.memory_space<vmem>>, vector<8x128xf32>
    %c0_2 = arith.constant 0 : index
    %c0_3 = arith.constant 0 : index
    %4 = vector.load %arg7[%c0_2, %c0_3] : memref<8x384xf32, #tpu.memory_space<vmem>>, vector<8x384xf32>
    %5 = arith.truncf %3 : vector<8x128xf32> to vector<8x128xbf16>
    %c0_4 = arith.constant 0 : index
    %c0_5 = arith.constant 0 : index
    %6 = vector.load %arg4[%c0_4, %c0_5] : memref<128x384xbf16, #tpu.memory_space<vmem>>, vector<128x384xbf16>
    %cst = arith.constant dense<0.000000e+00> : vector<8x384xf32>
    %7 = tpu.matmul %5, %6, %cst {dimension_numbers = #tpu.dot_dimension_numbers<[1], [0], [0], [1], [0, 0, 1, 1], [], []>} : vector<8x128xbf16>, vector<128x384xbf16>, vector<8x384xf32> -> vector<8x384xf32>
    %8 = arith.addf %4, %7 : vector<8x384xf32>
    %c0_6 = arith.constant 0 : index
    %c0_7 = arith.constant 0 : index
    %9 = vector.load %arg7[%c0_6, %c0_7] : memref<8x384xf32, #tpu.memory_space<vmem>>, vector<8x384xf32>
    tpu.vector_store %arg7[%c0_6, %c0_7], %8 {strides = array<i32>} : memref<8x384xf32, #tpu.memory_space<vmem>>, vector<8x384xf32>,
    %c0_i32_8 = arith.constant 0 : i32
    %10 = arith.cmpi eq, %arg2, %c0_i32_8 : i32
    %11 = arith.extui %10 : i1 to i32
    %c0_i32_9 = arith.constant 0 : i32
    %12 = arith.cmpi ne, %11, %c0_i32_9 : i32
    scf.if %12 {
      %c0_10 = arith.constant 0 : index
      %c0_11 = arith.constant 0 : index
      %13 = vector.load %arg7[%c0_10, %c0_11] : memref<8x384xf32, #tpu.memory_space<vmem>>, vector<8x384xf32>
      %c0_12 = arith.constant 0 : index
      %c0_13 = arith.constant 0 : index
      %14 = vector.load %arg5[%c0_12, %c0_13] : memref<1x384xf32, #tpu.memory_space<vmem>>, vector<1x384xf32>
      %15 = vector.broadcast %14 : vector<1x384xf32> to vector<8x384xf32>
      %16 = arith.addf %13, %15 : vector<8x384xf32>
      %c0_14 = arith.constant 0 : index
      %c0_15 = arith.constant 0 : index
      %17 = vector.load %arg6[%c0_14, %c0_15] : memref<8x384xf32, #tpu.memory_space<vmem>>, vector<8x384xf32>
      tpu.vector_store %arg6[%c0_14, %c0_15], %16 {strides = array<i32>} : memref<8x384xf32, #tpu.memory_space<vmem>>, vector<8x384xf32>,
    } else {
    }
    return
  }
  func.func @transform_0(%arg0: i32, %arg1: i32, %arg2: i32) -> (i32, i32) {
    %c0_i32 = arith.constant 0 : i32
    return %arg0, %arg2 : i32, i32
  }
  func.func @transform_1(%arg0: i32, %arg1: i32, %arg2: i32) -> (i32, i32) {
    %c0_i32 = arith.constant 0 : i32
    return %arg2, %arg1 : i32, i32
  }
  func.func @transform_2(%arg0: i32, %arg1: i32, %arg2: i32) -> (i32, i32) {
    %c0_i32 = arith.constant 0 : i32
    %c0_i32_0 = arith.constant 0 : i32
    return %c0_i32, %arg1 : i32, i32
  }
  func.func @transform_3(%arg0: i32, %arg1: i32, %arg2: i32) -> (i32, i32) {
    %c0_i32 = arith.constant 0 : i32
    return %arg0, %arg1 : i32, i32
  }
}

module attributes {stable_mosaic.version = 11 : i64} {
  func.func @_mha_kernel(%arg0: i32, %arg1: memref<1x8x128xf32, #tpu.memory_space<vmem>>, %arg2: memref<1x8x128xf32, #tpu.memory_space<vmem>>, %arg3: memref<1x8x128xf32, #tpu.memory_space<vmem>>, %arg4: memref<1x8x128xf32, #tpu.memory_space<vmem>>) attributes {dimension_semantics = [#tpu.dimension_semantics<parallel>], iteration_bounds = array<i64: 2>, scalar_prefetch = 0 : i64, scratch_operands = 0 : i64, tpu.core_type = #tpu.core_type<tc>, window_params = [{transform_indices = @transform_0, window_bounds = array<i64: 1, 8, 128>}, {transform_indices = @transform_1, window_bounds = array<i64: 1, 8, 128>}, {transform_indices = @transform_2, window_bounds = array<i64: 1, 8, 128>}, {transform_indices = @transform_3, window_bounds = array<i64: 1, 8, 128>}]} {
    %c0 = arith.constant 0 : index
    %c0_0 = arith.constant 0 : index
    %c0_1 = arith.constant 0 : index
    %0 = vector.load %arg1[%c0, %c0_0, %c0_1] : memref<1x8x128xf32, #tpu.memory_space<vmem>>, vector<1x8x128xf32>
    %1 = vector.shape_cast %0 : vector<1x8x128xf32> to vector<8x128xf32>
    %c0_2 = arith.constant 0 : index
    %c0_3 = arith.constant 0 : index
    %c0_4 = arith.constant 0 : index
    %2 = vector.load %arg2[%c0_2, %c0_3, %c0_4] : memref<1x8x128xf32, #tpu.memory_space<vmem>>, vector<1x8x128xf32>
    %3 = vector.shape_cast %2 : vector<1x8x128xf32> to vector<8x128xf32>
    %c0_5 = arith.constant 0 : index
    %c0_6 = arith.constant 0 : index
    %c0_7 = arith.constant 0 : index
    %4 = vector.load %arg3[%c0_5, %c0_6, %c0_7] : memref<1x8x128xf32, #tpu.memory_space<vmem>>, vector<1x8x128xf32>
    %5 = vector.shape_cast %4 : vector<1x8x128xf32> to vector<8x128xf32>
    %6 = vector.extract_strided_slice %1 {offsets = [0, 0], sizes = [8, 32], strides = [1, 1]} : vector<8x128xf32> to vector<8x32xf32>
    %7 = arith.truncf %6 : vector<8x32xf32> to vector<8x32xbf16>
    %8 = vector.extract_strided_slice %3 {offsets = [0, 0], sizes = [8, 32], strides = [1, 1]} : vector<8x128xf32> to vector<8x32xf32>
    %9 = arith.truncf %8 : vector<8x32xf32> to vector<8x32xbf16>
    %10 = vector.extract_strided_slice %5 {offsets = [0, 0], sizes = [8, 32], strides = [1, 1]} : vector<8x128xf32> to vector<8x32xf32>
    %11 = arith.truncf %10 : vector<8x32xf32> to vector<8x32xbf16>
    %cst = arith.constant dense<0.000000e+00> : vector<8x8xf32>
    %12 = tpu.matmul %7, %9, %cst {dimension_numbers = #tpu.dot_dimension_numbers<[1], [1], [0], [0], [0, 0, 1, 0], [], []>} : vector<8x32xbf16>, vector<8x32xbf16>, vector<8x8xf32> -> vector<8x8xf32>
    %cst_8 = arith.constant 0.176776692 : f32
    %13 = vector.broadcast %cst_8 : f32 to vector<8x8xf32>
    %14 = arith.mulf %12, %13 : vector<8x8xf32>
    %cst_9 = arith.constant dense<0xFF800000> : vector<8xf32>
    %15 = vector.multi_reduction <maximumf>, %14, %cst_9 [1] : vector<8x8xf32> to vector<8xf32>
    %16 = vector.shape_cast %15 : vector<8xf32> to vector<8x1xf32>
    %17 = vector.broadcast %16 : vector<8x1xf32> to vector<8x8xf32>
    %18 = arith.subf %14, %17 : vector<8x8xf32>
    %19 = math.exp %18 : vector<8x8xf32>
    %cst_10 = arith.constant dense<0.000000e+00> : vector<8xf32>
    %20 = vector.multi_reduction <add>, %19, %cst_10 [1] : vector<8x8xf32> to vector<8xf32>
    %21 = vector.shape_cast %20 : vector<8xf32> to vector<8x1xf32>
    %22 = arith.truncf %19 : vector<8x8xf32> to vector<8x8xbf16>
    %cst_11 = arith.constant dense<0.000000e+00> : vector<8x32xf32>
    %23 = tpu.matmul %22, %11, %cst_11 {dimension_numbers = #tpu.dot_dimension_numbers<[1], [0], [0], [1], [0, 0, 1, 1], [], []>} : vector<8x8xbf16>, vector<8x32xbf16>, vector<8x32xf32> -> vector<8x32xf32>
    %24 = tpu.reciprocal %21 {approx = true} : vector<8x1xf32> -> vector<8x1xf32>
    %25 = vector.broadcast %24 : vector<8x1xf32> to vector<8x32xf32>
    %26 = arith.mulf %23, %25 : vector<8x32xf32>
    %27 = vector.extract_strided_slice %1 {offsets = [0, 32], sizes = [8, 32], strides = [1, 1]} : vector<8x128xf32> to vector<8x32xf32>
    %28 = arith.truncf %27 : vector<8x32xf32> to vector<8x32xbf16>
    %29 = vector.extract_strided_slice %3 {offsets = [0, 32], sizes = [8, 32], strides = [1, 1]} : vector<8x128xf32> to vector<8x32xf32>
    %30 = arith.truncf %29 : vector<8x32xf32> to vector<8x32xbf16>
    %31 = vector.extract_strided_slice %5 {offsets = [0, 32], sizes = [8, 32], strides = [1, 1]} : vector<8x128xf32> to vector<8x32xf32>
    %32 = arith.truncf %31 : vector<8x32xf32> to vector<8x32xbf16>
    %cst_12 = arith.constant dense<0.000000e+00> : vector<8x8xf32>
    %33 = tpu.matmul %28, %30, %cst_12 {dimension_numbers = #tpu.dot_dimension_numbers<[1], [1], [0], [0], [0, 0, 1, 0], [], []>} : vector<8x32xbf16>, vector<8x32xbf16>, vector<8x8xf32> -> vector<8x8xf32>
    %cst_13 = arith.constant 0.176776692 : f32
    %34 = vector.broadcast %cst_13 : f32 to vector<8x8xf32>
    %35 = arith.mulf %33, %34 : vector<8x8xf32>
    %cst_14 = arith.constant dense<0xFF800000> : vector<8xf32>
    %36 = vector.multi_reduction <maximumf>, %35, %cst_14 [1] : vector<8x8xf32> to vector<8xf32>
    %37 = vector.shape_cast %36 : vector<8xf32> to vector<8x1xf32>
    %38 = vector.broadcast %37 : vector<8x1xf32> to vector<8x8xf32>
    %39 = arith.subf %35, %38 : vector<8x8xf32>
    %40 = math.exp %39 : vector<8x8xf32>
    %cst_15 = arith.constant dense<0.000000e+00> : vector<8xf32>
    %41 = vector.multi_reduction <add>, %40, %cst_15 [1] : vector<8x8xf32> to vector<8xf32>
    %42 = vector.shape_cast %41 : vector<8xf32> to vector<8x1xf32>
    %43 = arith.truncf %40 : vector<8x8xf32> to vector<8x8xbf16>
    %cst_16 = arith.constant dense<0.000000e+00> : vector<8x32xf32>
    %44 = tpu.matmul %43, %32, %cst_16 {dimension_numbers = #tpu.dot_dimension_numbers<[1], [0], [0], [1], [0, 0, 1, 1], [], []>} : vector<8x8xbf16>, vector<8x32xbf16>, vector<8x32xf32> -> vector<8x32xf32>
    %45 = tpu.reciprocal %42 {approx = true} : vector<8x1xf32> -> vector<8x1xf32>
    %46 = vector.broadcast %45 : vector<8x1xf32> to vector<8x32xf32>
    %47 = arith.mulf %44, %46 : vector<8x32xf32>
    %48 = vector.extract_strided_slice %1 {offsets = [0, 64], sizes = [8, 32], strides = [1, 1]} : vector<8x128xf32> to vector<8x32xf32>
    %49 = arith.truncf %48 : vector<8x32xf32> to vector<8x32xbf16>
    %50 = vector.extract_strided_slice %3 {offsets = [0, 64], sizes = [8, 32], strides = [1, 1]} : vector<8x128xf32> to vector<8x32xf32>
    %51 = arith.truncf %50 : vector<8x32xf32> to vector<8x32xbf16>
    %52 = vector.extract_strided_slice %5 {offsets = [0, 64], sizes = [8, 32], strides = [1, 1]} : vector<8x128xf32> to vector<8x32xf32>
    %53 = arith.truncf %52 : vector<8x32xf32> to vector<8x32xbf16>
    %cst_17 = arith.constant dense<0.000000e+00> : vector<8x8xf32>
    %54 = tpu.matmul %49, %51, %cst_17 {dimension_numbers = #tpu.dot_dimension_numbers<[1], [1], [0], [0], [0, 0, 1, 0], [], []>} : vector<8x32xbf16>, vector<8x32xbf16>, vector<8x8xf32> -> vector<8x8xf32>
    %cst_18 = arith.constant 0.176776692 : f32
    %55 = vector.broadcast %cst_18 : f32 to vector<8x8xf32>
    %56 = arith.mulf %54, %55 : vector<8x8xf32>
    %cst_19 = arith.constant dense<0xFF800000> : vector<8xf32>
    %57 = vector.multi_reduction <maximumf>, %56, %cst_19 [1] : vector<8x8xf32> to vector<8xf32>
    %58 = vector.shape_cast %57 : vector<8xf32> to vector<8x1xf32>
    %59 = vector.broadcast %58 : vector<8x1xf32> to vector<8x8xf32>
    %60 = arith.subf %56, %59 : vector<8x8xf32>
    %61 = math.exp %60 : vector<8x8xf32>
    %cst_20 = arith.constant dense<0.000000e+00> : vector<8xf32>
    %62 = vector.multi_reduction <add>, %61, %cst_20 [1] : vector<8x8xf32> to vector<8xf32>
    %63 = vector.shape_cast %62 : vector<8xf32> to vector<8x1xf32>
    %64 = arith.truncf %61 : vector<8x8xf32> to vector<8x8xbf16>
    %cst_21 = arith.constant dense<0.000000e+00> : vector<8x32xf32>
    %65 = tpu.matmul %64, %53, %cst_21 {dimension_numbers = #tpu.dot_dimension_numbers<[1], [0], [0], [1], [0, 0, 1, 1], [], []>} : vector<8x8xbf16>, vector<8x32xbf16>, vector<8x32xf32> -> vector<8x32xf32>
    %66 = tpu.reciprocal %63 {approx = true} : vector<8x1xf32> -> vector<8x1xf32>
    %67 = vector.broadcast %66 : vector<8x1xf32> to vector<8x32xf32>
    %68 = arith.mulf %65, %67 : vector<8x32xf32>
    %69 = vector.extract_strided_slice %1 {offsets = [0, 96], sizes = [8, 32], strides = [1, 1]} : vector<8x128xf32> to vector<8x32xf32>
    %70 = arith.truncf %69 : vector<8x32xf32> to vector<8x32xbf16>
    %71 = vector.extract_strided_slice %3 {offsets = [0, 96], sizes = [8, 32], strides = [1, 1]} : vector<8x128xf32> to vector<8x32xf32>
    %72 = arith.truncf %71 : vector<8x32xf32> to vector<8x32xbf16>
    %73 = vector.extract_strided_slice %5 {offsets = [0, 96], sizes = [8, 32], strides = [1, 1]} : vector<8x128xf32> to vector<8x32xf32>
    %74 = arith.truncf %73 : vector<8x32xf32> to vector<8x32xbf16>
    %cst_22 = arith.constant dense<0.000000e+00> : vector<8x8xf32>
    %75 = tpu.matmul %70, %72, %cst_22 {dimension_numbers = #tpu.dot_dimension_numbers<[1], [1], [0], [0], [0, 0, 1, 0], [], []>} : vector<8x32xbf16>, vector<8x32xbf16>, vector<8x8xf32> -> vector<8x8xf32>
    %cst_23 = arith.constant 0.176776692 : f32
    %76 = vector.broadcast %cst_23 : f32 to vector<8x8xf32>
    %77 = arith.mulf %75, %76 : vector<8x8xf32>
    %cst_24 = arith.constant dense<0xFF800000> : vector<8xf32>
    %78 = vector.multi_reduction <maximumf>, %77, %cst_24 [1] : vector<8x8xf32> to vector<8xf32>
    %79 = vector.shape_cast %78 : vector<8xf32> to vector<8x1xf32>
    %80 = vector.broadcast %79 : vector<8x1xf32> to vector<8x8xf32>
    %81 = arith.subf %77, %80 : vector<8x8xf32>
    %82 = math.exp %81 : vector<8x8xf32>
    %cst_25 = arith.constant dense<0.000000e+00> : vector<8xf32>
    %83 = vector.multi_reduction <add>, %82, %cst_25 [1] : vector<8x8xf32> to vector<8xf32>
    %84 = vector.shape_cast %83 : vector<8xf32> to vector<8x1xf32>
    %85 = arith.truncf %82 : vector<8x8xf32> to vector<8x8xbf16>
    %cst_26 = arith.constant dense<0.000000e+00> : vector<8x32xf32>
    %86 = tpu.matmul %85, %74, %cst_26 {dimension_numbers = #tpu.dot_dimension_numbers<[1], [0], [0], [1], [0, 0, 1, 1], [], []>} : vector<8x8xbf16>, vector<8x32xbf16>, vector<8x32xf32> -> vector<8x32xf32>
    %87 = tpu.reciprocal %84 {approx = true} : vector<8x1xf32> -> vector<8x1xf32>
    %88 = vector.broadcast %87 : vector<8x1xf32> to vector<8x32xf32>
    %89 = arith.mulf %86, %88 : vector<8x32xf32>
    %90 = tpu.concatenate %26, %47, %68, %89 in 1 : vector<8x32xf32>, vector<8x32xf32>, vector<8x32xf32>, vector<8x32xf32> -> vector<8x128xf32>
    %c0_27 = arith.constant 0 : index
    %c0_28 = arith.constant 0 : index
    %c0_29 = arith.constant 0 : index
    %91 = vector.load %arg4[%c0_27, %c0_28, %c0_29] : memref<1x8x128xf32, #tpu.memory_space<vmem>>, vector<1x8x128xf32>
    %92 = vector.shape_cast %91 : vector<1x8x128xf32> to vector<8x128xf32>
    %93 = vector.shape_cast %90 : vector<8x128xf32> to vector<1x8x128xf32>
    tpu.vector_store %arg4[%c0_27, %c0_28, %c0_29], %93 {strides = array<i32>} : memref<1x8x128xf32, #tpu.memory_space<vmem>>, vector<1x8x128xf32>,
    return
  }
  func.func @transform_0(%arg0: i32) -> (i32, i32, i32) {
    %c0_i32 = arith.constant 0 : i32
    %c0_i32_0 = arith.constant 0 : i32
    %c0_i32_1 = arith.constant 0 : i32
    return %arg0, %c0_i32, %c0_i32_0 : i32, i32, i32
  }
  func.func @transform_1(%arg0: i32) -> (i32, i32, i32) {
    %c0_i32 = arith.constant 0 : i32
    %c0_i32_0 = arith.constant 0 : i32
    %c0_i32_1 = arith.constant 0 : i32
    return %arg0, %c0_i32, %c0_i32_0 : i32, i32, i32
  }
  func.func @transform_2(%arg0: i32) -> (i32, i32, i32) {
    %c0_i32 = arith.constant 0 : i32
    %c0_i32_0 = arith.constant 0 : i32
    %c0_i32_1 = arith.constant 0 : i32
    return %arg0, %c0_i32, %c0_i32_0 : i32, i32, i32
  }
  func.func @transform_3(%arg0: i32) -> (i32, i32, i32) {
    %c0_i32 = arith.constant 0 : i32
    %c0_i32_0 = arith.constant 0 : i32
    %c0_i32_1 = arith.constant 0 : i32
    return %arg0, %c0_i32, %c0_i32_0 : i32, i32, i32
  }
}

module attributes {stable_mosaic.version = 11 : i64} {
  func.func @_linear_kernel(%arg0: i32, %arg1: i32, %arg2: i32, %arg3: memref<8x128xf32, #tpu.memory_space<vmem>>, %arg4: memref<128x128xbf16, #tpu.memory_space<vmem>>, %arg5: memref<1x128xf32, #tpu.memory_space<vmem>>, %arg6: memref<8x128xf32, #tpu.memory_space<vmem>>, %arg7: memref<1x128xf32, #tpu.memory_space<vmem>>, %arg8: memref<1x128xf32, #tpu.memory_space<vmem>>, %arg9: memref<8x128xf32, #tpu.memory_space<vmem>>, %arg10: memref<8x128xf32, #tpu.memory_space<vmem>>) attributes {dimension_semantics = [#tpu.dimension_semantics<parallel>, #tpu.dimension_semantics<parallel>, #tpu.dimension_semantics<arbitrary>], iteration_bounds = array<i64: 2, 1, 1>, scalar_prefetch = 0 : i64, scratch_operands = 1 : i64, tpu.core_type = #tpu.core_type<tc>, window_params = [{transform_indices = @transform_0, window_bounds = array<i64: 8, 128>}, {transform_indices = @transform_1, window_bounds = array<i64: 128, 128>}, {transform_indices = @transform_2, window_bounds = array<i64: 1, 128>}, {transform_indices = @transform_3, window_bounds = array<i64: 8, 128>}, {transform_indices = @transform_4, window_bounds = array<i64: 1, 128>}, {transform_indices = @transform_5, window_bounds = array<i64: 1, 128>}, {transform_indices = @transform_6, window_bounds = array<i64: 8, 128>}]} {
    %c0_i32 = arith.constant 0 : i32
    %0 = arith.cmpi eq, %arg2, %c0_i32 : i32
    %1 = arith.extui %0 : i1 to i32
    %c0_i32_0 = arith.constant 0 : i32
    %2 = arith.cmpi ne, %1, %c0_i32_0 : i32
    scf.if %2 {
      %cst_10 = arith.constant 0.000000e+00 : f32
      %13 = vector.broadcast %cst_10 : f32 to vector<8x128xf32>
      %c0_11 = arith.constant 0 : index
      %c0_12 = arith.constant 0 : index
      %14 = vector.load %arg10[%c0_11, %c0_12] : memref<8x128xf32, #tpu.memory_space<vmem>>, vector<8x128xf32>
      tpu.vector_store %arg10[%c0_11, %c0_12], %13 {strides = array<i32>} : memref<8x128xf32, #tpu.memory_space<vmem>>, vector<8x128xf32>,
    } else {
    }
    %c0 = arith.constant 0 : index
    %c0_1 = arith.constant 0 : index
    %3 = vector.load %arg3[%c0, %c0_1] : memref<8x128xf32, #tpu.memory_space<vmem>>, vector<8x128xf32>
    %c0_2 = arith.constant 0 : index
    %c0_3 = arith.constant 0 : index
    %4 = vector.load %arg10[%c0_2, %c0_3] : memref<8x128xf32, #tpu.memory_space<vmem>>, vector<8x128xf32>
    %5 = arith.truncf %3 : vector<8x128xf32> to vector<8x128xbf16>
    %c0_4 = arith.constant 0 : index
    %c0_5 = arith.constant 0 : index
    %6 = vector.load %arg4[%c0_4, %c0_5] : memref<128x128xbf16, #tpu.memory_space<vmem>>, vector<128x128xbf16>
    %cst = arith.constant dense<0.000000e+00> : vector<8x128xf32>
    %7 = tpu.matmul %5, %6, %cst {dimension_numbers = #tpu.dot_dimension_numbers<[1], [0], [0], [1], [0, 0, 1, 1], [], []>} : vector<8x128xbf16>, vector<128x128xbf16>, vector<8x128xf32> -> vector<8x128xf32>
    %8 = arith.addf %4, %7 : vector<8x128xf32>
    %c0_6 = arith.constant 0 : index
    %c0_7 = arith.constant 0 : index
    %9 = vector.load %arg10[%c0_6, %c0_7] : memref<8x128xf32, #tpu.memory_space<vmem>>, vector<8x128xf32>
    tpu.vector_store %arg10[%c0_6, %c0_7], %8 {strides = array<i32>} : memref<8x128xf32, #tpu.memory_space<vmem>>, vector<8x128xf32>,
    %c0_i32_8 = arith.constant 0 : i32
    %10 = arith.cmpi eq, %arg2, %c0_i32_8 : i32
    %11 = arith.extui %10 : i1 to i32
    %c0_i32_9 = arith.constant 0 : i32
    %12 = arith.cmpi ne, %11, %c0_i32_9 : i32
    scf.if %12 {
      %c0_10 = arith.constant 0 : index
      %c0_11 = arith.constant 0 : index
      %13 = vector.load %arg10[%c0_10, %c0_11] : memref<8x128xf32, #tpu.memory_space<vmem>>, vector<8x128xf32>
      %c0_12 = arith.constant 0 : index
      %c0_13 = arith.constant 0 : index
      %14 = vector.load %arg5[%c0_12, %c0_13] : memref<1x128xf32, #tpu.memory_space<vmem>>, vector<1x128xf32>
      %15 = vector.broadcast %14 : vector<1x128xf32> to vector<8x128xf32>
      %16 = arith.addf %13, %15 : vector<8x128xf32>
      %c0_14 = arith.constant 0 : index
      %c0_15 = arith.constant 0 : index
      %17 = vector.load %arg6[%c0_14, %c0_15] : memref<8x128xf32, #tpu.memory_space<vmem>>, vector<8x128xf32>
      %18 = arith.addf %16, %17 : vector<8x128xf32>
      %c0_16 = arith.constant 0 : index
      %c0_17 = arith.constant 0 : index
      %19 = vector.load %arg7[%c0_16, %c0_17] : memref<1x128xf32, #tpu.memory_space<vmem>>, vector<1x128xf32>
      %c0_18 = arith.constant 0 : index
      %c0_19 = arith.constant 0 : index
      %20 = vector.load %arg8[%c0_18, %c0_19] : memref<1x128xf32, #tpu.memory_space<vmem>>, vector<1x128xf32>
      %cst_20 = arith.constant dense<0.000000e+00> : vector<8xf32>
      %21 = vector.multi_reduction <add>, %18, %cst_20 [1] : vector<8x128xf32> to vector<8xf32>
      %22 = vector.shape_cast %21 : vector<8xf32> to vector<8x1xf32>
      %cst_21 = arith.constant 1.280000e+02 : f32
      %23 = vector.broadcast %cst_21 : f32 to vector<8x1xf32>
      %24 = arith.divf %22, %23 : vector<8x1xf32>
      %25 = vector.broadcast %24 : vector<8x1xf32> to vector<8x128xf32>
      %26 = arith.subf %18, %25 : vector<8x128xf32>
      %27 = arith.mulf %26, %26 : vector<8x128xf32>
      %cst_22 = arith.constant dense<0.000000e+00> : vector<8xf32>
      %28 = vector.multi_reduction <add>, %27, %cst_22 [1] : vector<8x128xf32> to vector<8xf32>
      %29 = vector.shape_cast %28 : vector<8xf32> to vector<8x1xf32>
      %cst_23 = arith.constant 1.280000e+02 : f32
      %30 = vector.broadcast %cst_23 : f32 to vector<8x1xf32>
      %31 = arith.divf %29, %30 : vector<8x1xf32>
      %cst_24 = arith.constant 9.99999974E-6 : f32
      %32 = vector.broadcast %cst_24 : f32 to vector<8x1xf32>
      %33 = arith.addf %31, %32 : vector<8x1xf32>
      %34 = math.rsqrt %33 : vector<8x1xf32>
      %35 = vector.broadcast %34 : vector<8x1xf32> to vector<8x128xf32>
      %36 = arith.mulf %26, %35 : vector<8x128xf32>
      %37 = vector.broadcast %19 : vector<1x128xf32> to vector<8x128xf32>
      %38 = arith.mulf %36, %37 : vector<8x128xf32>
      %39 = vector.broadcast %20 : vector<1x128xf32> to vector<8x128xf32>
      %40 = arith.addf %38, %39 : vector<8x128xf32>
      %c0_25 = arith.constant 0 : index
      %c0_26 = arith.constant 0 : index
      %41 = vector.load %arg9[%c0_25, %c0_26] : memref<8x128xf32, #tpu.memory_space<vmem>>, vector<8x128xf32>
      tpu.vector_store %arg9[%c0_25, %c0_26], %40 {strides = array<i32>} : memref<8x128xf32, #tpu.memory_space<vmem>>, vector<8x128xf32>,
    } else {
    }
    return
  }
  func.func @transform_0(%arg0: i32, %arg1: i32, %arg2: i32) -> (i32, i32) {
    %c0_i32 = arith.constant 0 : i32
    return %arg0, %arg2 : i32, i32
  }
  func.func @transform_1(%arg0: i32, %arg1: i32, %arg2: i32) -> (i32, i32) {
    %c0_i32 = arith.constant 0 : i32
    return %arg2, %arg1 : i32, i32
  }
  func.func @transform_2(%arg0: i32, %arg1: i32, %arg2: i32) -> (i32, i32) {
    %c0_i32 = arith.constant 0 : i32
    %c0_i32_0 = arith.constant 0 : i32
    return %c0_i32, %arg1 : i32, i32
  }
  func.func @transform_3(%arg0: i32, %arg1: i32, %arg2: i32) -> (i32, i32) {
    %c0_i32 = arith.constant 0 : i32
    return %arg0, %arg1 : i32, i32
  }
  func.func @transform_4(%arg0: i32, %arg1: i32, %arg2: i32) -> (i32, i32) {
    %c0_i32 = arith.constant 0 : i32
    %c0_i32_0 = arith.constant 0 : i32
    return %c0_i32, %arg1 : i32, i32
  }
  func.func @transform_5(%arg0: i32, %arg1: i32, %arg2: i32) -> (i32, i32) {
    %c0_i32 = arith.constant 0 : i32
    %c0_i32_0 = arith.constant 0 : i32
    return %c0_i32, %arg1 : i32, i32
  }
  func.func @transform_6(%arg0: i32, %arg1: i32, %arg2: i32) -> (i32, i32) {
    %c0_i32 = arith.constant 0 : i32
    return %arg0, %arg1 : i32, i32
  }
}

module attributes {stable_mosaic.version = 11 : i64} {
  func.func @_ffn_kernel(%arg0: i32, %arg1: memref<8x128xf32, #tpu.memory_space<vmem>>, %arg2: memref<128x256xbf16, #tpu.memory_space<vmem>>, %arg3: memref<1x256xf32, #tpu.memory_space<vmem>>, %arg4: memref<256x128xbf16, #tpu.memory_space<vmem>>, %arg5: memref<1x128xf32, #tpu.memory_space<vmem>>, %arg6: memref<1x128xf32, #tpu.memory_space<vmem>>, %arg7: memref<1x128xf32, #tpu.memory_space<vmem>>, %arg8: memref<8x128xf32, #tpu.memory_space<vmem>>) attributes {dimension_semantics = [#tpu.dimension_semantics<parallel>], iteration_bounds = array<i64: 2>, scalar_prefetch = 0 : i64, scratch_operands = 0 : i64, tpu.core_type = #tpu.core_type<tc>, window_params = [{transform_indices = @transform_0, window_bounds = array<i64: 8, 128>}, {pipeline_mode = #tpu.pipeline_mode<synchronous>, transform_indices = @transform_1, window_bounds = array<i64: 128, 256>}, {pipeline_mode = #tpu.pipeline_mode<synchronous>, transform_indices = @transform_2, window_bounds = array<i64: 1, 256>}, {pipeline_mode = #tpu.pipeline_mode<synchronous>, transform_indices = @transform_3, window_bounds = array<i64: 256, 128>}, {pipeline_mode = #tpu.pipeline_mode<synchronous>, transform_indices = @transform_4, window_bounds = array<i64: 1, 128>}, {pipeline_mode = #tpu.pipeline_mode<synchronous>, transform_indices = @transform_5, window_bounds = array<i64: 1, 128>}, {pipeline_mode = #tpu.pipeline_mode<synchronous>, transform_indices = @transform_6, window_bounds = array<i64: 1, 128>}, {transform_indices = @transform_7, window_bounds = array<i64: 8, 128>}]} {
    %c0 = arith.constant 0 : index
    %c0_0 = arith.constant 0 : index
    %0 = vector.load %arg1[%c0, %c0_0] : memref<8x128xf32, #tpu.memory_space<vmem>>, vector<8x128xf32>
    %1 = arith.truncf %0 : vector<8x128xf32> to vector<8x128xbf16>
    %c0_1 = arith.constant 0 : index
    %c0_2 = arith.constant 0 : index
    %2 = vector.load %arg2[%c0_1, %c0_2] : memref<128x256xbf16, #tpu.memory_space<vmem>>, vector<128x256xbf16>
    %cst = arith.constant dense<0.000000e+00> : vector<8x256xf32>
    %3 = tpu.matmul %1, %2, %cst {dimension_numbers = #tpu.dot_dimension_numbers<[1], [0], [0], [1], [0, 0, 1, 1], [], []>} : vector<8x128xbf16>, vector<128x256xbf16>, vector<8x256xf32> -> vector<8x256xf32>
    %c0_3 = arith.constant 0 : index
    %c0_4 = arith.constant 0 : index
    %4 = vector.load %arg3[%c0_3, %c0_4] : memref<1x256xf32, #tpu.memory_space<vmem>>, vector<1x256xf32>
    %5 = vector.broadcast %4 : vector<1x256xf32> to vector<8x256xf32>
    %6 = arith.addf %3, %5 : vector<8x256xf32>
    %cst_5 = arith.constant 0.000000e+00 : f32
    %7 = vector.broadcast %cst_5 : f32 to vector<8x256xf32>
    %8 = arith.maximumf %6, %7 : vector<8x256xf32>
    %9 = arith.truncf %8 : vector<8x256xf32> to vector<8x256xbf16>
    %c0_6 = arith.constant 0 : index
    %c0_7 = arith.constant 0 : index
    %10 = vector.load %arg4[%c0_6, %c0_7] : memref<256x128xbf16, #tpu.memory_space<vmem>>, vector<256x128xbf16>
    %cst_8 = arith.constant dense<0.000000e+00> : vector<8x128xf32>
    %11 = tpu.matmul %9, %10, %cst_8 {dimension_numbers = #tpu.dot_dimension_numbers<[1], [0], [0], [1], [0, 0, 1, 1], [], []>} : vector<8x256xbf16>, vector<256x128xbf16>, vector<8x128xf32> -> vector<8x128xf32>
    %c0_9 = arith.constant 0 : index
    %c0_10 = arith.constant 0 : index
    %12 = vector.load %arg5[%c0_9, %c0_10] : memref<1x128xf32, #tpu.memory_space<vmem>>, vector<1x128xf32>
    %13 = vector.broadcast %12 : vector<1x128xf32> to vector<8x128xf32>
    %14 = arith.addf %11, %13 : vector<8x128xf32>
    %15 = arith.addf %0, %14 : vector<8x128xf32>
    %c0_11 = arith.constant 0 : index
    %c0_12 = arith.constant 0 : index
    %16 = vector.load %arg6[%c0_11, %c0_12] : memref<1x128xf32, #tpu.memory_space<vmem>>, vector<1x128xf32>
    %c0_13 = arith.constant 0 : index
    %c0_14 = arith.constant 0 : index
    %17 = vector.load %arg7[%c0_13, %c0_14] : memref<1x128xf32, #tpu.memory_space<vmem>>, vector<1x128xf32>
    %cst_15 = arith.constant dense<0.000000e+00> : vector<8xf32>
    %18 = vector.multi_reduction <add>, %15, %cst_15 [1] : vector<8x128xf32> to vector<8xf32>
    %19 = vector.shape_cast %18 : vector<8xf32> to vector<8x1xf32>
    %cst_16 = arith.constant 1.280000e+02 : f32
    %20 = vector.broadcast %cst_16 : f32 to vector<8x1xf32>
    %21 = arith.divf %19, %20 : vector<8x1xf32>
    %22 = vector.broadcast %21 : vector<8x1xf32> to vector<8x128xf32>
    %23 = arith.subf %15, %22 : vector<8x128xf32>
    %24 = arith.mulf %23, %23 : vector<8x128xf32>
    %cst_17 = arith.constant dense<0.000000e+00> : vector<8xf32>
    %25 = vector.multi_reduction <add>, %24, %cst_17 [1] : vector<8x128xf32> to vector<8xf32>
    %26 = vector.shape_cast %25 : vector<8xf32> to vector<8x1xf32>
    %cst_18 = arith.constant 1.280000e+02 : f32
    %27 = vector.broadcast %cst_18 : f32 to vector<8x1xf32>
    %28 = arith.divf %26, %27 : vector<8x1xf32>
    %cst_19 = arith.constant 9.99999974E-6 : f32
    %29 = vector.broadcast %cst_19 : f32 to vector<8x1xf32>
    %30 = arith.addf %28, %29 : vector<8x1xf32>
    %31 = math.rsqrt %30 : vector<8x1xf32>
    %32 = vector.broadcast %31 : vector<8x1xf32> to vector<8x128xf32>
    %33 = arith.mulf %23, %32 : vector<8x128xf32>
    %34 = vector.broadcast %16 : vector<1x128xf32> to vector<8x128xf32>
    %35 = arith.mulf %33, %34 : vector<8x128xf32>
    %36 = vector.broadcast %17 : vector<1x128xf32> to vector<8x128xf32>
    %37 = arith.addf %35, %36 : vector<8x128xf32>
    %c0_20 = arith.constant 0 : index
    %c0_21 = arith.constant 0 : index
    %38 = vector.load %arg8[%c0_20, %c0_21] : memref<8x128xf32, #tpu.memory_space<vmem>>, vector<8x128xf32>
    tpu.vector_store %arg8[%c0_20, %c0_21], %37 {strides = array<i32>} : memref<8x128xf32, #tpu.memory_space<vmem>>, vector<8x128xf32>,
    return
  }
  func.func @transform_0(%arg0: i32) -> (i32, i32) {
    %c0_i32 = arith.constant 0 : i32
    %c0_i32_0 = arith.constant 0 : i32
    return %arg0, %c0_i32 : i32, i32
  }
  func.func @transform_1(%arg0: i32) -> (i32, i32) {
    %c0_i32 = arith.constant 0 : i32
    %c0_i32_0 = arith.constant 0 : i32
    %c0_i32_1 = arith.constant 0 : i32
    return %c0_i32, %c0_i32_0 : i32, i32
  }
  func.func @transform_2(%arg0: i32) -> (i32, i32) {
    %c0_i32 = arith.constant 0 : i32
    %c0_i32_0 = arith.constant 0 : i32
    %c0_i32_1 = arith.constant 0 : i32
    return %c0_i32, %c0_i32_0 : i32, i32
  }
  func.func @transform_3(%arg0: i32) -> (i32, i32) {
    %c0_i32 = arith.constant 0 : i32
    %c0_i32_0 = arith.constant 0 : i32
    %c0_i32_1 = arith.constant 0 : i32
    return %c0_i32, %c0_i32_0 : i32, i32
  }
  func.func @transform_4(%arg0: i32) -> (i32, i32) {
    %c0_i32 = arith.constant 0 : i32
    %c0_i32_0 = arith.constant 0 : i32
    %c0_i32_1 = arith.constant 0 : i32
    return %c0_i32, %c0_i32_0 : i32, i32
  }
  func.func @transform_5(%arg0: i32) -> (i32, i32) {
    %c0_i32 = arith.constant 0 : i32
    %c0_i32_0 = arith.constant 0 : i32
    %c0_i32_1 = arith.constant 0 : i32
    return %c0_i32, %c0_i32_0 : i32, i32
  }
  func.func @transform_6(%arg0: i32) -> (i32, i32) {
    %c0_i32 = arith.constant 0 : i32
    %c0_i32_0 = arith.constant 0 : i32
    %c0_i32_1 = arith.constant 0 : i32
    return %c0_i32, %c0_i32_0 : i32, i32
  }
  func.func @transform_7(%arg0: i32) -> (i32, i32) {
    %c0_i32 = arith.constant 0 : i32
    %c0_i32_0 = arith.constant 0 : i32
    return %arg0, %c0_i32 : i32, i32
  }
}

module attributes {stable_mosaic.version = 11 : i64} {
  func.func @_layernorm_kernel(%arg0: i32, %arg1: memref<8x128xf32, #tpu.memory_space<vmem>>, %arg2: memref<1x128xf32, #tpu.memory_space<vmem>>, %arg3: memref<1x128xf32, #tpu.memory_space<vmem>>, %arg4: memref<8x128xf32, #tpu.memory_space<vmem>>) attributes {dimension_semantics = [#tpu.dimension_semantics<parallel>], iteration_bounds = array<i64: 2>, scalar_prefetch = 0 : i64, scratch_operands = 0 : i64, tpu.core_type = #tpu.core_type<tc>, window_params = [{transform_indices = @transform_0, window_bounds = array<i64: 8, 128>}, {pipeline_mode = #tpu.pipeline_mode<synchronous>, transform_indices = @transform_1, window_bounds = array<i64: 1, 128>}, {pipeline_mode = #tpu.pipeline_mode<synchronous>, transform_indices = @transform_2, window_bounds = array<i64: 1, 128>}, {transform_indices = @transform_3, window_bounds = array<i64: 8, 128>}]} {
    %c0 = arith.constant 0 : index
    %c0_0 = arith.constant 0 : index
    %0 = vector.load %arg1[%c0, %c0_0] : memref<8x128xf32, #tpu.memory_space<vmem>>, vector<8x128xf32>
    %c0_1 = arith.constant 0 : index
    %c0_2 = arith.constant 0 : index
    %1 = vector.load %arg2[%c0_1, %c0_2] : memref<1x128xf32, #tpu.memory_space<vmem>>, vector<1x128xf32>
    %c0_3 = arith.constant 0 : index
    %c0_4 = arith.constant 0 : index
    %2 = vector.load %arg3[%c0_3, %c0_4] : memref<1x128xf32, #tpu.memory_space<vmem>>, vector<1x128xf32>
    %cst = arith.constant dense<0.000000e+00> : vector<8xf32>
    %3 = vector.multi_reduction <add>, %0, %cst [1] : vector<8x128xf32> to vector<8xf32>
    %4 = vector.shape_cast %3 : vector<8xf32> to vector<8x1xf32>
    %cst_5 = arith.constant 1.280000e+02 : f32
    %5 = vector.broadcast %cst_5 : f32 to vector<8x1xf32>
    %6 = arith.divf %4, %5 : vector<8x1xf32>
    %7 = vector.broadcast %6 : vector<8x1xf32> to vector<8x128xf32>
    %8 = arith.subf %0, %7 : vector<8x128xf32>
    %9 = arith.mulf %8, %8 : vector<8x128xf32>
    %cst_6 = arith.constant dense<0.000000e+00> : vector<8xf32>
    %10 = vector.multi_reduction <add>, %9, %cst_6 [1] : vector<8x128xf32> to vector<8xf32>
    %11 = vector.shape_cast %10 : vector<8xf32> to vector<8x1xf32>
    %cst_7 = arith.constant 1.280000e+02 : f32
    %12 = vector.broadcast %cst_7 : f32 to vector<8x1xf32>
    %13 = arith.divf %11, %12 : vector<8x1xf32>
    %cst_8 = arith.constant 9.99999974E-6 : f32
    %14 = vector.broadcast %cst_8 : f32 to vector<8x1xf32>
    %15 = arith.addf %13, %14 : vector<8x1xf32>
    %16 = math.rsqrt %15 : vector<8x1xf32>
    %17 = vector.broadcast %16 : vector<8x1xf32> to vector<8x128xf32>
    %18 = arith.mulf %8, %17 : vector<8x128xf32>
    %19 = vector.broadcast %1 : vector<1x128xf32> to vector<8x128xf32>
    %20 = arith.mulf %18, %19 : vector<8x128xf32>
    %21 = vector.broadcast %2 : vector<1x128xf32> to vector<8x128xf32>
    %22 = arith.addf %20, %21 : vector<8x128xf32>
    %c0_9 = arith.constant 0 : index
    %c0_10 = arith.constant 0 : index
    %23 = vector.load %arg4[%c0_9, %c0_10] : memref<8x128xf32, #tpu.memory_space<vmem>>, vector<8x128xf32>
    tpu.vector_store %arg4[%c0_9, %c0_10], %22 {strides = array<i32>} : memref<8x128xf32, #tpu.memory_space<vmem>>, vector<8x128xf32>,
    return
  }
  func.func @transform_0(%arg0: i32) -> (i32, i32) {
    %c0_i32 = arith.constant 0 : i32
    %c0_i32_0 = arith.constant 0 : i32
    return %arg0, %c0_i32 : i32, i32
  }
  func.func @transform_1(%arg0: i32) -> (i32, i32) {
    %c0_i32 = arith.constant 0 : i32
    %c0_i32_0 = arith.constant 0 : i32
    %c0_i32_1 = arith.constant 0 : i32
    return %c0_i32, %c0_i32_0 : i32, i32
  }
  func.func @transform_2(%arg0: i32) -> (i32, i32) {
    %c0_i32 = arith.constant 0 : i32
    %c0_i32_0 = arith.constant 0 : i32
    %c0_i32_1 = arith.constant 0 : i32
    return %c0_i32, %c0_i32_0 : i32, i32
  }
  func.func @transform_3(%arg0: i32) -> (i32, i32) {
    %c0_i32 = arith.constant 0 : i32
    %c0_i32_0 = arith.constant 0 : i32
    return %arg0, %c0_i32 : i32, i32
  }
}

module attributes {stable_mosaic.version = 11 : i64} {
  func.func @_linear_kernel(%arg0: i32, %arg1: i32, %arg2: i32, %arg3: memref<8x128xf32, #tpu.memory_space<vmem>>, %arg4: memref<128x256xbf16, #tpu.memory_space<vmem>>, %arg5: memref<1x256xf32, #tpu.memory_space<vmem>>, %arg6: memref<8x256xf32, #tpu.memory_space<vmem>>, %arg7: memref<8x256xf32, #tpu.memory_space<vmem>>) attributes {dimension_semantics = [#tpu.dimension_semantics<parallel>, #tpu.dimension_semantics<parallel>, #tpu.dimension_semantics<arbitrary>], iteration_bounds = array<i64: 2, 1, 1>, scalar_prefetch = 0 : i64, scratch_operands = 1 : i64, tpu.core_type = #tpu.core_type<tc>, window_params = [{transform_indices = @transform_0, window_bounds = array<i64: 8, 128>}, {transform_indices = @transform_1, window_bounds = array<i64: 128, 256>}, {transform_indices = @transform_2, window_bounds = array<i64: 1, 256>}, {transform_indices = @transform_3, window_bounds = array<i64: 8, 256>}]} {
    %c0_i32 = arith.constant 0 : i32
    %0 = arith.cmpi eq, %arg2, %c0_i32 : i32
    %1 = arith.extui %0 : i1 to i32
    %c0_i32_0 = arith.constant 0 : i32
    %2 = arith.cmpi ne, %1, %c0_i32_0 : i32
    scf.if %2 {
      %cst_10 = arith.constant 0.000000e+00 : f32
      %13 = vector.broadcast %cst_10 : f32 to vector<8x256xf32>
      %c0_11 = arith.constant 0 : index
      %c0_12 = arith.constant 0 : index
      %14 = vector.load %arg7[%c0_11, %c0_12] : memref<8x256xf32, #tpu.memory_space<vmem>>, vector<8x256xf32>
      tpu.vector_store %arg7[%c0_11, %c0_12], %13 {strides = array<i32>} : memref<8x256xf32, #tpu.memory_space<vmem>>, vector<8x256xf32>,
    } else {
    }
    %c0 = arith.constant 0 : index
    %c0_1 = arith.constant 0 : index
    %3 = vector.load %arg3[%c0, %c0_1] : memref<8x128xf32, #tpu.memory_space<vmem>>, vector<8x128xf32>
    %c0_2 = arith.constant 0 : index
    %c0_3 = arith.constant 0 : index
    %4 = vector.load %arg7[%c0_2, %c0_3] : memref<8x256xf32, #tpu.memory_space<vmem>>, vector<8x256xf32>
    %5 = arith.truncf %3 : vector<8x128xf32> to vector<8x128xbf16>
    %c0_4 = arith.constant 0 : index
    %c0_5 = arith.constant 0 : index
    %6 = vector.load %arg4[%c0_4, %c0_5] : memref<128x256xbf16, #tpu.memory_space<vmem>>, vector<128x256xbf16>
    %cst = arith.constant dense<0.000000e+00> : vector<8x256xf32>
    %7 = tpu.matmul %5, %6, %cst {dimension_numbers = #tpu.dot_dimension_numbers<[1], [0], [0], [1], [0, 0, 1, 1], [], []>} : vector<8x128xbf16>, vector<128x256xbf16>, vector<8x256xf32> -> vector<8x256xf32>
    %8 = arith.addf %4, %7 : vector<8x256xf32>
    %c0_6 = arith.constant 0 : index
    %c0_7 = arith.constant 0 : index
    %9 = vector.load %arg7[%c0_6, %c0_7] : memref<8x256xf32, #tpu.memory_space<vmem>>, vector<8x256xf32>
    tpu.vector_store %arg7[%c0_6, %c0_7], %8 {strides = array<i32>} : memref<8x256xf32, #tpu.memory_space<vmem>>, vector<8x256xf32>,
    %c0_i32_8 = arith.constant 0 : i32
    %10 = arith.cmpi eq, %arg2, %c0_i32_8 : i32
    %11 = arith.extui %10 : i1 to i32
    %c0_i32_9 = arith.constant 0 : i32
    %12 = arith.cmpi ne, %11, %c0_i32_9 : i32
    scf.if %12 {
      %c0_10 = arith.constant 0 : index
      %c0_11 = arith.constant 0 : index
      %13 = vector.load %arg7[%c0_10, %c0_11] : memref<8x256xf32, #tpu.memory_space<vmem>>, vector<8x256xf32>
      %c0_12 = arith.constant 0 : index
      %c0_13 = arith.constant 0 : index
      %14 = vector.load %arg5[%c0_12, %c0_13] : memref<1x256xf32, #tpu.memory_space<vmem>>, vector<1x256xf32>
      %15 = vector.broadcast %14 : vector<1x256xf32> to vector<8x256xf32>
      %16 = arith.addf %13, %15 : vector<8x256xf32>
      %c0_14 = arith.constant 0 : index
      %c0_15 = arith.constant 0 : index
      %17 = vector.load %arg6[%c0_14, %c0_15] : memref<8x256xf32, #tpu.memory_space<vmem>>, vector<8x256xf32>
      tpu.vector_store %arg6[%c0_14, %c0_15], %16 {strides = array<i32>} : memref<8x256xf32, #tpu.memory_space<vmem>>, vector<8x256xf32>,
    } else {
    }
    return
  }
  func.func @transform_0(%arg0: i32, %arg1: i32, %arg2: i32) -> (i32, i32) {
    %c0_i32 = arith.constant 0 : i32
    return %arg0, %arg2 : i32, i32
  }
  func.func @transform_1(%arg0: i32, %arg1: i32, %arg2: i32) -> (i32, i32) {
    %c0_i32 = arith.constant 0 : i32
    return %arg2, %arg1 : i32, i32
  }
  func.func @transform_2(%arg0: i32, %arg1: i32, %arg2: i32) -> (i32, i32) {
    %c0_i32 = arith.constant 0 : i32
    %c0_i32_0 = arith.constant 0 : i32
    return %c0_i32, %arg1 : i32, i32
  }
  func.func @transform_3(%arg0: i32, %arg1: i32, %arg2: i32) -> (i32, i32) {
    %c0_i32 = arith.constant 0 : i32
    return %arg0, %arg1 : i32, i32
  }
}

module attributes {stable_mosaic.version = 11 : i64} {
  func.func @_mha_kernel(%arg0: i32, %arg1: memref<1x8x128xf32, #tpu.memory_space<vmem>>, %arg2: memref<1x8x128xf32, #tpu.memory_space<vmem>>, %arg3: memref<1x8x128xf32, #tpu.memory_space<vmem>>, %arg4: memref<1x8x128xf32, #tpu.memory_space<vmem>>) attributes {dimension_semantics = [#tpu.dimension_semantics<parallel>], iteration_bounds = array<i64: 2>, scalar_prefetch = 0 : i64, scratch_operands = 0 : i64, tpu.core_type = #tpu.core_type<tc>, window_params = [{transform_indices = @transform_0, window_bounds = array<i64: 1, 8, 128>}, {transform_indices = @transform_1, window_bounds = array<i64: 1, 8, 128>}, {transform_indices = @transform_2, window_bounds = array<i64: 1, 8, 128>}, {transform_indices = @transform_3, window_bounds = array<i64: 1, 8, 128>}]} {
    %c0 = arith.constant 0 : index
    %c0_0 = arith.constant 0 : index
    %c0_1 = arith.constant 0 : index
    %0 = vector.load %arg1[%c0, %c0_0, %c0_1] : memref<1x8x128xf32, #tpu.memory_space<vmem>>, vector<1x8x128xf32>
    %1 = vector.shape_cast %0 : vector<1x8x128xf32> to vector<8x128xf32>
    %c0_2 = arith.constant 0 : index
    %c0_3 = arith.constant 0 : index
    %c0_4 = arith.constant 0 : index
    %2 = vector.load %arg2[%c0_2, %c0_3, %c0_4] : memref<1x8x128xf32, #tpu.memory_space<vmem>>, vector<1x8x128xf32>
    %3 = vector.shape_cast %2 : vector<1x8x128xf32> to vector<8x128xf32>
    %c0_5 = arith.constant 0 : index
    %c0_6 = arith.constant 0 : index
    %c0_7 = arith.constant 0 : index
    %4 = vector.load %arg3[%c0_5, %c0_6, %c0_7] : memref<1x8x128xf32, #tpu.memory_space<vmem>>, vector<1x8x128xf32>
    %5 = vector.shape_cast %4 : vector<1x8x128xf32> to vector<8x128xf32>
    %6 = tpu.iota {dimensions = array<i32: 0>} : vector<8x8xi32>
    %7 = tpu.iota {dimensions = array<i32: 1>} : vector<8x8xi32>
    %8 = arith.cmpi sle, %7, %6 : vector<8x8xi32>
    %9 = vector.extract_strided_slice %1 {offsets = [0, 0], sizes = [8, 32], strides = [1, 1]} : vector<8x128xf32> to vector<8x32xf32>
    %10 = arith.truncf %9 : vector<8x32xf32> to vector<8x32xbf16>
    %11 = vector.extract_strided_slice %3 {offsets = [0, 0], sizes = [8, 32], strides = [1, 1]} : vector<8x128xf32> to vector<8x32xf32>
    %12 = arith.truncf %11 : vector<8x32xf32> to vector<8x32xbf16>
    %13 = vector.extract_strided_slice %5 {offsets = [0, 0], sizes = [8, 32], strides = [1, 1]} : vector<8x128xf32> to vector<8x32xf32>
    %14 = arith.truncf %13 : vector<8x32xf32> to vector<8x32xbf16>
    %cst = arith.constant dense<0.000000e+00> : vector<8x8xf32>
    %15 = tpu.matmul %10, %12, %cst {dimension_numbers = #tpu.dot_dimension_numbers<[1], [1], [0], [0], [0, 0, 1, 0], [], []>} : vector<8x32xbf16>, vector<8x32xbf16>, vector<8x8xf32> -> vector<8x8xf32>
    %cst_8 = arith.constant 0.176776692 : f32
    %16 = vector.broadcast %cst_8 : f32 to vector<8x8xf32>
    %17 = arith.mulf %15, %16 : vector<8x8xf32>
    %cst_9 = arith.constant -1.000000e+30 : f32
    %18 = vector.broadcast %cst_9 : f32 to vector<8x8xf32>
    %19 = arith.select %8, %17, %18 : vector<8x8xi1>, vector<8x8xf32>
    %cst_10 = arith.constant dense<0xFF800000> : vector<8xf32>
    %20 = vector.multi_reduction <maximumf>, %19, %cst_10 [1] : vector<8x8xf32> to vector<8xf32>
    %21 = vector.shape_cast %20 : vector<8xf32> to vector<8x1xf32>
    %22 = vector.broadcast %21 : vector<8x1xf32> to vector<8x8xf32>
    %23 = arith.subf %19, %22 : vector<8x8xf32>
    %24 = math.exp %23 : vector<8x8xf32>
    %cst_11 = arith.constant dense<0.000000e+00> : vector<8xf32>
    %25 = vector.multi_reduction <add>, %24, %cst_11 [1] : vector<8x8xf32> to vector<8xf32>
    %26 = vector.shape_cast %25 : vector<8xf32> to vector<8x1xf32>
    %27 = arith.truncf %24 : vector<8x8xf32> to vector<8x8xbf16>
    %cst_12 = arith.constant dense<0.000000e+00> : vector<8x32xf32>
    %28 = tpu.matmul %27, %14, %cst_12 {dimension_numbers = #tpu.dot_dimension_numbers<[1], [0], [0], [1], [0, 0, 1, 1], [], []>} : vector<8x8xbf16>, vector<8x32xbf16>, vector<8x32xf32> -> vector<8x32xf32>
    %29 = tpu.reciprocal %26 {approx = true} : vector<8x1xf32> -> vector<8x1xf32>
    %30 = vector.broadcast %29 : vector<8x1xf32> to vector<8x32xf32>
    %31 = arith.mulf %28, %30 : vector<8x32xf32>
    %32 = vector.extract_strided_slice %1 {offsets = [0, 32], sizes = [8, 32], strides = [1, 1]} : vector<8x128xf32> to vector<8x32xf32>
    %33 = arith.truncf %32 : vector<8x32xf32> to vector<8x32xbf16>
    %34 = vector.extract_strided_slice %3 {offsets = [0, 32], sizes = [8, 32], strides = [1, 1]} : vector<8x128xf32> to vector<8x32xf32>
    %35 = arith.truncf %34 : vector<8x32xf32> to vector<8x32xbf16>
    %36 = vector.extract_strided_slice %5 {offsets = [0, 32], sizes = [8, 32], strides = [1, 1]} : vector<8x128xf32> to vector<8x32xf32>
    %37 = arith.truncf %36 : vector<8x32xf32> to vector<8x32xbf16>
    %cst_13 = arith.constant dense<0.000000e+00> : vector<8x8xf32>
    %38 = tpu.matmul %33, %35, %cst_13 {dimension_numbers = #tpu.dot_dimension_numbers<[1], [1], [0], [0], [0, 0, 1, 0], [], []>} : vector<8x32xbf16>, vector<8x32xbf16>, vector<8x8xf32> -> vector<8x8xf32>
    %cst_14 = arith.constant 0.176776692 : f32
    %39 = vector.broadcast %cst_14 : f32 to vector<8x8xf32>
    %40 = arith.mulf %38, %39 : vector<8x8xf32>
    %cst_15 = arith.constant -1.000000e+30 : f32
    %41 = vector.broadcast %cst_15 : f32 to vector<8x8xf32>
    %42 = arith.select %8, %40, %41 : vector<8x8xi1>, vector<8x8xf32>
    %cst_16 = arith.constant dense<0xFF800000> : vector<8xf32>
    %43 = vector.multi_reduction <maximumf>, %42, %cst_16 [1] : vector<8x8xf32> to vector<8xf32>
    %44 = vector.shape_cast %43 : vector<8xf32> to vector<8x1xf32>
    %45 = vector.broadcast %44 : vector<8x1xf32> to vector<8x8xf32>
    %46 = arith.subf %42, %45 : vector<8x8xf32>
    %47 = math.exp %46 : vector<8x8xf32>
    %cst_17 = arith.constant dense<0.000000e+00> : vector<8xf32>
    %48 = vector.multi_reduction <add>, %47, %cst_17 [1] : vector<8x8xf32> to vector<8xf32>
    %49 = vector.shape_cast %48 : vector<8xf32> to vector<8x1xf32>
    %50 = arith.truncf %47 : vector<8x8xf32> to vector<8x8xbf16>
    %cst_18 = arith.constant dense<0.000000e+00> : vector<8x32xf32>
    %51 = tpu.matmul %50, %37, %cst_18 {dimension_numbers = #tpu.dot_dimension_numbers<[1], [0], [0], [1], [0, 0, 1, 1], [], []>} : vector<8x8xbf16>, vector<8x32xbf16>, vector<8x32xf32> -> vector<8x32xf32>
    %52 = tpu.reciprocal %49 {approx = true} : vector<8x1xf32> -> vector<8x1xf32>
    %53 = vector.broadcast %52 : vector<8x1xf32> to vector<8x32xf32>
    %54 = arith.mulf %51, %53 : vector<8x32xf32>
    %55 = vector.extract_strided_slice %1 {offsets = [0, 64], sizes = [8, 32], strides = [1, 1]} : vector<8x128xf32> to vector<8x32xf32>
    %56 = arith.truncf %55 : vector<8x32xf32> to vector<8x32xbf16>
    %57 = vector.extract_strided_slice %3 {offsets = [0, 64], sizes = [8, 32], strides = [1, 1]} : vector<8x128xf32> to vector<8x32xf32>
    %58 = arith.truncf %57 : vector<8x32xf32> to vector<8x32xbf16>
    %59 = vector.extract_strided_slice %5 {offsets = [0, 64], sizes = [8, 32], strides = [1, 1]} : vector<8x128xf32> to vector<8x32xf32>
    %60 = arith.truncf %59 : vector<8x32xf32> to vector<8x32xbf16>
    %cst_19 = arith.constant dense<0.000000e+00> : vector<8x8xf32>
    %61 = tpu.matmul %56, %58, %cst_19 {dimension_numbers = #tpu.dot_dimension_numbers<[1], [1], [0], [0], [0, 0, 1, 0], [], []>} : vector<8x32xbf16>, vector<8x32xbf16>, vector<8x8xf32> -> vector<8x8xf32>
    %cst_20 = arith.constant 0.176776692 : f32
    %62 = vector.broadcast %cst_20 : f32 to vector<8x8xf32>
    %63 = arith.mulf %61, %62 : vector<8x8xf32>
    %cst_21 = arith.constant -1.000000e+30 : f32
    %64 = vector.broadcast %cst_21 : f32 to vector<8x8xf32>
    %65 = arith.select %8, %63, %64 : vector<8x8xi1>, vector<8x8xf32>
    %cst_22 = arith.constant dense<0xFF800000> : vector<8xf32>
    %66 = vector.multi_reduction <maximumf>, %65, %cst_22 [1] : vector<8x8xf32> to vector<8xf32>
    %67 = vector.shape_cast %66 : vector<8xf32> to vector<8x1xf32>
    %68 = vector.broadcast %67 : vector<8x1xf32> to vector<8x8xf32>
    %69 = arith.subf %65, %68 : vector<8x8xf32>
    %70 = math.exp %69 : vector<8x8xf32>
    %cst_23 = arith.constant dense<0.000000e+00> : vector<8xf32>
    %71 = vector.multi_reduction <add>, %70, %cst_23 [1] : vector<8x8xf32> to vector<8xf32>
    %72 = vector.shape_cast %71 : vector<8xf32> to vector<8x1xf32>
    %73 = arith.truncf %70 : vector<8x8xf32> to vector<8x8xbf16>
    %cst_24 = arith.constant dense<0.000000e+00> : vector<8x32xf32>
    %74 = tpu.matmul %73, %60, %cst_24 {dimension_numbers = #tpu.dot_dimension_numbers<[1], [0], [0], [1], [0, 0, 1, 1], [], []>} : vector<8x8xbf16>, vector<8x32xbf16>, vector<8x32xf32> -> vector<8x32xf32>
    %75 = tpu.reciprocal %72 {approx = true} : vector<8x1xf32> -> vector<8x1xf32>
    %76 = vector.broadcast %75 : vector<8x1xf32> to vector<8x32xf32>
    %77 = arith.mulf %74, %76 : vector<8x32xf32>
    %78 = vector.extract_strided_slice %1 {offsets = [0, 96], sizes = [8, 32], strides = [1, 1]} : vector<8x128xf32> to vector<8x32xf32>
    %79 = arith.truncf %78 : vector<8x32xf32> to vector<8x32xbf16>
    %80 = vector.extract_strided_slice %3 {offsets = [0, 96], sizes = [8, 32], strides = [1, 1]} : vector<8x128xf32> to vector<8x32xf32>
    %81 = arith.truncf %80 : vector<8x32xf32> to vector<8x32xbf16>
    %82 = vector.extract_strided_slice %5 {offsets = [0, 96], sizes = [8, 32], strides = [1, 1]} : vector<8x128xf32> to vector<8x32xf32>
    %83 = arith.truncf %82 : vector<8x32xf32> to vector<8x32xbf16>
    %cst_25 = arith.constant dense<0.000000e+00> : vector<8x8xf32>
    %84 = tpu.matmul %79, %81, %cst_25 {dimension_numbers = #tpu.dot_dimension_numbers<[1], [1], [0], [0], [0, 0, 1, 0], [], []>} : vector<8x32xbf16>, vector<8x32xbf16>, vector<8x8xf32> -> vector<8x8xf32>
    %cst_26 = arith.constant 0.176776692 : f32
    %85 = vector.broadcast %cst_26 : f32 to vector<8x8xf32>
    %86 = arith.mulf %84, %85 : vector<8x8xf32>
    %cst_27 = arith.constant -1.000000e+30 : f32
    %87 = vector.broadcast %cst_27 : f32 to vector<8x8xf32>
    %88 = arith.select %8, %86, %87 : vector<8x8xi1>, vector<8x8xf32>
    %cst_28 = arith.constant dense<0xFF800000> : vector<8xf32>
    %89 = vector.multi_reduction <maximumf>, %88, %cst_28 [1] : vector<8x8xf32> to vector<8xf32>
    %90 = vector.shape_cast %89 : vector<8xf32> to vector<8x1xf32>
    %91 = vector.broadcast %90 : vector<8x1xf32> to vector<8x8xf32>
    %92 = arith.subf %88, %91 : vector<8x8xf32>
    %93 = math.exp %92 : vector<8x8xf32>
    %cst_29 = arith.constant dense<0.000000e+00> : vector<8xf32>
    %94 = vector.multi_reduction <add>, %93, %cst_29 [1] : vector<8x8xf32> to vector<8xf32>
    %95 = vector.shape_cast %94 : vector<8xf32> to vector<8x1xf32>
    %96 = arith.truncf %93 : vector<8x8xf32> to vector<8x8xbf16>
    %cst_30 = arith.constant dense<0.000000e+00> : vector<8x32xf32>
    %97 = tpu.matmul %96, %83, %cst_30 {dimension_numbers = #tpu.dot_dimension_numbers<[1], [0], [0], [1], [0, 0, 1, 1], [], []>} : vector<8x8xbf16>, vector<8x32xbf16>, vector<8x32xf32> -> vector<8x32xf32>
    %98 = tpu.reciprocal %95 {approx = true} : vector<8x1xf32> -> vector<8x1xf32>
    %99 = vector.broadcast %98 : vector<8x1xf32> to vector<8x32xf32>
    %100 = arith.mulf %97, %99 : vector<8x32xf32>
    %101 = tpu.concatenate %31, %54, %77, %100 in 1 : vector<8x32xf32>, vector<8x32xf32>, vector<8x32xf32>, vector<8x32xf32> -> vector<8x128xf32>
    %c0_31 = arith.constant 0 : index
    %c0_32 = arith.constant 0 : index
    %c0_33 = arith.constant 0 : index
    %102 = vector.load %arg4[%c0_31, %c0_32, %c0_33] : memref<1x8x128xf32, #tpu.memory_space<vmem>>, vector<1x8x128xf32>
    %103 = vector.shape_cast %102 : vector<1x8x128xf32> to vector<8x128xf32>
    %104 = vector.shape_cast %101 : vector<8x128xf32> to vector<1x8x128xf32>
    tpu.vector_store %arg4[%c0_31, %c0_32, %c0_33], %104 {strides = array<i32>} : memref<1x8x128xf32, #tpu.memory_space<vmem>>, vector<1x8x128xf32>,
    return
  }
  func.func @transform_0(%arg0: i32) -> (i32, i32, i32) {
    %c0_i32 = arith.constant 0 : i32
    %c0_i32_0 = arith.constant 0 : i32
    %c0_i32_1 = arith.constant 0 : i32
    return %arg0, %c0_i32, %c0_i32_0 : i32, i32, i32
  }
  func.func @transform_1(%arg0: i32) -> (i32, i32, i32) {
    %c0_i32 = arith.constant 0 : i32
    %c0_i32_0 = arith.constant 0 : i32
    %c0_i32_1 = arith.constant 0 : i32
    return %arg0, %c0_i32, %c0_i32_0 : i32, i32, i32
  }
  func.func @transform_2(%arg0: i32) -> (i32, i32, i32) {
    %c0_i32 = arith.constant 0 : i32
    %c0_i32_0 = arith.constant 0 : i32
    %c0_i32_1 = arith.constant 0 : i32
    return %arg0, %c0_i32, %c0_i32_0 : i32, i32, i32
  }
  func.func @transform_3(%arg0: i32) -> (i32, i32, i32) {
    %c0_i32 = arith.constant 0 : i32
    %c0_i32_0 = arith.constant 0 : i32
    %c0_i32_1 = arith.constant 0 : i32
    return %arg0, %c0_i32, %c0_i32_0 : i32, i32, i32
  }
}

module attributes {stable_mosaic.version = 11 : i64} {
  func.func @_linear_kernel(%arg0: i32, %arg1: i32, %arg2: i32, %arg3: memref<8x128xf32, #tpu.memory_space<vmem>>, %arg4: memref<128x128xbf16, #tpu.memory_space<vmem>>, %arg5: memref<1x128xf32, #tpu.memory_space<vmem>>, %arg6: memref<8x128xf32, #tpu.memory_space<vmem>>, %arg7: memref<8x128xf32, #tpu.memory_space<vmem>>) attributes {dimension_semantics = [#tpu.dimension_semantics<parallel>, #tpu.dimension_semantics<parallel>, #tpu.dimension_semantics<arbitrary>], iteration_bounds = array<i64: 2, 1, 1>, scalar_prefetch = 0 : i64, scratch_operands = 1 : i64, tpu.core_type = #tpu.core_type<tc>, window_params = [{transform_indices = @transform_0, window_bounds = array<i64: 8, 128>}, {transform_indices = @transform_1, window_bounds = array<i64: 128, 128>}, {transform_indices = @transform_2, window_bounds = array<i64: 1, 128>}, {transform_indices = @transform_3, window_bounds = array<i64: 8, 128>}]} {
    %c0_i32 = arith.constant 0 : i32
    %0 = arith.cmpi eq, %arg2, %c0_i32 : i32
    %1 = arith.extui %0 : i1 to i32
    %c0_i32_0 = arith.constant 0 : i32
    %2 = arith.cmpi ne, %1, %c0_i32_0 : i32
    scf.if %2 {
      %cst_10 = arith.constant 0.000000e+00 : f32
      %13 = vector.broadcast %cst_10 : f32 to vector<8x128xf32>
      %c0_11 = arith.constant 0 : index
      %c0_12 = arith.constant 0 : index
      %14 = vector.load %arg7[%c0_11, %c0_12] : memref<8x128xf32, #tpu.memory_space<vmem>>, vector<8x128xf32>
      tpu.vector_store %arg7[%c0_11, %c0_12], %13 {strides = array<i32>} : memref<8x128xf32, #tpu.memory_space<vmem>>, vector<8x128xf32>,
    } else {
    }
    %c0 = arith.constant 0 : index
    %c0_1 = arith.constant 0 : index
    %3 = vector.load %arg3[%c0, %c0_1] : memref<8x128xf32, #tpu.memory_space<vmem>>, vector<8x128xf32>
    %c0_2 = arith.constant 0 : index
    %c0_3 = arith.constant 0 : index
    %4 = vector.load %arg7[%c0_2, %c0_3] : memref<8x128xf32, #tpu.memory_space<vmem>>, vector<8x128xf32>
    %5 = arith.truncf %3 : vector<8x128xf32> to vector<8x128xbf16>
    %c0_4 = arith.constant 0 : index
    %c0_5 = arith.constant 0 : index
    %6 = vector.load %arg4[%c0_4, %c0_5] : memref<128x128xbf16, #tpu.memory_space<vmem>>, vector<128x128xbf16>
    %cst = arith.constant dense<0.000000e+00> : vector<8x128xf32>
    %7 = tpu.matmul %5, %6, %cst {dimension_numbers = #tpu.dot_dimension_numbers<[1], [0], [0], [1], [0, 0, 1, 1], [], []>} : vector<8x128xbf16>, vector<128x128xbf16>, vector<8x128xf32> -> vector<8x128xf32>
    %8 = arith.addf %4, %7 : vector<8x128xf32>
    %c0_6 = arith.constant 0 : index
    %c0_7 = arith.constant 0 : index
    %9 = vector.load %arg7[%c0_6, %c0_7] : memref<8x128xf32, #tpu.memory_space<vmem>>, vector<8x128xf32>
    tpu.vector_store %arg7[%c0_6, %c0_7], %8 {strides = array<i32>} : memref<8x128xf32, #tpu.memory_space<vmem>>, vector<8x128xf32>,
    %c0_i32_8 = arith.constant 0 : i32
    %10 = arith.cmpi eq, %arg2, %c0_i32_8 : i32
    %11 = arith.extui %10 : i1 to i32
    %c0_i32_9 = arith.constant 0 : i32
    %12 = arith.cmpi ne, %11, %c0_i32_9 : i32
    scf.if %12 {
      %c0_10 = arith.constant 0 : index
      %c0_11 = arith.constant 0 : index
      %13 = vector.load %arg7[%c0_10, %c0_11] : memref<8x128xf32, #tpu.memory_space<vmem>>, vector<8x128xf32>
      %c0_12 = arith.constant 0 : index
      %c0_13 = arith.constant 0 : index
      %14 = vector.load %arg5[%c0_12, %c0_13] : memref<1x128xf32, #tpu.memory_space<vmem>>, vector<1x128xf32>
      %15 = vector.broadcast %14 : vector<1x128xf32> to vector<8x128xf32>
      %16 = arith.addf %13, %15 : vector<8x128xf32>
      %c0_14 = arith.constant 0 : index
      %c0_15 = arith.constant 0 : index
      %17 = vector.load %arg6[%c0_14, %c0_15] : memref<8x128xf32, #tpu.memory_space<vmem>>, vector<8x128xf32>
      tpu.vector_store %arg6[%c0_14, %c0_15], %16 {strides = array<i32>} : memref<8x128xf32, #tpu.memory_space<vmem>>, vector<8x128xf32>,
    } else {
    }
    return
  }
  func.func @transform_0(%arg0: i32, %arg1: i32, %arg2: i32) -> (i32, i32) {
    %c0_i32 = arith.constant 0 : i32
    return %arg0, %arg2 : i32, i32
  }
  func.func @transform_1(%arg0: i32, %arg1: i32, %arg2: i32) -> (i32, i32) {
    %c0_i32 = arith.constant 0 : i32
    return %arg2, %arg1 : i32, i32
  }
  func.func @transform_2(%arg0: i32, %arg1: i32, %arg2: i32) -> (i32, i32) {
    %c0_i32 = arith.constant 0 : i32
    %c0_i32_0 = arith.constant 0 : i32
    return %c0_i32, %arg1 : i32, i32
  }
  func.func @transform_3(%arg0: i32, %arg1: i32, %arg2: i32) -> (i32, i32) {
    %c0_i32 = arith.constant 0 : i32
    return %arg0, %arg1 : i32, i32
  }
}

module attributes {stable_mosaic.version = 11 : i64} {
  func.func @_linear_kernel(%arg0: i32, %arg1: i32, %arg2: i32, %arg3: memref<8x128xf32, #tpu.memory_space<vmem>>, %arg4: memref<128x128xbf16, #tpu.memory_space<vmem>>, %arg5: memref<1x128xf32, #tpu.memory_space<vmem>>, %arg6: memref<1x128xf32, #tpu.memory_space<vmem>>, %arg7: memref<1x128xf32, #tpu.memory_space<vmem>>, %arg8: memref<8x128xf32, #tpu.memory_space<vmem>>, %arg9: memref<8x128xf32, #tpu.memory_space<vmem>>) attributes {dimension_semantics = [#tpu.dimension_semantics<parallel>, #tpu.dimension_semantics<parallel>, #tpu.dimension_semantics<arbitrary>], iteration_bounds = array<i64: 2, 1, 1>, scalar_prefetch = 0 : i64, scratch_operands = 1 : i64, tpu.core_type = #tpu.core_type<tc>, window_params = [{transform_indices = @transform_0, window_bounds = array<i64: 8, 128>}, {transform_indices = @transform_1, window_bounds = array<i64: 128, 128>}, {transform_indices = @transform_2, window_bounds = array<i64: 1, 128>}, {transform_indices = @transform_3, window_bounds = array<i64: 1, 128>}, {transform_indices = @transform_4, window_bounds = array<i64: 1, 128>}, {transform_indices = @transform_5, window_bounds = array<i64: 8, 128>}]} {
    %c0_i32 = arith.constant 0 : i32
    %0 = arith.cmpi eq, %arg2, %c0_i32 : i32
    %1 = arith.extui %0 : i1 to i32
    %c0_i32_0 = arith.constant 0 : i32
    %2 = arith.cmpi ne, %1, %c0_i32_0 : i32
    scf.if %2 {
      %cst_19 = arith.constant 0.000000e+00 : f32
      %35 = vector.broadcast %cst_19 : f32 to vector<8x128xf32>
      %c0_20 = arith.constant 0 : index
      %c0_21 = arith.constant 0 : index
      %36 = vector.load %arg9[%c0_20, %c0_21] : memref<8x128xf32, #tpu.memory_space<vmem>>, vector<8x128xf32>
      tpu.vector_store %arg9[%c0_20, %c0_21], %35 {strides = array<i32>} : memref<8x128xf32, #tpu.memory_space<vmem>>, vector<8x128xf32>,
    } else {
    }
    %c0 = arith.constant 0 : index
    %c0_1 = arith.constant 0 : index
    %3 = vector.load %arg3[%c0, %c0_1] : memref<8x128xf32, #tpu.memory_space<vmem>>, vector<8x128xf32>
    %c0_2 = arith.constant 0 : index
    %c0_3 = arith.constant 0 : index
    %4 = vector.load %arg6[%c0_2, %c0_3] : memref<1x128xf32, #tpu.memory_space<vmem>>, vector<1x128xf32>
    %c0_4 = arith.constant 0 : index
    %c0_5 = arith.constant 0 : index
    %5 = vector.load %arg7[%c0_4, %c0_5] : memref<1x128xf32, #tpu.memory_space<vmem>>, vector<1x128xf32>
    %cst = arith.constant dense<0.000000e+00> : vector<8xf32>
    %6 = vector.multi_reduction <add>, %3, %cst [1] : vector<8x128xf32> to vector<8xf32>
    %7 = vector.shape_cast %6 : vector<8xf32> to vector<8x1xf32>
    %cst_6 = arith.constant 1.280000e+02 : f32
    %8 = vector.broadcast %cst_6 : f32 to vector<8x1xf32>
    %9 = arith.divf %7, %8 : vector<8x1xf32>
    %10 = vector.broadcast %9 : vector<8x1xf32> to vector<8x128xf32>
    %11 = arith.subf %3, %10 : vector<8x128xf32>
    %12 = arith.mulf %11, %11 : vector<8x128xf32>
    %cst_7 = arith.constant dense<0.000000e+00> : vector<8xf32>
    %13 = vector.multi_reduction <add>, %12, %cst_7 [1] : vector<8x128xf32> to vector<8xf32>
    %14 = vector.shape_cast %13 : vector<8xf32> to vector<8x1xf32>
    %cst_8 = arith.constant 1.280000e+02 : f32
    %15 = vector.broadcast %cst_8 : f32 to vector<8x1xf32>
    %16 = arith.divf %14, %15 : vector<8x1xf32>
    %cst_9 = arith.constant 9.99999974E-6 : f32
    %17 = vector.broadcast %cst_9 : f32 to vector<8x1xf32>
    %18 = arith.addf %16, %17 : vector<8x1xf32>
    %19 = math.rsqrt %18 : vector<8x1xf32>
    %20 = vector.broadcast %19 : vector<8x1xf32> to vector<8x128xf32>
    %21 = arith.mulf %11, %20 : vector<8x128xf32>
    %22 = vector.broadcast %4 : vector<1x128xf32> to vector<8x128xf32>
    %23 = arith.mulf %21, %22 : vector<8x128xf32>
    %24 = vector.broadcast %5 : vector<1x128xf32> to vector<8x128xf32>
    %25 = arith.addf %23, %24 : vector<8x128xf32>
    %c0_10 = arith.constant 0 : index
    %c0_11 = arith.constant 0 : index
    %26 = vector.load %arg9[%c0_10, %c0_11] : memref<8x128xf32, #tpu.memory_space<vmem>>, vector<8x128xf32>
    %27 = arith.truncf %25 : vector<8x128xf32> to vector<8x128xbf16>
    %c0_12 = arith.constant 0 : index
    %c0_13 = arith.constant 0 : index
    %28 = vector.load %arg4[%c0_12, %c0_13] : memref<128x128xbf16, #tpu.memory_space<vmem>>, vector<128x128xbf16>
    %cst_14 = arith.constant dense<0.000000e+00> : vector<8x128xf32>
    %29 = tpu.matmul %27, %28, %cst_14 {dimension_numbers = #tpu.dot_dimension_numbers<[1], [0], [0], [1], [0, 0, 1, 1], [], []>} : vector<8x128xbf16>, vector<128x128xbf16>, vector<8x128xf32> -> vector<8x128xf32>
    %30 = arith.addf %26, %29 : vector<8x128xf32>
    %c0_15 = arith.constant 0 : index
    %c0_16 = arith.constant 0 : index
    %31 = vector.load %arg9[%c0_15, %c0_16] : memref<8x128xf32, #tpu.memory_space<vmem>>, vector<8x128xf32>
    tpu.vector_store %arg9[%c0_15, %c0_16], %30 {strides = array<i32>} : memref<8x128xf32, #tpu.memory_space<vmem>>, vector<8x128xf32>,
    %c0_i32_17 = arith.constant 0 : i32
    %32 = arith.cmpi eq, %arg2, %c0_i32_17 : i32
    %33 = arith.extui %32 : i1 to i32
    %c0_i32_18 = arith.constant 0 : i32
    %34 = arith.cmpi ne, %33, %c0_i32_18 : i32
    scf.if %34 {
      %c0_19 = arith.constant 0 : index
      %c0_20 = arith.constant 0 : index
      %35 = vector.load %arg9[%c0_19, %c0_20] : memref<8x128xf32, #tpu.memory_space<vmem>>, vector<8x128xf32>
      %c0_21 = arith.constant 0 : index
      %c0_22 = arith.constant 0 : index
      %36 = vector.load %arg5[%c0_21, %c0_22] : memref<1x128xf32, #tpu.memory_space<vmem>>, vector<1x128xf32>
      %37 = vector.broadcast %36 : vector<1x128xf32> to vector<8x128xf32>
      %38 = arith.addf %35, %37 : vector<8x128xf32>
      %c0_23 = arith.constant 0 : index
      %c0_24 = arith.constant 0 : index
      %39 = vector.load %arg8[%c0_23, %c0_24] : memref<8x128xf32, #tpu.memory_space<vmem>>, vector<8x128xf32>
      tpu.vector_store %arg8[%c0_23, %c0_24], %38 {strides = array<i32>} : memref<8x128xf32, #tpu.memory_space<vmem>>, vector<8x128xf32>,
    } else {
    }
    return
  }
  func.func @transform_0(%arg0: i32, %arg1: i32, %arg2: i32) -> (i32, i32) {
    %c0_i32 = arith.constant 0 : i32
    return %arg0, %arg2 : i32, i32
  }
  func.func @transform_1(%arg0: i32, %arg1: i32, %arg2: i32) -> (i32, i32) {
    %c0_i32 = arith.constant 0 : i32
    return %arg2, %arg1 : i32, i32
  }
  func.func @transform_2(%arg0: i32, %arg1: i32, %arg2: i32) -> (i32, i32) {
    %c0_i32 = arith.constant 0 : i32
    %c0_i32_0 = arith.constant 0 : i32
    return %c0_i32, %arg1 : i32, i32
  }
  func.func @transform_3(%arg0: i32, %arg1: i32, %arg2: i32) -> (i32, i32) {
    %c0_i32 = arith.constant 0 : i32
    %c0_i32_0 = arith.constant 0 : i32
    return %c0_i32, %arg2 : i32, i32
  }
  func.func @transform_4(%arg0: i32, %arg1: i32, %arg2: i32) -> (i32, i32) {
    %c0_i32 = arith.constant 0 : i32
    %c0_i32_0 = arith.constant 0 : i32
    return %c0_i32, %arg2 : i32, i32
  }
  func.func @transform_5(%arg0: i32, %arg1: i32, %arg2: i32) -> (i32, i32) {
    %c0_i32 = arith.constant 0 : i32
    return %arg0, %arg1 : i32, i32
  }
}

</mosaic_0001>

<llo_original>
// kernel: transformer_forward.28
$region0: #{transformer_forward.28}
  #allocation0 [shape = 'u32[]', space=smem, size = 0x4, offset = 0x4, fixed_abs, tag = 'smem constant byte address 0x4 - core index']
  #allocation1 [shape = 'u32[72,128]{1,0:T(1,128)}', space=vmem, size = 0x9000, scoped, tag = 'internal scratch']
  %s0 = inlined_call_operand.vmem [shape: f32[2,8,128], index: 0, kind: input, shape index: {}]
  %s1 = inlined_call_operand.vmem [shape: f32[8,128], index: 1, kind: input, shape index: {}]
  %s2 = inlined_call_operand.vmem [shape: f32[2,8,128], index: 2, kind: output, shape index: {}]
  %s3 = sld [smem:[#allocation0]]
  $region41: #{transformer_forward.28} parent=0
    _
  %s5 = ssub.s32 1, %s3
  %s6 = scalar_select 0, %s5, %s3
  loop: start=0, step=1, limit=4
  $region2: #{transformer_forward.28} parent=0 // loop_pre_header
    _
  $region3: #{transformer_forward.28} parent=0 // loop_header
    %s8 = sphi 0, %s12
    %p9 = scmp.ge.s32.totalorder %s8, 4
    %s18 = sphi 0, %s20
    %s21 = sphi 0, %s18
    %s22 = sphi 0, %s21
    %s38 = sphi 0, %s22
    %s42 = sphi 0, %s42
    %s44 = sphi 0, %s42
    %s45 = sphi 0, %s44
    %s59 = sphi 0, %s45
    %s65 = sphi 0, %s67
    %s68 = sphi 0, %s65
    %s69 = sphi 0, %s68
    %s85 = sphi 0, %s69
  $region4: #{transformer_forward.28} parent=0 // loop_header_branch
    %11 = sbr.rel (%p9) target = $region8
  $region5: #{transformer_forward.28} parent=0 // loop_body
    %s13 = ssub.s32 %s8, 1
    %s14 = ssub.s32 %s8, 2
    %s15 = sadd.s32 %s8, 1
    %s16 = ssub.s32 %s8, %s15
    %p17 = scmp.eq.s32.totalorder %s16, 0
    %s19 = sadd.s32 %s18, 1
    %s20 = scalar_select %p17, %s18, %s19
    %p23 = pneg %p17
    %p24 = scmp.eq.s32.totalorder %s8, 1
    %p25 = por %p23, %p24
    %p26 = scmp.ne.s32.totalorder %s18, %s21
    %p27 = scmp.eq.s32.totalorder %s8, 0
    %p28 = por %p26, %p27
    %p29 = scmp.ne.s32.totalorder %s18, %s21
    %p30 = scmp.eq.s32.totalorder %s13, 1
    %p31 = por %p29, %p30
    %p32 = scmp.ne.s32.totalorder %s21, %s22
    %p33 = scmp.eq.s32.totalorder %s13, 0
    %p34 = por %p32, %p33
    %p35 = scmp.ne.s32.totalorder %s21, %s22
    %p36 = scmp.eq.s32.totalorder %s14, 1
    %p37 = por %p35, %p36
    %p39 = scmp.ne.s32.totalorder %s22, %s38
    %p40 = scmp.eq.s32.totalorder %s14, 0
    %p41 = por %p39, %p40
    %s43 = sadd.s32 %s42, 1
    %p46 = scmp.eq.s32.totalorder %s8, 1
    %p47 = scmp.ne.s32.totalorder %s42, %s44
    %p48 = scmp.eq.s32.totalorder %s8, 0
    %p49 = por %p47, %p48
    %p50 = scmp.ne.s32.totalorder %s42, %s44
    %p51 = scmp.eq.s32.totalorder %s13, 1
    %p52 = por %p50, %p51
    %p53 = scmp.ne.s32.totalorder %s44, %s45
    %p54 = scmp.eq.s32.totalorder %s13, 0
    %p55 = por %p53, %p54
    %p56 = scmp.ne.s32.totalorder %s44, %s45
    %p57 = scmp.eq.s32.totalorder %s14, 1
    %p58 = por %p56, %p57
    %p60 = scmp.ne.s32.totalorder %s45, %s59
    %p61 = scmp.eq.s32.totalorder %s14, 0
    %p62 = por %p60, %p61
    %s63 = ssub.s32 %s8, %s15
    %p64 = scmp.eq.s32.totalorder %s63, 0
    %s66 = sadd.s32 %s65, 1
    %s67 = scalar_select %p64, %s65, %s66
    %p70 = pneg %p64
    %p71 = scmp.eq.s32.totalorder %s8, 1
    %p72 = por %p70, %p71
    %p73 = scmp.ne.s32.totalorder %s65, %s68
    %p74 = scmp.eq.s32.totalorder %s8, 0
    %p75 = por %p73, %p74
    %p76 = scmp.ne.s32.totalorder %s65, %s68
    %p77 = scmp.eq.s32.totalorder %s13, 1
    %p78 = por %p76, %p77
    %p79 = scmp.ne.s32.totalorder %s68, %s69
    %p80 = scmp.eq.s32.totalorder %s13, 0
    %p81 = por %p79, %p80
    %p82 = scmp.ne.s32.totalorder %s68, %s69
    %p83 = scmp.eq.s32.totalorder %s14, 1
    %p84 = por %p82, %p83
    %p86 = scmp.ne.s32.totalorder %s69, %s85
    %p87 = scmp.eq.s32.totalorder %s14, 0
    %p88 = por %p86, %p87
    %p89 = scmp.le.s32.totalorder 1, %s8
    %p90 = scmp.lt.s32.totalorder %s8, 3
    %p91 = pnand %p89, %p90
    %p92 = pneg %p91
    // Predicated region
    $region9: #{transformer_forward.28} parent=5 // pred_check
      _
    $region10: #{transformer_forward.28} parent=5 // pred_check_branch
      %94 = sbr.rel (%p91) target = $region12
    $region11: #{transformer_forward.28} parent=5 // pred_region
      %s95 = ssub.s32 %s8, 1
      // Predicated region
      $region13: #{transformer_forward.28} parent=11 // pred_check
        %p96 = pneg %p55
      $region14: #{transformer_forward.28} parent=11 // pred_check_branch
        %98 = sbr.rel (%p96) target = $region16
      $region15: #{transformer_forward.28} parent=11 // pred_region
        _
      $region16: #{transformer_forward.28} parent=11 // pred_fallthru
        _
    $region12: #{transformer_forward.28} parent=5 // pred_fallthru
      _
    %p99 = scmp.lt.s32.totalorder %s8, 2
    // Predicated region
    $region17: #{transformer_forward.28} parent=5 // pred_check
      %p100 = pneg %p99
    $region18: #{transformer_forward.28} parent=5 // pred_check_branch
      %102 = sbr.rel (%p100) target = $region20
    $region19: #{transformer_forward.28} parent=5 // pred_region
      // Predicated region
      $region21: #{transformer_forward.28} parent=19 // pred_check
        %p103 = pneg %p28
      $region22: #{transformer_forward.28} parent=19 // pred_check_branch
        %105 = sbr.rel (%p103) target = $region24
      $region23: #{transformer_forward.28} parent=19 // pred_region
        %p106 = scmp.lt.s32.totalorder %s8, 1
        %s107 = scalar_select %p106, %s8, 1
        %s108 = smul.addr %s107, 8
        %s109 = scalar_lea.vmem %s0, %s108
      $region24: #{transformer_forward.28} parent=19 // pred_fallthru
        _
    $region20: #{transformer_forward.28} parent=5 // pred_fallthru
      _
    %p110 = scmp.le.s32.totalorder 1, %s8
    %p111 = scmp.lt.s32.totalorder %s8, 3
    %p112 = pnand %p110, %p111
    %p113 = pneg %p112
    // Predicated region
    $region25: #{transformer_forward.28} parent=5 // pred_check
      _
    $region26: #{transformer_forward.28} parent=5 // pred_check_branch
      %115 = sbr.rel (%p112) target = $region28
    $region27: #{transformer_forward.28} parent=5 // pred_region
      %s116 = ssub.s32 %s8, 1
      %p117 = scmp.lt.s32.totalorder %s13, 1
      %s118 = scalar_select %p117, %s13, 1
      %s119 = smul.addr %s118, 8
      %s120 = scalar_lea.vmem %s0, %s119
      %p121 = pneg %p34
      %p122 = pneg %p31
      %p123 = pneg %p55
      %p124 = pneg %p52
      %p125 = pneg %p81
      %p126 = pneg %p78
      %p127 = scmp.lt.s32.totalorder %s13, 1
      %s128 = scalar_select %p127, %s13, 1
      %s129 = smul.addr %s128, 8
      %s130 = scalar_lea.vmem %s2, %s129
      %p131 = scmp.lt.s32.totalorder %s13, 1
      %s132 = scalar_select %p131, %s13, 1
      %s133 = smul.addr %s132, 8
      %s134 = scalar_lea.vmem %s0, %s133
      %p135 = scmp.lt.s32.totalorder %s13, 1
      %s136 = scalar_select %p135, %s13, 1
      %s137 = smul.addr %s136, 8
      %s138 = scalar_lea.vmem %s2, %s137
      %v139 = vld [vmem:[%s134] sm:$0xff]
      %v140 = vmul.f32 %v139, 11.313708
      %v141 = vld [vmem:[%s1] sm:$0xff]
      %v142 = vadd.f32 %v140, %v141
      %143 = vst [vmem:[%s138] sm:$0xff] %v142
      %p144 = scmp.lt.s32.totalorder %s13, 1
      %s145 = scalar_select %p144, %s13, 1
      %s146 = smul.addr %s145, 8
      %s147 = scalar_lea.vmem %s2, %s146
      // Predicated region
      $region29: #{transformer_forward.28} parent=27 // pred_check
        %p148 = pneg %p78
      $region30: #{transformer_forward.28} parent=27 // pred_check_branch
        %150 = sbr.rel (%p148) target = $region32
      $region31: #{transformer_forward.28} parent=27 // pred_region
        _
      $region32: #{transformer_forward.28} parent=27 // pred_fallthru
        _
    $region28: #{transformer_forward.28} parent=5 // pred_fallthru
      _
    %p151 = scmp.le.s32.totalorder 2, %s8
    // Predicated region
    $region33: #{transformer_forward.28} parent=5 // pred_check
      %p152 = pneg %p151
    $region34: #{transformer_forward.28} parent=5 // pred_check_branch
      %154 = sbr.rel (%p152) target = $region36
    $region35: #{transformer_forward.28} parent=5 // pred_region
      %s155 = ssub.s32 %s8, 2
      // Predicated region
      $region37: #{transformer_forward.28} parent=35 // pred_check
        %p156 = pneg %p84
      $region38: #{transformer_forward.28} parent=35 // pred_check_branch
        %158 = sbr.rel (%p156) target = $region40
      $region39: #{transformer_forward.28} parent=35 // pred_region
        %p159 = scmp.lt.s32.totalorder %s14, 1
        %s160 = scalar_select %p159, %s14, 1
        %s161 = smul.addr %s160, 8
        %s162 = scalar_lea.vmem %s2, %s161
      $region40: #{transformer_forward.28} parent=35 // pred_fallthru
        _
    $region36: #{transformer_forward.28} parent=5 // pred_fallthru
      _
  $region6: #{transformer_forward.28} parent=0 // loop_footer
    %s12 = sadd.s32 1, %s8
  $region7: #{transformer_forward.28} parent=0 // loop_footer_branch
    %7 = sbr.rel target = $region3
  $region8: #{transformer_forward.28} parent=0 // loop_exit
    _

// kernel: transformer_forward.30
$region0: #{transformer_forward.30}
  #allocation0 [shape = 'u32[]', space=smem, size = 0x4, offset = 0x4, fixed_abs, tag = 'smem constant byte address 0x4 - core index']
  #allocation1 [shape = 'u32[72,128]{1,0:T(1,128)}', space=vmem, size = 0x9000, scoped, tag = 'internal scratch']
  #allocation2 [shape = 'f32[8,384]{1,0:T(8,128)}', space=vmem, size = 0x3000, scoped, tag = 'scratch operand']
  %s0 = inlined_call_operand.vmem [shape: f32[16,128], index: 0, kind: input, shape index: {}]
  %s1 = inlined_call_operand.vmem [shape: bf16[128,384], index: 1, kind: input, shape index: {}]
  %s2 = inlined_call_operand.vmem [shape: f32[1,384], index: 2, kind: input, shape index: {}]
  %s3 = inlined_call_operand.vmem [shape: f32[16,384], index: 3, kind: output, shape index: {}]
  %s4 = sld [smem:[#allocation0]]
  $region53: #{transformer_forward.30} parent=0
    _
  %s6 = ssub.s32 1, %s4
  %s7 = scalar_select 0, %s6, %s4
  loop: start=0, step=1, limit=4
  $region2: #{transformer_forward.30} parent=0 // loop_pre_header
    _
  $region3: #{transformer_forward.30} parent=0 // loop_header
    %s9 = sphi 0, %s13
    %p10 = scmp.ge.s32.totalorder %s9, 4
    %s16 = sphi 0, %s35
    %s17 = sphi 0, %s31
    %s18 = sphi 0, %s27
    %s19 = sphi 0, %s16
    %s20 = sphi 0, %s17
    %s21 = sphi 0, %s18
    %s22 = sphi 0, %s19
    %s23 = sphi 0, %s20
    %s24 = sphi 0, %s21
    %s40 = sphi 0, %s42
    %s43 = sphi 0, %s40
    %s44 = sphi 0, %s43
    %s60 = sphi 0, %s44
    %s68 = sphi 0, %s70
    %s71 = sphi 0, %s68
    %s72 = sphi 0, %s71
    %s88 = sphi 0, %s72
    %s94 = sphi 0, %s96
    %s97 = sphi 0, %s94
    %s98 = sphi 0, %s97
    %s114 = sphi 0, %s98
    %s122 = sphi 0, %s124
    %s125 = sphi 0, %s122
    %s126 = sphi 0, %s125
    %s142 = sphi 0, %s126
  $region4: #{transformer_forward.30} parent=0 // loop_header_branch
    %12 = sbr.rel (%p10) target = $region8
  $region5: #{transformer_forward.30} parent=0 // loop_body
    %s14 = ssub.s32 %s9, 1
    %s15 = ssub.s32 %s9, 2
    %s25 = sadd.s32 1, %s18
    %p26 = scmp.ge.s32.totalorder %s25, 1
    %s27 = scalar_select %p26, 0, %s25
    %s28 = sadd.s32 1, %s17
    %s29 = scalar_select %p26, %s28, %s17
    %p30 = scmp.ge.s32.totalorder %s29, 1
    %s31 = scalar_select %p30, 0, %s29
    %s32 = sadd.s32 1, %s16
    %s33 = scalar_select %p30, %s32, %s16
    %p34 = scmp.ge.s32.totalorder %s33, 2
    %s35 = scalar_select %p34, 0, %s33
    %s36 = ssub.s32 %s16, %s35
    %s37 = ssub.s32 %s18, %s27
    %s38 = sor.u32 %s36, %s37
    %p39 = scmp.eq.s32.totalorder %s38, 0
    %s41 = sadd.s32 %s40, 1
    %s42 = scalar_select %p39, %s40, %s41
    %p45 = pneg %p39
    %p46 = scmp.eq.s32.totalorder %s9, 1
    %p47 = por %p45, %p46
    %p48 = scmp.ne.s32.totalorder %s40, %s43
    %p49 = scmp.eq.s32.totalorder %s9, 0
    %p50 = por %p48, %p49
    %p51 = scmp.ne.s32.totalorder %s40, %s43
    %p52 = scmp.eq.s32.totalorder %s14, 1
    %p53 = por %p51, %p52
    %p54 = scmp.ne.s32.totalorder %s43, %s44
    %p55 = scmp.eq.s32.totalorder %s14, 0
    %p56 = por %p54, %p55
    %p57 = scmp.ne.s32.totalorder %s43, %s44
    %p58 = scmp.eq.s32.totalorder %s15, 1
    %p59 = por %p57, %p58
    %p61 = scmp.ne.s32.totalorder %s44, %s60
    %p62 = scmp.eq.s32.totalorder %s15, 0
    %p63 = por %p61, %p62
    %s64 = ssub.s32 %s18, %s27
    %s65 = ssub.s32 %s17, %s31
    %s66 = sor.u32 %s64, %s65
    %p67 = scmp.eq.s32.totalorder %s66, 0
    %s69 = sadd.s32 %s68, 1
    %s70 = scalar_select %p67, %s68, %s69
    %p73 = pneg %p67
    %p74 = scmp.eq.s32.totalorder %s9, 1
    %p75 = por %p73, %p74
    %p76 = scmp.ne.s32.totalorder %s68, %s71
    %p77 = scmp.eq.s32.totalorder %s9, 0
    %p78 = por %p76, %p77
    %p79 = scmp.ne.s32.totalorder %s68, %s71
    %p80 = scmp.eq.s32.totalorder %s14, 1
    %p81 = por %p79, %p80
    %p82 = scmp.ne.s32.totalorder %s71, %s72
    %p83 = scmp.eq.s32.totalorder %s14, 0
    %p84 = por %p82, %p83
    %p85 = scmp.ne.s32.totalorder %s71, %s72
    %p86 = scmp.eq.s32.totalorder %s15, 1
    %p87 = por %p85, %p86
    %p89 = scmp.ne.s32.totalorder %s72, %s88
    %p90 = scmp.eq.s32.totalorder %s15, 0
    %p91 = por %p89, %p90
    %s92 = ssub.s32 %s17, %s31
    %p93 = scmp.eq.s32.totalorder %s92, 0
    %s95 = sadd.s32 %s94, 1
    %s96 = scalar_select %p93, %s94, %s95
    %p99 = pneg %p93
    %p100 = scmp.eq.s32.totalorder %s9, 1
    %p101 = por %p99, %p100
    %p102 = scmp.ne.s32.totalorder %s94, %s97
    %p103 = scmp.eq.s32.totalorder %s9, 0
    %p104 = por %p102, %p103
    %p105 = scmp.ne.s32.totalorder %s94, %s97
    %p106 = scmp.eq.s32.totalorder %s14, 1
    %p107 = por %p105, %p106
    %p108 = scmp.ne.s32.totalorder %s97, %s98
    %p109 = scmp.eq.s32.totalorder %s14, 0
    %p110 = por %p108, %p109
    %p111 = scmp.ne.s32.totalorder %s97, %s98
    %p112 = scmp.eq.s32.totalorder %s15, 1
    %p113 = por %p111, %p112
    %p115 = scmp.ne.s32.totalorder %s98, %s114
    %p116 = scmp.eq.s32.totalorder %s15, 0
    %p117 = por %p115, %p116
    %s118 = ssub.s32 %s16, %s35
    %s119 = ssub.s32 %s17, %s31
    %s120 = sor.u32 %s118, %s119
    %p121 = scmp.eq.s32.totalorder %s120, 0
    %s123 = sadd.s32 %s122, 1
    %s124 = scalar_select %p121, %s122, %s123
    %p127 = pneg %p121
    %p128 = scmp.eq.s32.totalorder %s9, 1
    %p129 = por %p127, %p128
    %p130 = scmp.ne.s32.totalorder %s122, %s125
    %p131 = scmp.eq.s32.totalorder %s9, 0
    %p132 = por %p130, %p131
    %p133 = scmp.ne.s32.totalorder %s122, %s125
    %p134 = scmp.eq.s32.totalorder %s14, 1
    %p135 = por %p133, %p134
    %p136 = scmp.ne.s32.totalorder %s125, %s126
    %p137 = scmp.eq.s32.totalorder %s14, 0
    %p138 = por %p136, %p137
    %p139 = scmp.ne.s32.totalorder %s125, %s126
    %p140 = scmp.eq.s32.totalorder %s15, 1
    %p141 = por %p139, %p140
    %p143 = scmp.ne.s32.totalorder %s126, %s142
    %p144 = scmp.eq.s32.totalorder %s15, 0
    %p145 = por %p143, %p144
    %p146 = scmp.le.s32.totalorder 1, %s9
    %p147 = scmp.lt.s32.totalorder %s9, 3
    %p148 = pnand %p146, %p147
    %p149 = pneg %p148
    // Predicated region
    $region9: #{transformer_forward.30} parent=5 // pred_check
      _
    $region10: #{transformer_forward.30} parent=5 // pred_check_branch
      %151 = sbr.rel (%p148) target = $region12
    $region11: #{transformer_forward.30} parent=5 // pred_region
      %s152 = ssub.s32 %s9, 1
      // Predicated region
      $region13: #{transformer_forward.30} parent=11 // pred_check
        %p153 = pneg %p84
      $region14: #{transformer_forward.30} parent=11 // pred_check_branch
        %155 = sbr.rel (%p153) target = $region16
      $region15: #{transformer_forward.30} parent=11 // pred_region
        %s156 = smul.u32 16, %s21
        %s157 = smul.u32 3, %s20
        %p158 = scmp.lt.s32.totalorder %s156, 15
        %s159 = scalar_select %p158, %s156, 15
        %p160 = scmp.lt.s32.totalorder %s157, 2
        %s161 = scalar_select %p160, %s157, 2
        %s162 = smul.addr %s159, 3
        %s163 = sadd.s32 %s161, %s162
        %s164 = smul.addr %s163, 4
        %s165 = scalar_lea.vmem %s1, %s164
        %s166 = smul.u32 16, %s21
        %s167 = smul.u32 3, %s20
      $region16: #{transformer_forward.30} parent=11 // pred_fallthru
        _
      // Predicated region
      $region17: #{transformer_forward.30} parent=11 // pred_check
        %p168 = pneg %p110
      $region18: #{transformer_forward.30} parent=11 // pred_check_branch
        %170 = sbr.rel (%p168) target = $region20
      $region19: #{transformer_forward.30} parent=11 // pred_region
        %s171 = smul.u32 3, %s20
        %p172 = scmp.lt.s32.totalorder %s171, 2
        %s173 = scalar_select %p172, %s171, 2
        %s174 = scalar_lea.vmem %s2, %s173
        %s175 = smul.u32 3, %s20
      $region20: #{transformer_forward.30} parent=11 // pred_fallthru
        _
    $region12: #{transformer_forward.30} parent=5 // pred_fallthru
      _
    %p176 = scmp.lt.s32.totalorder %s9, 2
    // Predicated region
    $region21: #{transformer_forward.30} parent=5 // pred_check
      %p177 = pneg %p176
    $region22: #{transformer_forward.30} parent=5 // pred_check_branch
      %179 = sbr.rel (%p177) target = $region24
    $region23: #{transformer_forward.30} parent=5 // pred_region
      // Predicated region
      $region25: #{transformer_forward.30} parent=23 // pred_check
        %p180 = pneg %p50
      $region26: #{transformer_forward.30} parent=23 // pred_check_branch
        %182 = sbr.rel (%p180) target = $region28
      $region27: #{transformer_forward.30} parent=23 // pred_region
        %p183 = scmp.lt.s32.totalorder %s16, 1
        %s184 = scalar_select %p183, %s16, 1
        %p185 = scmp.lt.s32.totalorder %s18, 0
        %s186 = scalar_select %p185, %s18, 0
        %s187 = sadd.s32 %s186, %s184
        %s188 = smul.addr %s187, 8
        %s189 = scalar_lea.vmem %s0, %s188
      $region28: #{transformer_forward.30} parent=23 // pred_fallthru
        _
    $region24: #{transformer_forward.30} parent=5 // pred_fallthru
      _
    %p190 = scmp.le.s32.totalorder 1, %s9
    %p191 = scmp.lt.s32.totalorder %s9, 3
    %p192 = pnand %p190, %p191
    %p193 = pneg %p192
    // Predicated region
    $region29: #{transformer_forward.30} parent=5 // pred_check
      _
    $region30: #{transformer_forward.30} parent=5 // pred_check_branch
      %195 = sbr.rel (%p192) target = $region32
    $region31: #{transformer_forward.30} parent=5 // pred_region
      %s196 = ssub.s32 %s9, 1
      %p197 = scmp.lt.s32.totalorder %s19, 1
      %s198 = scalar_select %p197, %s19, 1
      %p199 = scmp.lt.s32.totalorder %s21, 0
      %s200 = scalar_select %p199, %s21, 0
      %s201 = sadd.s32 %s200, %s198
      %s202 = smul.addr %s201, 8
      %s203 = scalar_lea.vmem %s0, %s202
      %p204 = pneg %p56
      %p205 = pneg %p53
      %s206 = smul.u32 16, %s21
      %s207 = smul.u32 3, %s20
      %p208 = scmp.lt.s32.totalorder %s206, 15
      %s209 = scalar_select %p208, %s206, 15
      %p210 = scmp.lt.s32.totalorder %s207, 2
      %s211 = scalar_select %p210, %s207, 2
      %s212 = smul.addr %s209, 3
      %s213 = sadd.s32 %s211, %s212
      %s214 = smul.addr %s213, 4
      %s215 = scalar_lea.vmem %s1, %s214
      %p216 = pneg %p84
      %p217 = pneg %p81
      %s218 = smul.u32 3, %s20
      %p219 = scmp.lt.s32.totalorder %s218, 2
      %s220 = scalar_select %p219, %s218, 2
      %s221 = scalar_lea.vmem %s2, %s220
      %p222 = pneg %p110
      %p223 = pneg %p107
      %p224 = pneg %p138
      %p225 = pneg %p135
      %s226 = smul.u32 3, %s20
      %p227 = scmp.lt.s32.totalorder %s19, 1
      %s228 = scalar_select %p227, %s19, 1
      %p229 = scmp.lt.s32.totalorder %s226, 2
      %s230 = scalar_select %p229, %s226, 2
      %s231 = smul.addr %s228, 3
      %s232 = sadd.s32 %s230, %s231
      %s233 = smul.addr %s232, 8
      %s234 = scalar_lea.vmem %s3, %s233
      %p235 = scmp.lt.s32.totalorder %s19, 1
      %s236 = scalar_select %p235, %s19, 1
      %p237 = scmp.lt.s32.totalorder %s21, 0
      %s238 = scalar_select %p237, %s21, 0
      %s239 = sadd.s32 %s238, %s236
      %s240 = smul.addr %s239, 8
      %s241 = scalar_lea.vmem %s0, %s240
      %s242 = smul.u32 16, %s21
      %s243 = smul.u32 3, %s20
      %p244 = scmp.lt.s32.totalorder %s242, 15
      %s245 = scalar_select %p244, %s242, 15
      %p246 = scmp.lt.s32.totalorder %s243, 2
      %s247 = scalar_select %p246, %s243, 2
      %s248 = smul.addr %s245, 3
      %s249 = sadd.s32 %s247, %s248
      %s250 = smul.addr %s249, 4
      %s251 = scalar_lea.vmem %s1, %s250
      %s252 = smul.u32 16, %s21
      %s253 = smul.u32 3, %s20
      %s254 = smul.u32 3, %s20
      %p255 = scmp.lt.s32.totalorder %s254, 2
      %s256 = scalar_select %p255, %s254, 2
      %s257 = scalar_lea.vmem %s2, %s256
      %s258 = smul.u32 3, %s20
      %s259 = smul.u32 3, %s20
      %p260 = scmp.lt.s32.totalorder %s19, 1
      %s261 = scalar_select %p260, %s19, 1
      %p262 = scmp.lt.s32.totalorder %s259, 2
      %s263 = scalar_select %p262, %s259, 2
      %s264 = smul.addr %s261, 3
      %s265 = sadd.s32 %s263, %s264
      %s266 = smul.addr %s265, 8
      %s267 = scalar_lea.vmem %s3, %s266
      %s268 = smul.u32 3, %s20
      %p269 = scmp.eq.s32.totalorder %s21, 0
      // Predicated region
      $region33: #{transformer_forward.30} parent=31 // pred_check
        %p270 = pneg %p269
      $region34: #{transformer_forward.30} parent=31 // pred_check_branch
        %272 = sbr.rel (%p270) target = $region36
      $region35: #{transformer_forward.30} parent=31 // pred_region
        %273 = vst [vmem:[#allocation2] sm:$0xff] 0.0
        %274 = vst [vmem:[#allocation2 + $0x8] sm:$0xff] 0.0
        %275 = vst [vmem:[#allocation2 + $0x10] sm:$0xff] 0.0
      $region36: #{transformer_forward.30} parent=31 // pred_fallthru
        _
      %v276 = vld [vmem:[%s241] sm:$0xff]
      %v277 = vld [vmem:[#allocation2] sm:$0xff]
      %v278 = vld [vmem:[#allocation2 + $0x8] sm:$0xff]
      %v279 = vld [vmem:[#allocation2 + $0x10] sm:$0xff]
      %v280 = vpack.c.bf16 %v276, %v276
      %v281 = vld [vmem:[%s251] sm:$0xff]
      %v282 = vld [vmem:[%s251 + $0x8] sm:$0xf]
      %v283 = vld [vmem:[%s251 + $0xc] sm:$0xff]
      %v284 = vld [vmem:[%s251 + $0x14] sm:$0xf]
      %v285 = vld [vmem:[%s251 + $0x18] sm:$0xff]
      %v286 = vld [vmem:[%s251 + $0x20] sm:$0xf]
      %v287 = vld [vmem:[%s251 + $0x24] sm:$0xff]
      %v288 = vld [vmem:[%s251 + $0x2c] sm:$0xf]
      %v289 = vld [vmem:[%s251 + $0x30] sm:$0xff]
      %v290 = vld [vmem:[%s251 + $0x38] sm:$0xf]
      %v291 = vld [vmem:[%s251 + $0x3c] sm:$0xff]
      %v292 = vld [vmem:[%s251 + $0x44] sm:$0xf]
      %v293 = vld [vmem:[%s251 + $0x48] sm:$0xff]
      %v294 = vld [vmem:[%s251 + $0x50] sm:$0xf]
      %v295 = vld [vmem:[%s251 + $0x54] sm:$0xff]
      %v296 = vld [vmem:[%s251 + $0x5c] sm:$0xf]
      %v297 = vld [vmem:[%s251 + $0x60] sm:$0xff]
      %v298 = vld [vmem:[%s251 + $0x68] sm:$0xf]
      %v299 = vld [vmem:[%s251 + $0x6c] sm:$0xff]
      %v300 = vld [vmem:[%s251 + $0x74] sm:$0xf]
      %v301 = vld [vmem:[%s251 + $0x78] sm:$0xff]
      %v302 = vld [vmem:[%s251 + $0x80] sm:$0xf]
      %v303 = vld [vmem:[%s251 + $0x84] sm:$0xff]
      %v304 = vld [vmem:[%s251 + $0x8c] sm:$0xf]
      %v305 = vld [vmem:[%s251 + $0x90] sm:$0xff]
      %v306 = vld [vmem:[%s251 + $0x98] sm:$0xf]
      %v307 = vld [vmem:[%s251 + $0x9c] sm:$0xff]
      %v308 = vld [vmem:[%s251 + $0xa4] sm:$0xf]
      %v309 = vld [vmem:[%s251 + $0xa8] sm:$0xff]
      %v310 = vld [vmem:[%s251 + $0xb0] sm:$0xf]
      %v311 = vld [vmem:[%s251 + $0xb4] sm:$0xff]
      %v312 = vld [vmem:[%s251 + $0xbc] sm:$0xf]
      %v345 = vunpack.c.l.b16 %v281
      %v346 = vunpack.c.h.b16 %v281
      %v347 = vunpack.c.l.b16 %v282
      %v348 = vunpack.c.l.b16 %v283
      %v349 = vunpack.c.h.b16 %v283
      %v350 = vunpack.c.l.b16 %v284
      %v351 = vunpack.c.l.b16 %v285
      %v352 = vunpack.c.h.b16 %v285
      %v353 = vunpack.c.l.b16 %v286
      %v354 = vunpack.c.l.b16 %v287
      %v355 = vunpack.c.h.b16 %v287
      %v356 = vunpack.c.l.b16 %v288
      %v357 = vunpack.c.l.b16 %v289
      %v358 = vunpack.c.h.b16 %v289
      %v359 = vunpack.c.l.b16 %v290
      %v360 = vunpack.c.l.b16 %v291
      %v361 = vunpack.c.h.b16 %v291
      %v362 = vunpack.c.l.b16 %v292
      %v363 = vunpack.c.l.b16 %v293
      %v364 = vunpack.c.h.b16 %v293
      %v365 = vunpack.c.l.b16 %v294
      %v366 = vunpack.c.l.b16 %v295
      %v367 = vunpack.c.h.b16 %v295
      %v368 = vunpack.c.l.b16 %v296
      %v369 = vunpack.c.l.b16 %v297
      %v370 = vunpack.c.h.b16 %v297
      %v371 = vunpack.c.l.b16 %v298
      %v372 = vunpack.c.l.b16 %v299
      %v373 = vunpack.c.h.b16 %v299
      %v374 = vunpack.c.l.b16 %v300
      %v375 = vunpack.c.l.b16 %v301
      %v376 = vunpack.c.h.b16 %v301
      %v377 = vunpack.c.l.b16 %v302
      %v378 = vunpack.c.l.b16 %v303
      %v379 = vunpack.c.h.b16 %v303
      %v380 = vunpack.c.l.b16 %v304
      %v381 = vunpack.c.l.b16 %v305
      %v382 = vunpack.c.h.b16 %v305
      %v383 = vunpack.c.l.b16 %v306
      %v384 = vunpack.c.l.b16 %v307
      %v385 = vunpack.c.h.b16 %v307
      %v386 = vunpack.c.l.b16 %v308
      %v387 = vunpack.c.l.b16 %v309
      %v388 = vunpack.c.h.b16 %v309
      %v389 = vunpack.c.l.b16 %v310
      %v390 = vunpack.c.l.b16 %v311
      %v391 = vunpack.c.h.b16 %v311
      %v392 = vunpack.c.l.b16 %v312
      %v393 = vpack.c.b16 %v348, %v345
      %v394 = vpack.c.b16 %v349, %v346
      %v395 = vpack.c.b16 %v350, %v347
      %v396 = vpack.c.b16 %v354, %v351
      %v397 = vpack.c.b16 %v355, %v352
      %v398 = vpack.c.b16 %v356, %v353
      %v399 = vpack.c.b16 %v360, %v357
      %v400 = vpack.c.b16 %v361, %v358
      %v401 = vpack.c.b16 %v362, %v359
      %v402 = vpack.c.b16 %v366, %v363
      %v403 = vpack.c.b16 %v367, %v364
      %v404 = vpack.c.b16 %v368, %v365
      %v405 = vpack.c.b16 %v372, %v369
      %v406 = vpack.c.b16 %v373, %v370
      %v407 = vpack.c.b16 %v374, %v371
      %v408 = vpack.c.b16 %v378, %v375
      %v409 = vpack.c.b16 %v379, %v376
      %v410 = vpack.c.b16 %v380, %v377
      %v411 = vpack.c.b16 %v384, %v381
      %v412 = vpack.c.b16 %v385, %v382
      %v413 = vpack.c.b16 %v386, %v383
      %v414 = vpack.c.b16 %v390, %v387
      %v415 = vpack.c.b16 %v391, %v388
      %v416 = vpack.c.b16 %v392, %v389
      %441 = vmatpush.bf16.msra.mxu0 %v414
      %442 = vmatpush.bf16.msra.mxu0 %v411
      %443 = vmatpush.bf16.msra.mxu0 %v408
      %444 = vmatpush.bf16.msra.mxu0 %v405
      %445 = vmatpush.bf16.msra.mxu0 %v402
      %446 = vmatpush.bf16.msra.mxu0 %v399
      %447 = vmatpush.bf16.msra.mxu0 %v396
      %448 = vmatpush.bf16.msra.mxu0 %v393
      %449 = vmatmul.bf16.gmra.mxu0 %v280
      %v450 = vpop.f32.mrf.mxu0
      %v451 = vadd.f32 0.0, %v450
      %v452 = vpop.f32.mrf.mxu0
      %453 = vdwg.mxu0
      %454 = vmatpush.bf16.msra.mxu0 %v415
      %455 = vmatpush.bf16.msra.mxu0 %v412
      %456 = vmatpush.bf16.msra.mxu0 %v409
      %457 = vmatpush.bf16.msra.mxu0 %v406
      %458 = vmatpush.bf16.msra.mxu0 %v403
      %459 = vmatpush.bf16.msra.mxu0 %v400
      %460 = vmatpush.bf16.msra.mxu0 %v397
      %461 = vmatpush.bf16.msra.mxu0 %v394
      %462 = vmatmul.bf16.gmra.mxu0 %v280
      %v463 = vpop.f32.mrf.mxu0
      %v464 = vadd.f32 0.0, %v463
      %v465 = vpop.f32.mrf.mxu0
      %466 = vdwg.mxu0
      %467 = vmatpush.bf16.msra.mxu0 %v416
      %468 = vmatpush.bf16.msra.mxu0 %v413
      %469 = vmatpush.bf16.msra.mxu0 %v410
      %470 = vmatpush.bf16.msra.mxu0 %v407
      %471 = vmatpush.bf16.msra.mxu0 %v404
      %472 = vmatpush.bf16.msra.mxu0 %v401
      %473 = vmatpush.bf16.msra.mxu0 %v398
      %474 = vmatpush.bf16.msra.mxu0 %v395
      %475 = vmatmul.bf16.gmra.mxu0 %v280
      %v476 = vpop.f32.mrf.mxu0
      %v477 = vadd.f32 0.0, %v476
      %v478 = vpop.f32.mrf.mxu0
      %479 = vdwg.mxu0
      %v480 = vadd.f32 %v277, %v451
      %v481 = vadd.f32 %v278, %v464
      %v482 = vadd.f32 %v279, %v477
      %483 = vst [vmem:[#allocation2] sm:$0xff] %v480
      %484 = vst [vmem:[#allocation2 + $0x8] sm:$0xff] %v481
      %485 = vst [vmem:[#allocation2 + $0x10] sm:$0xff] %v482
      // Predicated region
      $region37: #{transformer_forward.30} parent=31 // pred_check
        %p486 = pneg %p269
      $region38: #{transformer_forward.30} parent=31 // pred_check_branch
        %488 = sbr.rel (%p486) target = $region40
      $region39: #{transformer_forward.30} parent=31 // pred_region
        %v489 = vld [vmem:[#allocation2] sm:$0xff]
        %v490 = vld [vmem:[#allocation2 + $0x8] sm:$0xff]
        %v491 = vld [vmem:[#allocation2 + $0x10] sm:$0xff]
        %v492 = vld [vmem:[%s257] sm:$0x7]
        %v494 = vperm.slane %v492, 0
        %v495 = vperm.slane %v492, 1
        %v496 = vperm.slane %v492, 2
        %v500 = vadd.f32 %v489, %v494
        %v501 = vadd.f32 %v490, %v495
        %v502 = vadd.f32 %v491, %v496
        %503 = vst [vmem:[%s267] sm:$0xff] %v500
        %504 = vst [vmem:[%s267 + $0x8] sm:$0xff] %v501
        %505 = vst [vmem:[%s267 + $0x10] sm:$0xff] %v502
      $region40: #{transformer_forward.30} parent=31 // pred_fallthru
        _
      %s506 = smul.u32 3, %s20
      %p507 = scmp.lt.s32.totalorder %s19, 1
      %s508 = scalar_select %p507, %s19, 1
      %p509 = scmp.lt.s32.totalorder %s506, 2
      %s510 = scalar_select %p509, %s506, 2
      %s511 = smul.addr %s508, 3
      %s512 = sadd.s32 %s510, %s511
      %s513 = smul.addr %s512, 8
      %s514 = scalar_lea.vmem %s3, %s513
      // Predicated region
      $region41: #{transformer_forward.30} parent=31 // pred_check
        %p515 = pneg %p135
      $region42: #{transformer_forward.30} parent=31 // pred_check_branch
        %517 = sbr.rel (%p515) target = $region44
      $region43: #{transformer_forward.30} parent=31 // pred_region
        %s518 = smul.u32 3, %s20
      $region44: #{transformer_forward.30} parent=31 // pred_fallthru
        _
    $region32: #{transformer_forward.30} parent=5 // pred_fallthru
      _
    %p519 = scmp.le.s32.totalorder 2, %s9
    // Predicated region
    $region45: #{transformer_forward.30} parent=5 // pred_check
      %p520 = pneg %p519
    $region46: #{transformer_forward.30} parent=5 // pred_check_branch
      %522 = sbr.rel (%p520) target = $region48
    $region47: #{transformer_forward.30} parent=5 // pred_region
      %s523 = ssub.s32 %s9, 2
      // Predicated region
      $region49: #{transformer_forward.30} parent=47 // pred_check
        %p524 = pneg %p141
      $region50: #{transformer_forward.30} parent=47 // pred_check_branch
        %526 = sbr.rel (%p524) target = $region52
      $region51: #{transformer_forward.30} parent=47 // pred_region
        %s527 = smul.u32 3, %s23
        %p528 = scmp.lt.s32.totalorder %s22, 1
        %s529 = scalar_select %p528, %s22, 1
        %p530 = scmp.lt.s32.totalorder %s527, 2
        %s531 = scalar_select %p530, %s527, 2
        %s532 = smul.addr %s529, 3
        %s533 = sadd.s32 %s531, %s532
        %s534 = smul.addr %s533, 8
        %s535 = scalar_lea.vmem %s3, %s534
      $region52: #{transformer_forward.30} parent=47 // pred_fallthru
        _
    $region48: #{transformer_forward.30} parent=5 // pred_fallthru
      _
  $region6: #{transformer_forward.30} parent=0 // loop_footer
    %s13 = sadd.s32 1, %s9
  $region7: #{transformer_forward.30} parent=0 // loop_footer_branch
    %8 = sbr.rel target = $region3
  $region8: #{transformer_forward.30} parent=0 // loop_exit
    _

// kernel: transformer_forward.32
$region0: #{transformer_forward.32}
  #allocation0 [shape = 'u32[]', space=smem, size = 0x4, offset = 0x4, fixed_abs, tag = 'smem constant byte address 0x4 - core index']
  #allocation1 [shape = 'u32[72,128]{1,0:T(1,128)}', space=vmem, size = 0x9000, scoped, tag = 'internal scratch']
  #allocation2 [shape = 'f32[8,128]{1,0:T(8,128)}', space=vmem, size = 0x1000, scoped, tag = 'scratch operand']
  %s0 = inlined_call_operand.vmem [shape: f32[16,128], index: 0, kind: input, shape index: {}]
  %s1 = inlined_call_operand.vmem [shape: bf16[128,128], index: 1, kind: input, shape index: {}]
  %s2 = inlined_call_operand.vmem [shape: f32[1,128], index: 2, kind: input, shape index: {}]
  %s3 = inlined_call_operand.vmem [shape: f32[16,128], index: 3, kind: input, shape index: {}]
  %s4 = inlined_call_operand.vmem [shape: f32[1,128], index: 4, kind: input, shape index: {}]
  %s5 = inlined_call_operand.vmem [shape: f32[1,128], index: 5, kind: input, shape index: {}]
  %s6 = inlined_call_operand.vmem [shape: f32[16,128], index: 6, kind: output, shape index: {}]
  %s7 = sld [smem:[#allocation0]]
  $region65: #{transformer_forward.32} parent=0
    _
  %s9 = ssub.s32 1, %s7
  %s10 = scalar_select 0, %s9, %s7
  loop: start=0, step=1, limit=4
  $region2: #{transformer_forward.32} parent=0 // loop_pre_header
    _
  $region3: #{transformer_forward.32} parent=0 // loop_header
    %s12 = sphi 0, %s16
    %p13 = scmp.ge.s32.totalorder %s12, 4
    %s19 = sphi 0, %s38
    %s20 = sphi 0, %s34
    %s21 = sphi 0, %s30
    %s22 = sphi 0, %s19
    %s23 = sphi 0, %s20
    %s24 = sphi 0, %s21
    %s25 = sphi 0, %s22
    %s26 = sphi 0, %s23
    %s27 = sphi 0, %s24
    %s43 = sphi 0, %s45
    %s46 = sphi 0, %s43
    %s47 = sphi 0, %s46
    %s63 = sphi 0, %s47
    %s71 = sphi 0, %s73
    %s74 = sphi 0, %s71
    %s75 = sphi 0, %s74
    %s91 = sphi 0, %s75
    %s97 = sphi 0, %s99
    %s100 = sphi 0, %s97
    %s101 = sphi 0, %s100
    %s117 = sphi 0, %s101
    %s125 = sphi 0, %s127
    %s128 = sphi 0, %s125
    %s129 = sphi 0, %s128
    %s145 = sphi 0, %s129
    %s151 = sphi 0, %s153
    %s154 = sphi 0, %s151
    %s155 = sphi 0, %s154
    %s171 = sphi 0, %s155
    %s177 = sphi 0, %s179
    %s180 = sphi 0, %s177
    %s181 = sphi 0, %s180
    %s197 = sphi 0, %s181
    %s205 = sphi 0, %s207
    %s208 = sphi 0, %s205
    %s209 = sphi 0, %s208
    %s225 = sphi 0, %s209
  $region4: #{transformer_forward.32} parent=0 // loop_header_branch
    %15 = sbr.rel (%p13) target = $region8
  $region5: #{transformer_forward.32} parent=0 // loop_body
    %s17 = ssub.s32 %s12, 1
    %s18 = ssub.s32 %s12, 2
    %s28 = sadd.s32 1, %s21
    %p29 = scmp.ge.s32.totalorder %s28, 1
    %s30 = scalar_select %p29, 0, %s28
    %s31 = sadd.s32 1, %s20
    %s32 = scalar_select %p29, %s31, %s20
    %p33 = scmp.ge.s32.totalorder %s32, 1
    %s34 = scalar_select %p33, 0, %s32
    %s35 = sadd.s32 1, %s19
    %s36 = scalar_select %p33, %s35, %s19
    %p37 = scmp.ge.s32.totalorder %s36, 2
    %s38 = scalar_select %p37, 0, %s36
    %s39 = ssub.s32 %s19, %s38
    %s40 = ssub.s32 %s21, %s30
    %s41 = sor.u32 %s39, %s40
    %p42 = scmp.eq.s32.totalorder %s41, 0
    %s44 = sadd.s32 %s43, 1
    %s45 = scalar_select %p42, %s43, %s44
    %p48 = pneg %p42
    %p49 = scmp.eq.s32.totalorder %s12, 1
    %p50 = por %p48, %p49
    %p51 = scmp.ne.s32.totalorder %s43, %s46
    %p52 = scmp.eq.s32.totalorder %s12, 0
    %p53 = por %p51, %p52
    %p54 = scmp.ne.s32.totalorder %s43, %s46
    %p55 = scmp.eq.s32.totalorder %s17, 1
    %p56 = por %p54, %p55
    %p57 = scmp.ne.s32.totalorder %s46, %s47
    %p58 = scmp.eq.s32.totalorder %s17, 0
    %p59 = por %p57, %p58
    %p60 = scmp.ne.s32.totalorder %s46, %s47
    %p61 = scmp.eq.s32.totalorder %s18, 1
    %p62 = por %p60, %p61
    %p64 = scmp.ne.s32.totalorder %s47, %s63
    %p65 = scmp.eq.s32.totalorder %s18, 0
    %p66 = por %p64, %p65
    %s67 = ssub.s32 %s21, %s30
    %s68 = ssub.s32 %s20, %s34
    %s69 = sor.u32 %s67, %s68
    %p70 = scmp.eq.s32.totalorder %s69, 0
    %s72 = sadd.s32 %s71, 1
    %s73 = scalar_select %p70, %s71, %s72
    %p76 = pneg %p70
    %p77 = scmp.eq.s32.totalorder %s12, 1
    %p78 = por %p76, %p77
    %p79 = scmp.ne.s32.totalorder %s71, %s74
    %p80 = scmp.eq.s32.totalorder %s12, 0
    %p81 = por %p79, %p80
    %p82 = scmp.ne.s32.totalorder %s71, %s74
    %p83 = scmp.eq.s32.totalorder %s17, 1
    %p84 = por %p82, %p83
    %p85 = scmp.ne.s32.totalorder %s74, %s75
    %p86 = scmp.eq.s32.totalorder %s17, 0
    %p87 = por %p85, %p86
    %p88 = scmp.ne.s32.totalorder %s74, %s75
    %p89 = scmp.eq.s32.totalorder %s18, 1
    %p90 = por %p88, %p89
    %p92 = scmp.ne.s32.totalorder %s75, %s91
    %p93 = scmp.eq.s32.totalorder %s18, 0
    %p94 = por %p92, %p93
    %s95 = ssub.s32 %s20, %s34
    %p96 = scmp.eq.s32.totalorder %s95, 0
    %s98 = sadd.s32 %s97, 1
    %s99 = scalar_select %p96, %s97, %s98
    %p102 = pneg %p96
    %p103 = scmp.eq.s32.totalorder %s12, 1
    %p104 = por %p102, %p103
    %p105 = scmp.ne.s32.totalorder %s97, %s100
    %p106 = scmp.eq.s32.totalorder %s12, 0
    %p107 = por %p105, %p106
    %p108 = scmp.ne.s32.totalorder %s97, %s100
    %p109 = scmp.eq.s32.totalorder %s17, 1
    %p110 = por %p108, %p109
    %p111 = scmp.ne.s32.totalorder %s100, %s101
    %p112 = scmp.eq.s32.totalorder %s17, 0
    %p113 = por %p111, %p112
    %p114 = scmp.ne.s32.totalorder %s100, %s101
    %p115 = scmp.eq.s32.totalorder %s18, 1
    %p116 = por %p114, %p115
    %p118 = scmp.ne.s32.totalorder %s101, %s117
    %p119 = scmp.eq.s32.totalorder %s18, 0
    %p120 = por %p118, %p119
    %s121 = ssub.s32 %s19, %s38
    %s122 = ssub.s32 %s20, %s34
    %s123 = sor.u32 %s121, %s122
    %p124 = scmp.eq.s32.totalorder %s123, 0
    %s126 = sadd.s32 %s125, 1
    %s127 = scalar_select %p124, %s125, %s126
    %p130 = pneg %p124
    %p131 = scmp.eq.s32.totalorder %s12, 1
    %p132 = por %p130, %p131
    %p133 = scmp.ne.s32.totalorder %s125, %s128
    %p134 = scmp.eq.s32.totalorder %s12, 0
    %p135 = por %p133, %p134
    %p136 = scmp.ne.s32.totalorder %s125, %s128
    %p137 = scmp.eq.s32.totalorder %s17, 1
    %p138 = por %p136, %p137
    %p139 = scmp.ne.s32.totalorder %s128, %s129
    %p140 = scmp.eq.s32.totalorder %s17, 0
    %p141 = por %p139, %p140
    %p142 = scmp.ne.s32.totalorder %s128, %s129
    %p143 = scmp.eq.s32.totalorder %s18, 1
    %p144 = por %p142, %p143
    %p146 = scmp.ne.s32.totalorder %s129, %s145
    %p147 = scmp.eq.s32.totalorder %s18, 0
    %p148 = por %p146, %p147
    %s149 = ssub.s32 %s20, %s34
    %p150 = scmp.eq.s32.totalorder %s149, 0
    %s152 = sadd.s32 %s151, 1
    %s153 = scalar_select %p150, %s151, %s152
    %p156 = pneg %p150
    %p157 = scmp.eq.s32.totalorder %s12, 1
    %p158 = por %p156, %p157
    %p159 = scmp.ne.s32.totalorder %s151, %s154
    %p160 = scmp.eq.s32.totalorder %s12, 0
    %p161 = por %p159, %p160
    %p162 = scmp.ne.s32.totalorder %s151, %s154
    %p163 = scmp.eq.s32.totalorder %s17, 1
    %p164 = por %p162, %p163
    %p165 = scmp.ne.s32.totalorder %s154, %s155
    %p166 = scmp.eq.s32.totalorder %s17, 0
    %p167 = por %p165, %p166
    %p168 = scmp.ne.s32.totalorder %s154, %s155
    %p169 = scmp.eq.s32.totalorder %s18, 1
    %p170 = por %p168, %p169
    %p172 = scmp.ne.s32.totalorder %s155, %s171
    %p173 = scmp.eq.s32.totalorder %s18, 0
    %p174 = por %p172, %p173
    %s175 = ssub.s32 %s20, %s34
    %p176 = scmp.eq.s32.totalorder %s175, 0
    %s178 = sadd.s32 %s177, 1
    %s179 = scalar_select %p176, %s177, %s178
    %p182 = pneg %p176
    %p183 = scmp.eq.s32.totalorder %s12, 1
    %p184 = por %p182, %p183
    %p185 = scmp.ne.s32.totalorder %s177, %s180
    %p186 = scmp.eq.s32.totalorder %s12, 0
    %p187 = por %p185, %p186
    %p188 = scmp.ne.s32.totalorder %s177, %s180
    %p189 = scmp.eq.s32.totalorder %s17, 1
    %p190 = por %p188, %p189
    %p191 = scmp.ne.s32.totalorder %s180, %s181
    %p192 = scmp.eq.s32.totalorder %s17, 0
    %p193 = por %p191, %p192
    %p194 = scmp.ne.s32.totalorder %s180, %s181
    %p195 = scmp.eq.s32.totalorder %s18, 1
    %p196 = por %p194, %p195
    %p198 = scmp.ne.s32.totalorder %s181, %s197
    %p199 = scmp.eq.s32.totalorder %s18, 0
    %p200 = por %p198, %p199
    %s201 = ssub.s32 %s19, %s38
    %s202 = ssub.s32 %s20, %s34
    %s203 = sor.u32 %s201, %s202
    %p204 = scmp.eq.s32.totalorder %s203, 0
    %s206 = sadd.s32 %s205, 1
    %s207 = scalar_select %p204, %s205, %s206
    %p210 = pneg %p204
    %p211 = scmp.eq.s32.totalorder %s12, 1
    %p212 = por %p210, %p211
    %p213 = scmp.ne.s32.totalorder %s205, %s208
    %p214 = scmp.eq.s32.totalorder %s12, 0
    %p215 = por %p213, %p214
    %p216 = scmp.ne.s32.totalorder %s205, %s208
    %p217 = scmp.eq.s32.totalorder %s17, 1
    %p218 = por %p216, %p217
    %p219 = scmp.ne.s32.totalorder %s208, %s209
    %p220 = scmp.eq.s32.totalorder %s17, 0
    %p221 = por %p219, %p220
    %p222 = scmp.ne.s32.totalorder %s208, %s209
    %p223 = scmp.eq.s32.totalorder %s18, 1
    %p224 = por %p222, %p223
    %p226 = scmp.ne.s32.totalorder %s209, %s225
    %p227 = scmp.eq.s32.totalorder %s18, 0
    %p228 = por %p226, %p227
    %p229 = scmp.le.s32.totalorder 1, %s12
    %p230 = scmp.lt.s32.totalorder %s12, 3
    %p231 = pnand %p229, %p230
    %p232 = pneg %p231
    // Predicated region
    $region9: #{transformer_forward.32} parent=5 // pred_check
      _
    $region10: #{transformer_forward.32} parent=5 // pred_check_branch
      %234 = sbr.rel (%p231) target = $region12
    $region11: #{transformer_forward.32} parent=5 // pred_region
      %s235 = ssub.s32 %s12, 1
      // Predicated region
      $region13: #{transformer_forward.32} parent=11 // pred_check
        %p236 = pneg %p87
      $region14: #{transformer_forward.32} parent=11 // pred_check_branch
        %238 = sbr.rel (%p236) target = $region16
      $region15: #{transformer_forward.32} parent=11 // pred_region
        %s239 = smul.u32 16, %s24
        %p240 = scmp.lt.s32.totalorder %s239, 15
        %s241 = scalar_select %p240, %s239, 15
        %p242 = scmp.lt.s32.totalorder %s23, 0
        %s243 = scalar_select %p242, %s23, 0
        %s244 = sadd.s32 %s243, %s241
        %s245 = smul.addr %s244, 4
        %s246 = scalar_lea.vmem %s1, %s245
        %s247 = smul.u32 16, %s24
      $region16: #{transformer_forward.32} parent=11 // pred_fallthru
        _
      // Predicated region
      $region17: #{transformer_forward.32} parent=11 // pred_check
        %p248 = pneg %p113
      $region18: #{transformer_forward.32} parent=11 // pred_check_branch
        %250 = sbr.rel (%p248) target = $region20
      $region19: #{transformer_forward.32} parent=11 // pred_region
        %p251 = scmp.lt.s32.totalorder %s23, 0
        %s252 = scalar_select %p251, %s23, 0
        %s253 = scalar_lea.vmem %s2, %s252
      $region20: #{transformer_forward.32} parent=11 // pred_fallthru
        _
      // Predicated region
      $region21: #{transformer_forward.32} parent=11 // pred_check
        %p254 = pneg %p167
      $region22: #{transformer_forward.32} parent=11 // pred_check_branch
        %256 = sbr.rel (%p254) target = $region24
      $region23: #{transformer_forward.32} parent=11 // pred_region
        %p257 = scmp.lt.s32.totalorder %s23, 0
        %s258 = scalar_select %p257, %s23, 0
        %s259 = scalar_lea.vmem %s4, %s258
      $region24: #{transformer_forward.32} parent=11 // pred_fallthru
        _
      // Predicated region
      $region25: #{transformer_forward.32} parent=11 // pred_check
        %p260 = pneg %p193
      $region26: #{transformer_forward.32} parent=11 // pred_check_branch
        %262 = sbr.rel (%p260) target = $region28
      $region27: #{transformer_forward.32} parent=11 // pred_region
        %p263 = scmp.lt.s32.totalorder %s23, 0
        %s264 = scalar_select %p263, %s23, 0
        %s265 = scalar_lea.vmem %s5, %s264
      $region28: #{transformer_forward.32} parent=11 // pred_fallthru
        _
    $region12: #{transformer_forward.32} parent=5 // pred_fallthru
      _
    %p266 = scmp.lt.s32.totalorder %s12, 2
    // Predicated region
    $region29: #{transformer_forward.32} parent=5 // pred_check
      %p267 = pneg %p266
    $region30: #{transformer_forward.32} parent=5 // pred_check_branch
      %269 = sbr.rel (%p267) target = $region32
    $region31: #{transformer_forward.32} parent=5 // pred_region
      // Predicated region
      $region33: #{transformer_forward.32} parent=31 // pred_check
        %p270 = pneg %p53
      $region34: #{transformer_forward.32} parent=31 // pred_check_branch
        %272 = sbr.rel (%p270) target = $region36
      $region35: #{transformer_forward.32} parent=31 // pred_region
        %p273 = scmp.lt.s32.totalorder %s19, 1
        %s274 = scalar_select %p273, %s19, 1
        %p275 = scmp.lt.s32.totalorder %s21, 0
        %s276 = scalar_select %p275, %s21, 0
        %s277 = sadd.s32 %s276, %s274
        %s278 = smul.addr %s277, 8
        %s279 = scalar_lea.vmem %s0, %s278
      $region36: #{transformer_forward.32} parent=31 // pred_fallthru
        _
      // Predicated region
      $region37: #{transformer_forward.32} parent=31 // pred_check
        %p280 = pneg %p135
      $region38: #{transformer_forward.32} parent=31 // pred_check_branch
        %282 = sbr.rel (%p280) target = $region40
      $region39: #{transformer_forward.32} parent=31 // pred_region
        %p283 = scmp.lt.s32.totalorder %s19, 1
        %s284 = scalar_select %p283, %s19, 1
        %p285 = scmp.lt.s32.totalorder %s20, 0
        %s286 = scalar_select %p285, %s20, 0
        %s287 = sadd.s32 %s286, %s284
        %s288 = smul.addr %s287, 8
        %s289 = scalar_lea.vmem %s3, %s288
      $region40: #{transformer_forward.32} parent=31 // pred_fallthru
        _
    $region32: #{transformer_forward.32} parent=5 // pred_fallthru
      _
    %p290 = scmp.le.s32.totalorder 1, %s12
    %p291 = scmp.lt.s32.totalorder %s12, 3
    %p292 = pnand %p290, %p291
    %p293 = pneg %p292
    // Predicated region
    $region41: #{transformer_forward.32} parent=5 // pred_check
      _
    $region42: #{transformer_forward.32} parent=5 // pred_check_branch
      %295 = sbr.rel (%p292) target = $region44
    $region43: #{transformer_forward.32} parent=5 // pred_region
      %s296 = ssub.s32 %s12, 1
      %p297 = scmp.lt.s32.totalorder %s22, 1
      %s298 = scalar_select %p297, %s22, 1
      %p299 = scmp.lt.s32.totalorder %s24, 0
      %s300 = scalar_select %p299, %s24, 0
      %s301 = sadd.s32 %s300, %s298
      %s302 = smul.addr %s301, 8
      %s303 = scalar_lea.vmem %s0, %s302
      %p304 = pneg %p59
      %p305 = pneg %p56
      %s306 = smul.u32 16, %s24
      %p307 = scmp.lt.s32.totalorder %s306, 15
      %s308 = scalar_select %p307, %s306, 15
      %p309 = scmp.lt.s32.totalorder %s23, 0
      %s310 = scalar_select %p309, %s23, 0
      %s311 = sadd.s32 %s310, %s308
      %s312 = smul.addr %s311, 4
      %s313 = scalar_lea.vmem %s1, %s312
      %p314 = pneg %p87
      %p315 = pneg %p84
      %p316 = scmp.lt.s32.totalorder %s23, 0
      %s317 = scalar_select %p316, %s23, 0
      %s318 = scalar_lea.vmem %s2, %s317
      %p319 = pneg %p113
      %p320 = pneg %p110
      %p321 = scmp.lt.s32.totalorder %s22, 1
      %s322 = scalar_select %p321, %s22, 1
      %p323 = scmp.lt.s32.totalorder %s23, 0
      %s324 = scalar_select %p323, %s23, 0
      %s325 = sadd.s32 %s324, %s322
      %s326 = smul.addr %s325, 8
      %s327 = scalar_lea.vmem %s3, %s326
      %p328 = pneg %p141
      %p329 = pneg %p138
      %p330 = scmp.lt.s32.totalorder %s23, 0
      %s331 = scalar_select %p330, %s23, 0
      %s332 = scalar_lea.vmem %s4, %s331
      %p333 = pneg %p167
      %p334 = pneg %p164
      %p335 = scmp.lt.s32.totalorder %s23, 0
      %s336 = scalar_select %p335, %s23, 0
      %s337 = scalar_lea.vmem %s5, %s336
      %p338 = pneg %p193
      %p339 = pneg %p190
      %p340 = pneg %p221
      %p341 = pneg %p218
      %p342 = scmp.lt.s32.totalorder %s22, 1
      %s343 = scalar_select %p342, %s22, 1
      %p344 = scmp.lt.s32.totalorder %s23, 0
      %s345 = scalar_select %p344, %s23, 0
      %s346 = sadd.s32 %s345, %s343
      %s347 = smul.addr %s346, 8
      %s348 = scalar_lea.vmem %s6, %s347
      %p349 = scmp.lt.s32.totalorder %s22, 1
      %s350 = scalar_select %p349, %s22, 1
      %p351 = scmp.lt.s32.totalorder %s24, 0
      %s352 = scalar_select %p351, %s24, 0
      %s353 = sadd.s32 %s352, %s350
      %s354 = smul.addr %s353, 8
      %s355 = scalar_lea.vmem %s0, %s354
      %s356 = smul.u32 16, %s24
      %p357 = scmp.lt.s32.totalorder %s356, 15
      %s358 = scalar_select %p357, %s356, 15
      %p359 = scmp.lt.s32.totalorder %s23, 0
      %s360 = scalar_select %p359, %s23, 0
      %s361 = sadd.s32 %s360, %s358
      %s362 = smul.addr %s361, 4
      %s363 = scalar_lea.vmem %s1, %s362
      %s364 = smul.u32 16, %s24
      %p365 = scmp.lt.s32.totalorder %s23, 0
      %s366 = scalar_select %p365, %s23, 0
      %s367 = scalar_lea.vmem %s2, %s366
      %p368 = scmp.lt.s32.totalorder %s22, 1
      %s369 = scalar_select %p368, %s22, 1
      %p370 = scmp.lt.s32.totalorder %s23, 0
      %s371 = scalar_select %p370, %s23, 0
      %s372 = sadd.s32 %s371, %s369
      %s373 = smul.addr %s372, 8
      %s374 = scalar_lea.vmem %s3, %s373
      %p375 = scmp.lt.s32.totalorder %s23, 0
      %s376 = scalar_select %p375, %s23, 0
      %s377 = scalar_lea.vmem %s4, %s376
      %p378 = scmp.lt.s32.totalorder %s23, 0
      %s379 = scalar_select %p378, %s23, 0
      %s380 = scalar_lea.vmem %s5, %s379
      %p381 = scmp.lt.s32.totalorder %s22, 1
      %s382 = scalar_select %p381, %s22, 1
      %p383 = scmp.lt.s32.totalorder %s23, 0
      %s384 = scalar_select %p383, %s23, 0
      %s385 = sadd.s32 %s384, %s382
      %s386 = smul.addr %s385, 8
      %s387 = scalar_lea.vmem %s6, %s386
      %p388 = scmp.eq.s32.totalorder %s24, 0
      // Predicated region
      $region45: #{transformer_forward.32} parent=43 // pred_check
        %p389 = pneg %p388
      $region46: #{transformer_forward.32} parent=43 // pred_check_branch
        %391 = sbr.rel (%p389) target = $region48
      $region47: #{transformer_forward.32} parent=43 // pred_region
        %392 = vst [vmem:[#allocation2] sm:$0xff] 0.0
      $region48: #{transformer_forward.32} parent=43 // pred_fallthru
        _
      %v393 = vld [vmem:[%s355] sm:$0xff]
      %v394 = vld [vmem:[#allocation2] sm:$0xff]
      %v395 = vpack.c.bf16 %v393, %v393
      %v396 = vld [vmem:[%s363] sm:$0xf]
      %v397 = vld [vmem:[%s363 + $0x4] sm:$0xf]
      %v398 = vld [vmem:[%s363 + $0x8] sm:$0xf]
      %v399 = vld [vmem:[%s363 + $0xc] sm:$0xf]
      %v400 = vld [vmem:[%s363 + $0x10] sm:$0xf]
      %v401 = vld [vmem:[%s363 + $0x14] sm:$0xf]
      %v402 = vld [vmem:[%s363 + $0x18] sm:$0xf]
      %v403 = vld [vmem:[%s363 + $0x1c] sm:$0xf]
      %v404 = vld [vmem:[%s363 + $0x20] sm:$0xf]
      %v405 = vld [vmem:[%s363 + $0x24] sm:$0xf]
      %v406 = vld [vmem:[%s363 + $0x28] sm:$0xf]
      %v407 = vld [vmem:[%s363 + $0x2c] sm:$0xf]
      %v408 = vld [vmem:[%s363 + $0x30] sm:$0xf]
      %v409 = vld [vmem:[%s363 + $0x34] sm:$0xf]
      %v410 = vld [vmem:[%s363 + $0x38] sm:$0xf]
      %v411 = vld [vmem:[%s363 + $0x3c] sm:$0xf]
      %v428 = vunpack.c.l.b16 %v396
      %v429 = vunpack.c.l.b16 %v397
      %v430 = vunpack.c.l.b16 %v398
      %v431 = vunpack.c.l.b16 %v399
      %v432 = vunpack.c.l.b16 %v400
      %v433 = vunpack.c.l.b16 %v401
      %v434 = vunpack.c.l.b16 %v402
      %v435 = vunpack.c.l.b16 %v403
      %v436 = vunpack.c.l.b16 %v404
      %v437 = vunpack.c.l.b16 %v405
      %v438 = vunpack.c.l.b16 %v406
      %v439 = vunpack.c.l.b16 %v407
      %v440 = vunpack.c.l.b16 %v408
      %v441 = vunpack.c.l.b16 %v409
      %v442 = vunpack.c.l.b16 %v410
      %v443 = vunpack.c.l.b16 %v411
      %v444 = vpack.c.b16 %v429, %v428
      %v445 = vpack.c.b16 %v431, %v430
      %v446 = vpack.c.b16 %v433, %v432
      %v447 = vpack.c.b16 %v435, %v434
      %v448 = vpack.c.b16 %v437, %v436
      %v449 = vpack.c.b16 %v439, %v438
      %v450 = vpack.c.b16 %v441, %v440
      %v451 = vpack.c.b16 %v443, %v442
      %460 = vmatpush.bf16.msra.mxu0 %v451
      %461 = vmatpush.bf16.msra.mxu0 %v450
      %462 = vmatpush.bf16.msra.mxu0 %v449
      %463 = vmatpush.bf16.msra.mxu0 %v448
      %464 = vmatpush.bf16.msra.mxu0 %v447
      %465 = vmatpush.bf16.msra.mxu0 %v446
      %466 = vmatpush.bf16.msra.mxu0 %v445
      %467 = vmatpush.bf16.msra.mxu0 %v444
      %468 = vmatmul.bf16.gmra.mxu0 %v395
      %v469 = vpop.f32.mrf.mxu0
      %v470 = vadd.f32 0.0, %v469
      %v471 = vpop.f32.mrf.mxu0
      %472 = vdwg.mxu0
      %v473 = vadd.f32 %v394, %v470
      %474 = vst [vmem:[#allocation2] sm:$0xff] %v473
      // Predicated region
      $region49: #{transformer_forward.32} parent=43 // pred_check
        %p475 = pneg %p388
      $region50: #{transformer_forward.32} parent=43 // pred_check_branch
        %477 = sbr.rel (%p475) target = $region52
      $region51: #{transformer_forward.32} parent=43 // pred_region
        %v478 = vld [vmem:[#allocation2] sm:$0xff]
        %v479 = vld [vmem:[%s367] sm:$0x1]
        %v481 = vperm.slane %v479, 0
        %v483 = vadd.f32 %v478, %v481
        %v484 = vld [vmem:[%s374] sm:$0xff]
        %v485 = vadd.f32 %v483, %v484
        %v486 = vld [vmem:[%s377] sm:$0x1]
        %v487 = vld [vmem:[%s380] sm:$0x1]
        %488 = vadd.xlane.f32.xlu0 %v485
        %v489 = vpop.xlane.xlu0 %488
        %v490 = vrcp.pop 128.0
        %v491 = vmul.f32 128.0, %v490
        %v492 = vsub.f32 1.0, %v491
        %v493 = vmul.f32 %v490, %v492
        %v494 = vadd.f32 %v490, %v493
        %vm495 = vweird.f32 %v490
        %v496 = vsel %vm495, %v490, %v494
        %v497 = vmul.f32 %v489, %v496
        %v498 = vsub.f32 %v485, %v497
        %v499 = vmul.f32 %v498, %v498
        %500 = vadd.xlane.f32.xlu0 %v499
        %v501 = vpop.xlane.xlu0 %500
        %v502 = vmul.f32 %v501, %v496
        %v503 = vadd.f32 %v502, 1e-05
        %v504 = vrsqrt.pop %v503
        %v505 = vmul.f32 %v504, %v503
        %v506 = vmul.f32 %v505, %v504
        %v507 = vmul.f32 0.5, %v506
        %v508 = vsub.f32 1.5, %v507
        %v509 = vmul.f32 %v504, %v508
        %vm510 = vweird.f32 %v503
        %vm511 = vweird.f32 %v504
        %vm512 = vmor %vm510, %vm511
        %v513 = vsel %vm512, %v504, %v509
        %v514 = vmul.f32 %v498, %v513
        %v516 = vperm.slane %v486, 0
        %v518 = vmul.f32 %v514, %v516
        %v520 = vperm.slane %v487, 0
        %v522 = vadd.f32 %v518, %v520
        %523 = vst [vmem:[%s387] sm:$0xff] %v522
      $region52: #{transformer_forward.32} parent=43 // pred_fallthru
        _
      %p524 = scmp.lt.s32.totalorder %s22, 1
      %s525 = scalar_select %p524, %s22, 1
      %p526 = scmp.lt.s32.totalorder %s23, 0
      %s527 = scalar_select %p526, %s23, 0
      %s528 = sadd.s32 %s527, %s525
      %s529 = smul.addr %s528, 8
      %s530 = scalar_lea.vmem %s6, %s529
      // Predicated region
      $region53: #{transformer_forward.32} parent=43 // pred_check
        %p531 = pneg %p218
      $region54: #{transformer_forward.32} parent=43 // pred_check_branch
        %533 = sbr.rel (%p531) target = $region56
      $region55: #{transformer_forward.32} parent=43 // pred_region
        _
      $region56: #{transformer_forward.32} parent=43 // pred_fallthru
        _
    $region44: #{transformer_forward.32} parent=5 // pred_fallthru
      _
    %p534 = scmp.le.s32.totalorder 2, %s12
    // Predicated region
    $region57: #{transformer_forward.32} parent=5 // pred_check
      %p535 = pneg %p534
    $region58: #{transformer_forward.32} parent=5 // pred_check_branch
      %537 = sbr.rel (%p535) target = $region60
    $region59: #{transformer_forward.32} parent=5 // pred_region
      %s538 = ssub.s32 %s12, 2
      // Predicated region
      $region61: #{transformer_forward.32} parent=59 // pred_check
        %p539 = pneg %p224
      $region62: #{transformer_forward.32} parent=59 // pred_check_branch
        %541 = sbr.rel (%p539) target = $region64
      $region63: #{transformer_forward.32} parent=59 // pred_region
        %p542 = scmp.lt.s32.totalorder %s25, 1
        %s543 = scalar_select %p542, %s25, 1
        %p544 = scmp.lt.s32.totalorder %s26, 0
        %s545 = scalar_select %p544, %s26, 0
        %s546 = sadd.s32 %s545, %s543
        %s547 = smul.addr %s546, 8
        %s548 = scalar_lea.vmem %s6, %s547
      $region64: #{transformer_forward.32} parent=59 // pred_fallthru
        _
    $region60: #{transformer_forward.32} parent=5 // pred_fallthru
      _
  $region6: #{transformer_forward.32} parent=0 // loop_footer
    %s16 = sadd.s32 1, %s12
  $region7: #{transformer_forward.32} parent=0 // loop_footer_branch
    %11 = sbr.rel target = $region3
  $region8: #{transformer_forward.32} parent=0 // loop_exit
    _

// kernel: transformer_forward.31
$region0: #{transformer_forward.31}
  #allocation0 [shape = 'u32[]', space=smem, size = 0x4, offset = 0x4, fixed_abs, tag = 'smem constant byte address 0x4 - core index']
  #allocation1 [shape = 'u32[72,128]{1,0:T(1,128)}', space=vmem, size = 0x9000, scoped, tag = 'internal scratch']
  %s0 = inlined_call_operand.vmem [shape: f32[2,8,128], index: 0, kind: input, shape index: {}]
  %s1 = inlined_call_operand.vmem [shape: f32[2,8,128], index: 1, kind: input, shape index: {}]
  %s2 = inlined_call_operand.vmem [shape: f32[2,8,128], index: 2, kind: input, shape index: {}]
  %s3 = inlined_call_operand.vmem [shape: f32[2,8,128], index: 3, kind: output, shape index: {}]
  %s4 = sld [smem:[#allocation0]]
  $region45: #{transformer_forward.31} parent=0
    _
  %s6 = ssub.s32 1, %s4
  %s7 = scalar_select 0, %s6, %s4
  loop: start=0, step=1, limit=4
  $region2: #{transformer_forward.31} parent=0 // loop_pre_header
    _
  $region3: #{transformer_forward.31} parent=0 // loop_header
    %s9 = sphi 0, %s13
    %p10 = scmp.ge.s32.totalorder %s9, 4
    %s19 = sphi 0, %s21
    %s22 = sphi 0, %s19
    %s23 = sphi 0, %s22
    %s39 = sphi 0, %s23
    %s45 = sphi 0, %s47
    %s48 = sphi 0, %s45
    %s49 = sphi 0, %s48
    %s65 = sphi 0, %s49
    %s71 = sphi 0, %s73
    %s74 = sphi 0, %s71
    %s75 = sphi 0, %s74
    %s91 = sphi 0, %s75
    %s97 = sphi 0, %s99
    %s100 = sphi 0, %s97
    %s101 = sphi 0, %s100
    %s117 = sphi 0, %s101
  $region4: #{transformer_forward.31} parent=0 // loop_header_branch
    %12 = sbr.rel (%p10) target = $region8
  $region5: #{transformer_forward.31} parent=0 // loop_body
    %s14 = ssub.s32 %s9, 1
    %s15 = ssub.s32 %s9, 2
    %s16 = sadd.s32 %s9, 1
    %s17 = ssub.s32 %s9, %s16
    %p18 = scmp.eq.s32.totalorder %s17, 0
    %s20 = sadd.s32 %s19, 1
    %s21 = scalar_select %p18, %s19, %s20
    %p24 = pneg %p18
    %p25 = scmp.eq.s32.totalorder %s9, 1
    %p26 = por %p24, %p25
    %p27 = scmp.ne.s32.totalorder %s19, %s22
    %p28 = scmp.eq.s32.totalorder %s9, 0
    %p29 = por %p27, %p28
    %p30 = scmp.ne.s32.totalorder %s19, %s22
    %p31 = scmp.eq.s32.totalorder %s14, 1
    %p32 = por %p30, %p31
    %p33 = scmp.ne.s32.totalorder %s22, %s23
    %p34 = scmp.eq.s32.totalorder %s14, 0
    %p35 = por %p33, %p34
    %p36 = scmp.ne.s32.totalorder %s22, %s23
    %p37 = scmp.eq.s32.totalorder %s15, 1
    %p38 = por %p36, %p37
    %p40 = scmp.ne.s32.totalorder %s23, %s39
    %p41 = scmp.eq.s32.totalorder %s15, 0
    %p42 = por %p40, %p41
    %s43 = ssub.s32 %s9, %s16
    %p44 = scmp.eq.s32.totalorder %s43, 0
    %s46 = sadd.s32 %s45, 1
    %s47 = scalar_select %p44, %s45, %s46
    %p50 = pneg %p44
    %p51 = scmp.eq.s32.totalorder %s9, 1
    %p52 = por %p50, %p51
    %p53 = scmp.ne.s32.totalorder %s45, %s48
    %p54 = scmp.eq.s32.totalorder %s9, 0
    %p55 = por %p53, %p54
    %p56 = scmp.ne.s32.totalorder %s45, %s48
    %p57 = scmp.eq.s32.totalorder %s14, 1
    %p58 = por %p56, %p57
    %p59 = scmp.ne.s32.totalorder %s48, %s49
    %p60 = scmp.eq.s32.totalorder %s14, 0
    %p61 = por %p59, %p60
    %p62 = scmp.ne.s32.totalorder %s48, %s49
    %p63 = scmp.eq.s32.totalorder %s15, 1
    %p64 = por %p62, %p63
    %p66 = scmp.ne.s32.totalorder %s49, %s65
    %p67 = scmp.eq.s32.totalorder %s15, 0
    %p68 = por %p66, %p67
    %s69 = ssub.s32 %s9, %s16
    %p70 = scmp.eq.s32.totalorder %s69, 0
    %s72 = sadd.s32 %s71, 1
    %s73 = scalar_select %p70, %s71, %s72
    %p76 = pneg %p70
    %p77 = scmp.eq.s32.totalorder %s9, 1
    %p78 = por %p76, %p77
    %p79 = scmp.ne.s32.totalorder %s71, %s74
    %p80 = scmp.eq.s32.totalorder %s9, 0
    %p81 = por %p79, %p80
    %p82 = scmp.ne.s32.totalorder %s71, %s74
    %p83 = scmp.eq.s32.totalorder %s14, 1
    %p84 = por %p82, %p83
    %p85 = scmp.ne.s32.totalorder %s74, %s75
    %p86 = scmp.eq.s32.totalorder %s14, 0
    %p87 = por %p85, %p86
    %p88 = scmp.ne.s32.totalorder %s74, %s75
    %p89 = scmp.eq.s32.totalorder %s15, 1
    %p90 = por %p88, %p89
    %p92 = scmp.ne.s32.totalorder %s75, %s91
    %p93 = scmp.eq.s32.totalorder %s15, 0
    %p94 = por %p92, %p93
    %s95 = ssub.s32 %s9, %s16
    %p96 = scmp.eq.s32.totalorder %s95, 0
    %s98 = sadd.s32 %s97, 1
    %s99 = scalar_select %p96, %s97, %s98
    %p102 = pneg %p96
    %p103 = scmp.eq.s32.totalorder %s9, 1
    %p104 = por %p102, %p103
    %p105 = scmp.ne.s32.totalorder %s97, %s100
    %p106 = scmp.eq.s32.totalorder %s9, 0
    %p107 = por %p105, %p106
    %p108 = scmp.ne.s32.totalorder %s97, %s100
    %p109 = scmp.eq.s32.totalorder %s14, 1
    %p110 = por %p108, %p109
    %p111 = scmp.ne.s32.totalorder %s100, %s101
    %p112 = scmp.eq.s32.totalorder %s14, 0
    %p113 = por %p111, %p112
    %p114 = scmp.ne.s32.totalorder %s100, %s101
    %p115 = scmp.eq.s32.totalorder %s15, 1
    %p116 = por %p114, %p115
    %p118 = scmp.ne.s32.totalorder %s101, %s117
    %p119 = scmp.eq.s32.totalorder %s15, 0
    %p120 = por %p118, %p119
    %p121 = scmp.le.s32.totalorder 1, %s9
    %p122 = scmp.lt.s32.totalorder %s9, 3
    %p123 = pnand %p121, %p122
    %p124 = pneg %p123
    // Predicated region
    $region9: #{transformer_forward.31} parent=5 // pred_check
      _
    $region10: #{transformer_forward.31} parent=5 // pred_check_branch
      %126 = sbr.rel (%p123) target = $region12
    $region11: #{transformer_forward.31} parent=5 // pred_region
      %s127 = ssub.s32 %s9, 1
    $region12: #{transformer_forward.31} parent=5 // pred_fallthru
      _
    %p128 = scmp.lt.s32.totalorder %s9, 2
    // Predicated region
    $region13: #{transformer_forward.31} parent=5 // pred_check
      %p129 = pneg %p128
    $region14: #{transformer_forward.31} parent=5 // pred_check_branch
      %131 = sbr.rel (%p129) target = $region16
    $region15: #{transformer_forward.31} parent=5 // pred_region
      // Predicated region
      $region17: #{transformer_forward.31} parent=15 // pred_check
        %p132 = pneg %p29
      $region18: #{transformer_forward.31} parent=15 // pred_check_branch
        %134 = sbr.rel (%p132) target = $region20
      $region19: #{transformer_forward.31} parent=15 // pred_region
        %p135 = scmp.lt.s32.totalorder %s9, 1
        %s136 = scalar_select %p135, %s9, 1
        %s137 = smul.addr %s136, 8
        %s138 = scalar_lea.vmem %s0, %s137
      $region20: #{transformer_forward.31} parent=15 // pred_fallthru
        _
      // Predicated region
      $region21: #{transformer_forward.31} parent=15 // pred_check
        %p139 = pneg %p55
      $region22: #{transformer_forward.31} parent=15 // pred_check_branch
        %141 = sbr.rel (%p139) target = $region24
      $region23: #{transformer_forward.31} parent=15 // pred_region
        %p142 = scmp.lt.s32.totalorder %s9, 1
        %s143 = scalar_select %p142, %s9, 1
        %s144 = smul.addr %s143, 8
        %s145 = scalar_lea.vmem %s1, %s144
      $region24: #{transformer_forward.31} parent=15 // pred_fallthru
        _
      // Predicated region
      $region25: #{transformer_forward.31} parent=15 // pred_check
        %p146 = pneg %p81
      $region26: #{transformer_forward.31} parent=15 // pred_check_branch
        %148 = sbr.rel (%p146) target = $region28
      $region27: #{transformer_forward.31} parent=15 // pred_region
        %p149 = scmp.lt.s32.totalorder %s9, 1
        %s150 = scalar_select %p149, %s9, 1
        %s151 = smul.addr %s150, 8
        %s152 = scalar_lea.vmem %s2, %s151
      $region28: #{transformer_forward.31} parent=15 // pred_fallthru
        _
    $region16: #{transformer_forward.31} parent=5 // pred_fallthru
      _
    %p153 = scmp.le.s32.totalorder 1, %s9
    %p154 = scmp.lt.s32.totalorder %s9, 3
    %p155 = pnand %p153, %p154
    %p156 = pneg %p155
    // Predicated region
    $region29: #{transformer_forward.31} parent=5 // pred_check
      _
    $region30: #{transformer_forward.31} parent=5 // pred_check_branch
      %158 = sbr.rel (%p155) target = $region32
    $region31: #{transformer_forward.31} parent=5 // pred_region
      %s159 = ssub.s32 %s9, 1
      %p160 = scmp.lt.s32.totalorder %s14, 1
      %s161 = scalar_select %p160, %s14, 1
      %s162 = smul.addr %s161, 8
      %s163 = scalar_lea.vmem %s0, %s162
      %p164 = pneg %p35
      %p165 = pneg %p32
      %p166 = scmp.lt.s32.totalorder %s14, 1
      %s167 = scalar_select %p166, %s14, 1
      %s168 = smul.addr %s167, 8
      %s169 = scalar_lea.vmem %s1, %s168
      %p170 = pneg %p61
      %p171 = pneg %p58
      %p172 = scmp.lt.s32.totalorder %s14, 1
      %s173 = scalar_select %p172, %s14, 1
      %s174 = smul.addr %s173, 8
      %s175 = scalar_lea.vmem %s2, %s174
      %p176 = pneg %p87
      %p177 = pneg %p84
      %p178 = pneg %p113
      %p179 = pneg %p110
      %p180 = scmp.lt.s32.totalorder %s14, 1
      %s181 = scalar_select %p180, %s14, 1
      %s182 = smul.addr %s181, 8
      %s183 = scalar_lea.vmem %s3, %s182
      %p184 = scmp.lt.s32.totalorder %s14, 1
      %s185 = scalar_select %p184, %s14, 1
      %s186 = smul.addr %s185, 8
      %s187 = scalar_lea.vmem %s0, %s186
      %p188 = scmp.lt.s32.totalorder %s14, 1
      %s189 = scalar_select %p188, %s14, 1
      %s190 = smul.addr %s189, 8
      %s191 = scalar_lea.vmem %s1, %s190
      %p192 = scmp.lt.s32.totalorder %s14, 1
      %s193 = scalar_select %p192, %s14, 1
      %s194 = smul.addr %s193, 8
      %s195 = scalar_lea.vmem %s2, %s194
      %p196 = scmp.lt.s32.totalorder %s14, 1
      %s197 = scalar_select %p196, %s14, 1
      %s198 = smul.addr %s197, 8
      %s199 = scalar_lea.vmem %s3, %s198
      %v201 = vld [vmem:[%s187] sm:$0xff]
      %v202 = vld [vmem:[%s191] sm:$0xff]
      %v203 = vld [vmem:[%s195] sm:$0xff]
      %v204 = vpack.c.bf16 %v201, %v201
      %v205 = vpack.c.bf16 %v202, %v202
      %v206 = vpack.c.bf16 %v203, %v203
      %vm207 = vcmask 261120
      %v209 = vsel %vm207, %v204, 0
      %v212 = vsel %vm207, %v205, 0
      %214 = vmatpush.bf16.xpose.msra.mxu0 0
      %215 = vmatpush.bf16.xpose.msra.mxu0 0
      %216 = vmatpush.bf16.xpose.msra.mxu0 0
      %217 = vmatpush.bf16.xpose.msra.mxu0 0
      %218 = vmatpush.bf16.xpose.msra.mxu0 0
      %219 = vmatpush.bf16.xpose.msra.mxu0 0
      %220 = vmatpush.bf16.xpose.msra.mxu0 0
      %221 = vmatpush.bf16.xpose.msra.mxu0 %v212
      %222 = vmatmul.bf16.gmra.mxu0 %v209
      %v223 = vpop.f32.mrf.mxu0
      %v224 = vadd.f32 0.0, %v223
      %v225 = vpop.f32.mrf.mxu0
      %226 = vdwg.mxu0
      %v227 = vmul.f32 %v224, 0.17677669
      %vm228 = vcmask 64512
      %v229 = vsel %vm228, %v227, -inf
      %230 = vmax.xlane.f32.xlu0 %v229
      %v231 = vpop.xlane.xlu0 %230
      %v232 = vsub.f32 %v227, %v231
      %v233 = vmul.f32 %v232, 1.442695
      %v234 = vpow.pop %v233
      %v235 = vsel %vm228, %v234, 0.0
      %236 = vadd.xlane.f32.xlu0 %v235
      %v237 = vpop.xlane.xlu0 %236
      %v238 = vpack.c.bf16 %v234, %v234
      %v240 = vsel %vm228, %v238, 0
      %vm242 = vcmask 1043456
      %v244 = vsel %vm242, %v206, 0
      %246 = vmatpush.bf16.msra.mxu0 0
      %247 = vmatpush.bf16.msra.mxu0 0
      %248 = vmatpush.bf16.msra.mxu0 0
      %249 = vmatpush.bf16.msra.mxu0 0
      %250 = vmatpush.bf16.msra.mxu0 0
      %251 = vmatpush.bf16.msra.mxu0 0
      %252 = vmatpush.bf16.msra.mxu0 0
      %253 = vmatpush.bf16.msra.mxu0 %v244
      %254 = vmatmul.bf16.gmra.mxu0 %v240
      %v255 = vpop.f32.mrf.mxu0
      %v256 = vadd.f32 0.0, %v255
      %v257 = vpop.f32.mrf.mxu0
      %258 = vdwg.mxu0
      %v259 = vrcp.pop %v237
      %v260 = vmul.f32 %v256, %v259
      %262 = vrot.lane.b32.xlu0 %v204, 96
      %v263 = vpop.permute.xlu0 %262
      %265 = vrot.lane.b32.xlu0 %v205, 96
      %v266 = vpop.permute.xlu0 %265
      %v268 = vsel %vm207, %v263, 0
      %v271 = vsel %vm207, %v266, 0
      %273 = vmatpush.bf16.xpose.msra.mxu0 0
      %274 = vmatpush.bf16.xpose.msra.mxu0 0
      %275 = vmatpush.bf16.xpose.msra.mxu0 0
      %276 = vmatpush.bf16.xpose.msra.mxu0 0
      %277 = vmatpush.bf16.xpose.msra.mxu0 0
      %278 = vmatpush.bf16.xpose.msra.mxu0 0
      %279 = vmatpush.bf16.xpose.msra.mxu0 0
      %280 = vmatpush.bf16.xpose.msra.mxu0 %v271
      %281 = vmatmul.bf16.gmra.mxu0 %v268
      %v282 = vpop.f32.mrf.mxu0
      %v283 = vadd.f32 0.0, %v282
      %v284 = vpop.f32.mrf.mxu0
      %285 = vdwg.mxu0
      %v286 = vmul.f32 %v283, 0.17677669
      %v287 = vsel %vm228, %v286, -inf
      %288 = vmax.xlane.f32.xlu0 %v287
      %v289 = vpop.xlane.xlu0 %288
      %v290 = vsub.f32 %v286, %v289
      %v291 = vmul.f32 %v290, 1.442695
      %v292 = vpow.pop %v291
      %v293 = vsel %vm228, %v292, 0.0
      %294 = vadd.xlane.f32.xlu0 %v293
      %v295 = vpop.xlane.xlu0 %294
      %v296 = vpack.c.bf16 %v292, %v292
      %298 = vrot.lane.b32.xlu0 %v206, 96
      %v299 = vpop.permute.xlu0 %298
      %v301 = vsel %vm228, %v296, 0
      %v304 = vsel %vm242, %v299, 0
      %306 = vmatpush.bf16.msra.mxu0 0
      %307 = vmatpush.bf16.msra.mxu0 0
      %308 = vmatpush.bf16.msra.mxu0 0
      %309 = vmatpush.bf16.msra.mxu0 0
      %310 = vmatpush.bf16.msra.mxu0 0
      %311 = vmatpush.bf16.msra.mxu0 0
      %312 = vmatpush.bf16.msra.mxu0 0
      %313 = vmatpush.bf16.msra.mxu0 %v304
      %314 = vmatmul.bf16.gmra.mxu0 %v301
      %v315 = vpop.f32.mrf.mxu0
      %v316 = vadd.f32 0.0, %v315
      %v317 = vpop.f32.mrf.mxu0
      %318 = vdwg.mxu0
      %v319 = vrcp.pop %v295
      %v320 = vmul.f32 %v316, %v319
      %321 = vrot.lane.b32.xlu0 %v204, 64
      %v322 = vpop.permute.xlu0 %321
      %323 = vrot.lane.b32.xlu0 %v205, 64
      %v324 = vpop.permute.xlu0 %323
      %v326 = vsel %vm207, %v322, 0
      %v329 = vsel %vm207, %v324, 0
      %331 = vmatpush.bf16.xpose.msra.mxu0 0
      %332 = vmatpush.bf16.xpose.msra.mxu0 0
      %333 = vmatpush.bf16.xpose.msra.mxu0 0
      %334 = vmatpush.bf16.xpose.msra.mxu0 0
      %335 = vmatpush.bf16.xpose.msra.mxu0 0
      %336 = vmatpush.bf16.xpose.msra.mxu0 0
      %337 = vmatpush.bf16.xpose.msra.mxu0 0
      %338 = vmatpush.bf16.xpose.msra.mxu0 %v329
      %339 = vmatmul.bf16.gmra.mxu0 %v326
      %v340 = vpop.f32.mrf.mxu0
      %v341 = vadd.f32 0.0, %v340
      %v342 = vpop.f32.mrf.mxu0
      %343 = vdwg.mxu0
      %v344 = vmul.f32 %v341, 0.17677669
      %v345 = vsel %vm228, %v344, -inf
      %346 = vmax.xlane.f32.xlu0 %v345
      %v347 = vpop.xlane.xlu0 %346
      %v348 = vsub.f32 %v344, %v347
      %v349 = vmul.f32 %v348, 1.442695
      %v350 = vpow.pop %v349
      %v351 = vsel %vm228, %v350, 0.0
      %352 = vadd.xlane.f32.xlu0 %v351
      %v353 = vpop.xlane.xlu0 %352
      %v354 = vpack.c.bf16 %v350, %v350
      %355 = vrot.lane.b32.xlu0 %v206, 64
      %v356 = vpop.permute.xlu0 %355
      %v358 = vsel %vm228, %v354, 0
      %v361 = vsel %vm242, %v356, 0
      %363 = vmatpush.bf16.msra.mxu0 0
      %364 = vmatpush.bf16.msra.mxu0 0
      %365 = vmatpush.bf16.msra.mxu0 0
      %366 = vmatpush.bf16.msra.mxu0 0
      %367 = vmatpush.bf16.msra.mxu0 0
      %368 = vmatpush.bf16.msra.mxu0 0
      %369 = vmatpush.bf16.msra.mxu0 0
      %370 = vmatpush.bf16.msra.mxu0 %v361
      %371 = vmatmul.bf16.gmra.mxu0 %v358
      %v372 = vpop.f32.mrf.mxu0
      %v373 = vadd.f32 0.0, %v372
      %v374 = vpop.f32.mrf.mxu0
      %375 = vdwg.mxu0
      %v376 = vrcp.pop %v353
      %v377 = vmul.f32 %v373, %v376
      %378 = vrot.lane.b32.xlu0 %v204, 32
      %v379 = vpop.permute.xlu0 %378
      %380 = vrot.lane.b32.xlu0 %v205, 32
      %v381 = vpop.permute.xlu0 %380
      %v383 = vsel %vm207, %v379, 0
      %v386 = vsel %vm207, %v381, 0
      %388 = vmatpush.bf16.xpose.msra.mxu0 0
      %389 = vmatpush.bf16.xpose.msra.mxu0 0
      %390 = vmatpush.bf16.xpose.msra.mxu0 0
      %391 = vmatpush.bf16.xpose.msra.mxu0 0
      %392 = vmatpush.bf16.xpose.msra.mxu0 0
      %393 = vmatpush.bf16.xpose.msra.mxu0 0
      %394 = vmatpush.bf16.xpose.msra.mxu0 0
      %395 = vmatpush.bf16.xpose.msra.mxu0 %v386
      %396 = vmatmul.bf16.gmra.mxu0 %v383
      %v397 = vpop.f32.mrf.mxu0
      %v398 = vadd.f32 0.0, %v397
      %v399 = vpop.f32.mrf.mxu0
      %400 = vdwg.mxu0
      %v401 = vmul.f32 %v398, 0.17677669
      %v402 = vsel %vm228, %v401, -inf
      %403 = vmax.xlane.f32.xlu0 %v402
      %v404 = vpop.xlane.xlu0 %403
      %v405 = vsub.f32 %v401, %v404
      %v406 = vmul.f32 %v405, 1.442695
      %v407 = vpow.pop %v406
      %v408 = vsel %vm228, %v407, 0.0
      %409 = vadd.xlane.f32.xlu0 %v408
      %v410 = vpop.xlane.xlu0 %409
      %v411 = vpack.c.bf16 %v407, %v407
      %412 = vrot.lane.b32.xlu0 %v206, 32
      %v413 = vpop.permute.xlu0 %412
      %v415 = vsel %vm228, %v411, 0
      %v418 = vsel %vm242, %v413, 0
      %420 = vmatpush.bf16.msra.mxu0 0
      %421 = vmatpush.bf16.msra.mxu0 0
      %422 = vmatpush.bf16.msra.mxu0 0
      %423 = vmatpush.bf16.msra.mxu0 0
      %424 = vmatpush.bf16.msra.mxu0 0
      %425 = vmatpush.bf16.msra.mxu0 0
      %426 = vmatpush.bf16.msra.mxu0 0
      %427 = vmatpush.bf16.msra.mxu0 %v418
      %428 = vmatmul.bf16.gmra.mxu0 %v415
      %v429 = vpop.f32.mrf.mxu0
      %v430 = vadd.f32 0.0, %v429
      %v431 = vpop.f32.mrf.mxu0
      %432 = vdwg.mxu0
      %v433 = vrcp.pop %v410
      %v434 = vmul.f32 %v430, %v433
      %436 = vrot.lane.b32.xlu0 %v320, 32
      %v437 = vpop.permute.xlu0 %436
      %440 = vrot.lane.b32.xlu0 %v377, 64
      %v441 = vpop.permute.xlu0 %440
      %444 = vrot.lane.b32.xlu0 %v434, 96
      %v445 = vpop.permute.xlu0 %444
      %v447 = vsel %vm207, %v260, %v437
      %vm448 = vcmask 523264
      %v449 = vsel %vm448, %v447, %v441
      %vm450 = vcmask 785408
      %v451 = vsel %vm450, %v449, %v445
      %452 = vst [vmem:[%s199] sm:$0xff] %v451
      %p453 = scmp.lt.s32.totalorder %s14, 1
      %s454 = scalar_select %p453, %s14, 1
      %s455 = smul.addr %s454, 8
      %s456 = scalar_lea.vmem %s3, %s455
      // Predicated region
      $region33: #{transformer_forward.31} parent=31 // pred_check
        %p457 = pneg %p110
      $region34: #{transformer_forward.31} parent=31 // pred_check_branch
        %459 = sbr.rel (%p457) target = $region36
      $region35: #{transformer_forward.31} parent=31 // pred_region
        _
      $region36: #{transformer_forward.31} parent=31 // pred_fallthru
        _
    $region32: #{transformer_forward.31} parent=5 // pred_fallthru
      _
    %p460 = scmp.le.s32.totalorder 2, %s9
    // Predicated region
    $region37: #{transformer_forward.31} parent=5 // pred_check
      %p461 = pneg %p460
    $region38: #{transformer_forward.31} parent=5 // pred_check_branch
      %463 = sbr.rel (%p461) target = $region40
    $region39: #{transformer_forward.31} parent=5 // pred_region
      %s464 = ssub.s32 %s9, 2
      // Predicated region
      $region41: #{transformer_forward.31} parent=39 // pred_check
        %p465 = pneg %p116
      $region42: #{transformer_forward.31} parent=39 // pred_check_branch
        %467 = sbr.rel (%p465) target = $region44
      $region43: #{transformer_forward.31} parent=39 // pred_region
        %p468 = scmp.lt.s32.totalorder %s15, 1
        %s469 = scalar_select %p468, %s15, 1
        %s470 = smul.addr %s469, 8
        %s471 = scalar_lea.vmem %s3, %s470
      $region44: #{transformer_forward.31} parent=39 // pred_fallthru
        _
    $region40: #{transformer_forward.31} parent=5 // pred_fallthru
      _
  $region6: #{transformer_forward.31} parent=0 // loop_footer
    %s13 = sadd.s32 1, %s9
  $region7: #{transformer_forward.31} parent=0 // loop_footer_branch
    %8 = sbr.rel target = $region3
  $region8: #{transformer_forward.31} parent=0 // loop_exit
    _

// kernel: transformer_forward.38
$region0: #{transformer_forward.38}
  #allocation0 [shape = 'u32[]', space=smem, size = 0x4, offset = 0x4, fixed_abs, tag = 'smem constant byte address 0x4 - core index']
  #allocation1 [shape = 'u32[72,128]{1,0:T(1,128)}', space=vmem, size = 0x9000, scoped, tag = 'internal scratch']
  %s0 = inlined_call_operand.vmem [shape: f32[16,128], index: 0, kind: input, shape index: {}]
  %s1 = inlined_call_operand.vmem [shape: f32[1,128], index: 1, kind: input, shape index: {}]
  %s2 = inlined_call_operand.vmem [shape: f32[1,128], index: 2, kind: input, shape index: {}]
  %s3 = inlined_call_operand.vmem [shape: f32[16,128], index: 3, kind: output, shape index: {}]
  %s4 = sld [smem:[#allocation0]]
  $region45: #{transformer_forward.38} parent=0
    _
  %s6 = ssub.s32 1, %s4
  %s7 = scalar_select 0, %s6, %s4
  loop: start=0, step=1, limit=4
  $region2: #{transformer_forward.38} parent=0 // loop_pre_header
    _
  $region3: #{transformer_forward.38} parent=0 // loop_header
    %s9 = sphi 0, %s13
    %p10 = scmp.ge.s32.totalorder %s9, 4
    %s19 = sphi 0, %s21
    %s22 = sphi 0, %s19
    %s23 = sphi 0, %s22
    %s39 = sphi 0, %s23
    %s43 = sphi 0, %s43
    %s45 = sphi 0, %s43
    %s46 = sphi 0, %s45
    %s60 = sphi 0, %s46
    %s64 = sphi 0, %s64
    %s66 = sphi 0, %s64
    %s67 = sphi 0, %s66
    %s81 = sphi 0, %s67
    %s87 = sphi 0, %s89
    %s90 = sphi 0, %s87
    %s91 = sphi 0, %s90
    %s107 = sphi 0, %s91
  $region4: #{transformer_forward.38} parent=0 // loop_header_branch
    %12 = sbr.rel (%p10) target = $region8
  $region5: #{transformer_forward.38} parent=0 // loop_body
    %s14 = ssub.s32 %s9, 1
    %s15 = ssub.s32 %s9, 2
    %s16 = sadd.s32 %s9, 1
    %s17 = ssub.s32 %s9, %s16
    %p18 = scmp.eq.s32.totalorder %s17, 0
    %s20 = sadd.s32 %s19, 1
    %s21 = scalar_select %p18, %s19, %s20
    %p24 = pneg %p18
    %p25 = scmp.eq.s32.totalorder %s9, 1
    %p26 = por %p24, %p25
    %p27 = scmp.ne.s32.totalorder %s19, %s22
    %p28 = scmp.eq.s32.totalorder %s9, 0
    %p29 = por %p27, %p28
    %p30 = scmp.ne.s32.totalorder %s19, %s22
    %p31 = scmp.eq.s32.totalorder %s14, 1
    %p32 = por %p30, %p31
    %p33 = scmp.ne.s32.totalorder %s22, %s23
    %p34 = scmp.eq.s32.totalorder %s14, 0
    %p35 = por %p33, %p34
    %p36 = scmp.ne.s32.totalorder %s22, %s23
    %p37 = scmp.eq.s32.totalorder %s15, 1
    %p38 = por %p36, %p37
    %p40 = scmp.ne.s32.totalorder %s23, %s39
    %p41 = scmp.eq.s32.totalorder %s15, 0
    %p42 = por %p40, %p41
    %s44 = sadd.s32 %s43, 1
    %p47 = scmp.eq.s32.totalorder %s9, 1
    %p48 = scmp.ne.s32.totalorder %s43, %s45
    %p49 = scmp.eq.s32.totalorder %s9, 0
    %p50 = por %p48, %p49
    %p51 = scmp.ne.s32.totalorder %s43, %s45
    %p52 = scmp.eq.s32.totalorder %s14, 1
    %p53 = por %p51, %p52
    %p54 = scmp.ne.s32.totalorder %s45, %s46
    %p55 = scmp.eq.s32.totalorder %s14, 0
    %p56 = por %p54, %p55
    %p57 = scmp.ne.s32.totalorder %s45, %s46
    %p58 = scmp.eq.s32.totalorder %s15, 1
    %p59 = por %p57, %p58
    %p61 = scmp.ne.s32.totalorder %s46, %s60
    %p62 = scmp.eq.s32.totalorder %s15, 0
    %p63 = por %p61, %p62
    %s65 = sadd.s32 %s64, 1
    %p68 = scmp.eq.s32.totalorder %s9, 1
    %p69 = scmp.ne.s32.totalorder %s64, %s66
    %p70 = scmp.eq.s32.totalorder %s9, 0
    %p71 = por %p69, %p70
    %p72 = scmp.ne.s32.totalorder %s64, %s66
    %p73 = scmp.eq.s32.totalorder %s14, 1
    %p74 = por %p72, %p73
    %p75 = scmp.ne.s32.totalorder %s66, %s67
    %p76 = scmp.eq.s32.totalorder %s14, 0
    %p77 = por %p75, %p76
    %p78 = scmp.ne.s32.totalorder %s66, %s67
    %p79 = scmp.eq.s32.totalorder %s15, 1
    %p80 = por %p78, %p79
    %p82 = scmp.ne.s32.totalorder %s67, %s81
    %p83 = scmp.eq.s32.totalorder %s15, 0
    %p84 = por %p82, %p83
    %s85 = ssub.s32 %s9, %s16
    %p86 = scmp.eq.s32.totalorder %s85, 0
    %s88 = sadd.s32 %s87, 1
    %s89 = scalar_select %p86, %s87, %s88
    %p92 = pneg %p86
    %p93 = scmp.eq.s32.totalorder %s9, 1
    %p94 = por %p92, %p93
    %p95 = scmp.ne.s32.totalorder %s87, %s90
    %p96 = scmp.eq.s32.totalorder %s9, 0
    %p97 = por %p95, %p96
    %p98 = scmp.ne.s32.totalorder %s87, %s90
    %p99 = scmp.eq.s32.totalorder %s14, 1
    %p100 = por %p98, %p99
    %p101 = scmp.ne.s32.totalorder %s90, %s91
    %p102 = scmp.eq.s32.totalorder %s14, 0
    %p103 = por %p101, %p102
    %p104 = scmp.ne.s32.totalorder %s90, %s91
    %p105 = scmp.eq.s32.totalorder %s15, 1
    %p106 = por %p104, %p105
    %p108 = scmp.ne.s32.totalorder %s91, %s107
    %p109 = scmp.eq.s32.totalorder %s15, 0
    %p110 = por %p108, %p109
    %p111 = scmp.le.s32.totalorder 1, %s9
    %p112 = scmp.lt.s32.totalorder %s9, 3
    %p113 = pnand %p111, %p112
    %p114 = pneg %p113
    // Predicated region
    $region9: #{transformer_forward.38} parent=5 // pred_check
      _
    $region10: #{transformer_forward.38} parent=5 // pred_check_branch
      %116 = sbr.rel (%p113) target = $region12
    $region11: #{transformer_forward.38} parent=5 // pred_region
      %s117 = ssub.s32 %s9, 1
      // Predicated region
      $region13: #{transformer_forward.38} parent=11 // pred_check
        %p118 = pneg %p56
      $region14: #{transformer_forward.38} parent=11 // pred_check_branch
        %120 = sbr.rel (%p118) target = $region16
      $region15: #{transformer_forward.38} parent=11 // pred_region
        _
      $region16: #{transformer_forward.38} parent=11 // pred_fallthru
        _
      // Predicated region
      $region17: #{transformer_forward.38} parent=11 // pred_check
        %p121 = pneg %p77
      $region18: #{transformer_forward.38} parent=11 // pred_check_branch
        %123 = sbr.rel (%p121) target = $region20
      $region19: #{transformer_forward.38} parent=11 // pred_region
        _
      $region20: #{transformer_forward.38} parent=11 // pred_fallthru
        _
    $region12: #{transformer_forward.38} parent=5 // pred_fallthru
      _
    %p124 = scmp.lt.s32.totalorder %s9, 2
    // Predicated region
    $region21: #{transformer_forward.38} parent=5 // pred_check
      %p125 = pneg %p124
    $region22: #{transformer_forward.38} parent=5 // pred_check_branch
      %127 = sbr.rel (%p125) target = $region24
    $region23: #{transformer_forward.38} parent=5 // pred_region
      // Predicated region
      $region25: #{transformer_forward.38} parent=23 // pred_check
        %p128 = pneg %p29
      $region26: #{transformer_forward.38} parent=23 // pred_check_branch
        %130 = sbr.rel (%p128) target = $region28
      $region27: #{transformer_forward.38} parent=23 // pred_region
        %p131 = scmp.lt.s32.totalorder %s9, 1
        %s132 = scalar_select %p131, %s9, 1
        %s133 = smul.addr %s132, 8
        %s134 = scalar_lea.vmem %s0, %s133
      $region28: #{transformer_forward.38} parent=23 // pred_fallthru
        _
    $region24: #{transformer_forward.38} parent=5 // pred_fallthru
      _
    %p135 = scmp.le.s32.totalorder 1, %s9
    %p136 = scmp.lt.s32.totalorder %s9, 3
    %p137 = pnand %p135, %p136
    %p138 = pneg %p137
    // Predicated region
    $region29: #{transformer_forward.38} parent=5 // pred_check
      _
    $region30: #{transformer_forward.38} parent=5 // pred_check_branch
      %140 = sbr.rel (%p137) target = $region32
    $region31: #{transformer_forward.38} parent=5 // pred_region
      %s141 = ssub.s32 %s9, 1
      %p142 = scmp.lt.s32.totalorder %s14, 1
      %s143 = scalar_select %p142, %s14, 1
      %s144 = smul.addr %s143, 8
      %s145 = scalar_lea.vmem %s0, %s144
      %p146 = pneg %p35
      %p147 = pneg %p32
      %p148 = pneg %p56
      %p149 = pneg %p53
      %p150 = pneg %p77
      %p151 = pneg %p74
      %p152 = pneg %p103
      %p153 = pneg %p100
      %p154 = scmp.lt.s32.totalorder %s14, 1
      %s155 = scalar_select %p154, %s14, 1
      %s156 = smul.addr %s155, 8
      %s157 = scalar_lea.vmem %s3, %s156
      %p158 = scmp.lt.s32.totalorder %s14, 1
      %s159 = scalar_select %p158, %s14, 1
      %s160 = smul.addr %s159, 8
      %s161 = scalar_lea.vmem %s0, %s160
      %p162 = scmp.lt.s32.totalorder %s14, 1
      %s163 = scalar_select %p162, %s14, 1
      %s164 = smul.addr %s163, 8
      %s165 = scalar_lea.vmem %s3, %s164
      %v166 = vld [vmem:[%s161] sm:$0xff]
      %v167 = vld [vmem:[%s1] sm:$0x1]
      %v168 = vld [vmem:[%s2] sm:$0x1]
      %169 = vadd.xlane.f32.xlu0 %v166
      %v170 = vpop.xlane.xlu0 %169
      %v171 = vrcp.pop 128.0
      %v172 = vmul.f32 128.0, %v171
      %v173 = vsub.f32 1.0, %v172
      %v174 = vmul.f32 %v171, %v173
      %v175 = vadd.f32 %v171, %v174
      %vm176 = vweird.f32 %v171
      %v177 = vsel %vm176, %v171, %v175
      %v178 = vmul.f32 %v170, %v177
      %v179 = vsub.f32 %v166, %v178
      %v180 = vmul.f32 %v179, %v179
      %181 = vadd.xlane.f32.xlu0 %v180
      %v182 = vpop.xlane.xlu0 %181
      %v183 = vmul.f32 %v182, %v177
      %v184 = vadd.f32 %v183, 1e-05
      %v185 = vrsqrt.pop %v184
      %v186 = vmul.f32 %v185, %v184
      %v187 = vmul.f32 %v186, %v185
      %v188 = vmul.f32 0.5, %v187
      %v189 = vsub.f32 1.5, %v188
      %v190 = vmul.f32 %v185, %v189
      %vm191 = vweird.f32 %v184
      %vm192 = vweird.f32 %v185
      %vm193 = vmor %vm191, %vm192
      %v194 = vsel %vm193, %v185, %v190
      %v195 = vmul.f32 %v179, %v194
      %v197 = vperm.slane %v167, 0
      %v199 = vmul.f32 %v195, %v197
      %v201 = vperm.slane %v168, 0
      %v203 = vadd.f32 %v199, %v201
      %204 = vst [vmem:[%s165] sm:$0xff] %v203
      %p205 = scmp.lt.s32.totalorder %s14, 1
      %s206 = scalar_select %p205, %s14, 1
      %s207 = smul.addr %s206, 8
      %s208 = scalar_lea.vmem %s3, %s207
      // Predicated region
      $region33: #{transformer_forward.38} parent=31 // pred_check
        %p209 = pneg %p100
      $region34: #{transformer_forward.38} parent=31 // pred_check_branch
        %211 = sbr.rel (%p209) target = $region36
      $region35: #{transformer_forward.38} parent=31 // pred_region
        _
      $region36: #{transformer_forward.38} parent=31 // pred_fallthru
        _
    $region32: #{transformer_forward.38} parent=5 // pred_fallthru
      _
    %p212 = scmp.le.s32.totalorder 2, %s9
    // Predicated region
    $region37: #{transformer_forward.38} parent=5 // pred_check
      %p213 = pneg %p212
    $region38: #{transformer_forward.38} parent=5 // pred_check_branch
      %215 = sbr.rel (%p213) target = $region40
    $region39: #{transformer_forward.38} parent=5 // pred_region
      %s216 = ssub.s32 %s9, 2
      // Predicated region
      $region41: #{transformer_forward.38} parent=39 // pred_check
        %p217 = pneg %p106
      $region42: #{transformer_forward.38} parent=39 // pred_check_branch
        %219 = sbr.rel (%p217) target = $region44
      $region43: #{transformer_forward.38} parent=39 // pred_region
        %p220 = scmp.lt.s32.totalorder %s15, 1
        %s221 = scalar_select %p220, %s15, 1
        %s222 = smul.addr %s221, 8
        %s223 = scalar_lea.vmem %s3, %s222
      $region44: #{transformer_forward.38} parent=39 // pred_fallthru
        _
    $region40: #{transformer_forward.38} parent=5 // pred_fallthru
      _
  $region6: #{transformer_forward.38} parent=0 // loop_footer
    %s13 = sadd.s32 1, %s9
  $region7: #{transformer_forward.38} parent=0 // loop_footer_branch
    %8 = sbr.rel target = $region3
  $region8: #{transformer_forward.38} parent=0 // loop_exit
    _

// kernel: transformer_forward.33
$region0: #{transformer_forward.33}
  #allocation0 [shape = 'u32[]', space=smem, size = 0x4, offset = 0x4, fixed_abs, tag = 'smem constant byte address 0x4 - core index']
  #allocation1 [shape = 'u32[72,128]{1,0:T(1,128)}', space=vmem, size = 0x9000, scoped, tag = 'internal scratch']
  %s0 = inlined_call_operand.vmem [shape: f32[16,128], index: 0, kind: input, shape index: {}]
  %s1 = inlined_call_operand.vmem [shape: bf16[128,256], index: 1, kind: input, shape index: {}]
  %s2 = inlined_call_operand.vmem [shape: f32[1,256], index: 2, kind: input, shape index: {}]
  %s3 = inlined_call_operand.vmem [shape: bf16[256,128], index: 3, kind: input, shape index: {}]
  %s4 = inlined_call_operand.vmem [shape: f32[1,128], index: 4, kind: input, shape index: {}]
  %s5 = inlined_call_operand.vmem [shape: f32[1,128], index: 5, kind: input, shape index: {}]
  %s6 = inlined_call_operand.vmem [shape: f32[1,128], index: 6, kind: input, shape index: {}]
  %s7 = inlined_call_operand.vmem [shape: f32[16,128], index: 7, kind: output, shape index: {}]
  %s8 = sld [smem:[#allocation0]]
  $region61: #{transformer_forward.33} parent=0
    _
  %s10 = ssub.s32 1, %s8
  %s11 = scalar_select 0, %s10, %s8
  loop: start=0, step=1, limit=4
  $region2: #{transformer_forward.33} parent=0 // loop_pre_header
    _
  $region3: #{transformer_forward.33} parent=0 // loop_header
    %s13 = sphi 0, %s17
    %p14 = scmp.ge.s32.totalorder %s13, 4
    %s23 = sphi 0, %s25
    %s26 = sphi 0, %s23
    %s27 = sphi 0, %s26
    %s43 = sphi 0, %s27
    %s47 = sphi 0, %s47
    %s49 = sphi 0, %s47
    %s50 = sphi 0, %s49
    %s64 = sphi 0, %s50
    %s68 = sphi 0, %s68
    %s70 = sphi 0, %s68
    %s71 = sphi 0, %s70
    %s85 = sphi 0, %s71
    %s89 = sphi 0, %s89
    %s91 = sphi 0, %s89
    %s92 = sphi 0, %s91
    %s106 = sphi 0, %s92
    %s110 = sphi 0, %s110
    %s112 = sphi 0, %s110
    %s113 = sphi 0, %s112
    %s127 = sphi 0, %s113
    %s131 = sphi 0, %s131
    %s133 = sphi 0, %s131
    %s134 = sphi 0, %s133
    %s148 = sphi 0, %s134
    %s152 = sphi 0, %s152
    %s154 = sphi 0, %s152
    %s155 = sphi 0, %s154
    %s169 = sphi 0, %s155
    %s175 = sphi 0, %s177
    %s178 = sphi 0, %s175
    %s179 = sphi 0, %s178
    %s195 = sphi 0, %s179
  $region4: #{transformer_forward.33} parent=0 // loop_header_branch
    %16 = sbr.rel (%p14) target = $region8
  $region5: #{transformer_forward.33} parent=0 // loop_body
    %s18 = ssub.s32 %s13, 1
    %s19 = ssub.s32 %s13, 2
    %s20 = sadd.s32 %s13, 1
    %s21 = ssub.s32 %s13, %s20
    %p22 = scmp.eq.s32.totalorder %s21, 0
    %s24 = sadd.s32 %s23, 1
    %s25 = scalar_select %p22, %s23, %s24
    %p28 = pneg %p22
    %p29 = scmp.eq.s32.totalorder %s13, 1
    %p30 = por %p28, %p29
    %p31 = scmp.ne.s32.totalorder %s23, %s26
    %p32 = scmp.eq.s32.totalorder %s13, 0
    %p33 = por %p31, %p32
    %p34 = scmp.ne.s32.totalorder %s23, %s26
    %p35 = scmp.eq.s32.totalorder %s18, 1
    %p36 = por %p34, %p35
    %p37 = scmp.ne.s32.totalorder %s26, %s27
    %p38 = scmp.eq.s32.totalorder %s18, 0
    %p39 = por %p37, %p38
    %p40 = scmp.ne.s32.totalorder %s26, %s27
    %p41 = scmp.eq.s32.totalorder %s19, 1
    %p42 = por %p40, %p41
    %p44 = scmp.ne.s32.totalorder %s27, %s43
    %p45 = scmp.eq.s32.totalorder %s19, 0
    %p46 = por %p44, %p45
    %s48 = sadd.s32 %s47, 1
    %p51 = scmp.eq.s32.totalorder %s13, 1
    %p52 = scmp.ne.s32.totalorder %s47, %s49
    %p53 = scmp.eq.s32.totalorder %s13, 0
    %p54 = por %p52, %p53
    %p55 = scmp.ne.s32.totalorder %s47, %s49
    %p56 = scmp.eq.s32.totalorder %s18, 1
    %p57 = por %p55, %p56
    %p58 = scmp.ne.s32.totalorder %s49, %s50
    %p59 = scmp.eq.s32.totalorder %s18, 0
    %p60 = por %p58, %p59
    %p61 = scmp.ne.s32.totalorder %s49, %s50
    %p62 = scmp.eq.s32.totalorder %s19, 1
    %p63 = por %p61, %p62
    %p65 = scmp.ne.s32.totalorder %s50, %s64
    %p66 = scmp.eq.s32.totalorder %s19, 0
    %p67 = por %p65, %p66
    %s69 = sadd.s32 %s68, 1
    %p72 = scmp.eq.s32.totalorder %s13, 1
    %p73 = scmp.ne.s32.totalorder %s68, %s70
    %p74 = scmp.eq.s32.totalorder %s13, 0
    %p75 = por %p73, %p74
    %p76 = scmp.ne.s32.totalorder %s68, %s70
    %p77 = scmp.eq.s32.totalorder %s18, 1
    %p78 = por %p76, %p77
    %p79 = scmp.ne.s32.totalorder %s70, %s71
    %p80 = scmp.eq.s32.totalorder %s18, 0
    %p81 = por %p79, %p80
    %p82 = scmp.ne.s32.totalorder %s70, %s71
    %p83 = scmp.eq.s32.totalorder %s19, 1
    %p84 = por %p82, %p83
    %p86 = scmp.ne.s32.totalorder %s71, %s85
    %p87 = scmp.eq.s32.totalorder %s19, 0
    %p88 = por %p86, %p87
    %s90 = sadd.s32 %s89, 1
    %p93 = scmp.eq.s32.totalorder %s13, 1
    %p94 = scmp.ne.s32.totalorder %s89, %s91
    %p95 = scmp.eq.s32.totalorder %s13, 0
    %p96 = por %p94, %p95
    %p97 = scmp.ne.s32.totalorder %s89, %s91
    %p98 = scmp.eq.s32.totalorder %s18, 1
    %p99 = por %p97, %p98
    %p100 = scmp.ne.s32.totalorder %s91, %s92
    %p101 = scmp.eq.s32.totalorder %s18, 0
    %p102 = por %p100, %p101
    %p103 = scmp.ne.s32.totalorder %s91, %s92
    %p104 = scmp.eq.s32.totalorder %s19, 1
    %p105 = por %p103, %p104
    %p107 = scmp.ne.s32.totalorder %s92, %s106
    %p108 = scmp.eq.s32.totalorder %s19, 0
    %p109 = por %p107, %p108
    %s111 = sadd.s32 %s110, 1
    %p114 = scmp.eq.s32.totalorder %s13, 1
    %p115 = scmp.ne.s32.totalorder %s110, %s112
    %p116 = scmp.eq.s32.totalorder %s13, 0
    %p117 = por %p115, %p116
    %p118 = scmp.ne.s32.totalorder %s110, %s112
    %p119 = scmp.eq.s32.totalorder %s18, 1
    %p120 = por %p118, %p119
    %p121 = scmp.ne.s32.totalorder %s112, %s113
    %p122 = scmp.eq.s32.totalorder %s18, 0
    %p123 = por %p121, %p122
    %p124 = scmp.ne.s32.totalorder %s112, %s113
    %p125 = scmp.eq.s32.totalorder %s19, 1
    %p126 = por %p124, %p125
    %p128 = scmp.ne.s32.totalorder %s113, %s127
    %p129 = scmp.eq.s32.totalorder %s19, 0
    %p130 = por %p128, %p129
    %s132 = sadd.s32 %s131, 1
    %p135 = scmp.eq.s32.totalorder %s13, 1
    %p136 = scmp.ne.s32.totalorder %s131, %s133
    %p137 = scmp.eq.s32.totalorder %s13, 0
    %p138 = por %p136, %p137
    %p139 = scmp.ne.s32.totalorder %s131, %s133
    %p140 = scmp.eq.s32.totalorder %s18, 1
    %p141 = por %p139, %p140
    %p142 = scmp.ne.s32.totalorder %s133, %s134
    %p143 = scmp.eq.s32.totalorder %s18, 0
    %p144 = por %p142, %p143
    %p145 = scmp.ne.s32.totalorder %s133, %s134
    %p146 = scmp.eq.s32.totalorder %s19, 1
    %p147 = por %p145, %p146
    %p149 = scmp.ne.s32.totalorder %s134, %s148
    %p150 = scmp.eq.s32.totalorder %s19, 0
    %p151 = por %p149, %p150
    %s153 = sadd.s32 %s152, 1
    %p156 = scmp.eq.s32.totalorder %s13, 1
    %p157 = scmp.ne.s32.totalorder %s152, %s154
    %p158 = scmp.eq.s32.totalorder %s13, 0
    %p159 = por %p157, %p158
    %p160 = scmp.ne.s32.totalorder %s152, %s154
    %p161 = scmp.eq.s32.totalorder %s18, 1
    %p162 = por %p160, %p161
    %p163 = scmp.ne.s32.totalorder %s154, %s155
    %p164 = scmp.eq.s32.totalorder %s18, 0
    %p165 = por %p163, %p164
    %p166 = scmp.ne.s32.totalorder %s154, %s155
    %p167 = scmp.eq.s32.totalorder %s19, 1
    %p168 = por %p166, %p167
    %p170 = scmp.ne.s32.totalorder %s155, %s169
    %p171 = scmp.eq.s32.totalorder %s19, 0
    %p172 = por %p170, %p171
    %s173 = ssub.s32 %s13, %s20
    %p174 = scmp.eq.s32.totalorder %s173, 0
    %s176 = sadd.s32 %s175, 1
    %s177 = scalar_select %p174, %s175, %s176
    %p180 = pneg %p174
    %p181 = scmp.eq.s32.totalorder %s13, 1
    %p182 = por %p180, %p181
    %p183 = scmp.ne.s32.totalorder %s175, %s178
    %p184 = scmp.eq.s32.totalorder %s13, 0
    %p185 = por %p183, %p184
    %p186 = scmp.ne.s32.totalorder %s175, %s178
    %p187 = scmp.eq.s32.totalorder %s18, 1
    %p188 = por %p186, %p187
    %p189 = scmp.ne.s32.totalorder %s178, %s179
    %p190 = scmp.eq.s32.totalorder %s18, 0
    %p191 = por %p189, %p190
    %p192 = scmp.ne.s32.totalorder %s178, %s179
    %p193 = scmp.eq.s32.totalorder %s19, 1
    %p194 = por %p192, %p193
    %p196 = scmp.ne.s32.totalorder %s179, %s195
    %p197 = scmp.eq.s32.totalorder %s19, 0
    %p198 = por %p196, %p197
    %p199 = scmp.le.s32.totalorder 1, %s13
    %p200 = scmp.lt.s32.totalorder %s13, 3
    %p201 = pnand %p199, %p200
    %p202 = pneg %p201
    // Predicated region
    $region9: #{transformer_forward.33} parent=5 // pred_check
      _
    $region10: #{transformer_forward.33} parent=5 // pred_check_branch
      %204 = sbr.rel (%p201) target = $region12
    $region11: #{transformer_forward.33} parent=5 // pred_region
      %s205 = ssub.s32 %s13, 1
      // Predicated region
      $region13: #{transformer_forward.33} parent=11 // pred_check
        %p206 = pneg %p60
      $region14: #{transformer_forward.33} parent=11 // pred_check_branch
        %208 = sbr.rel (%p206) target = $region16
      $region15: #{transformer_forward.33} parent=11 // pred_region
        _
      $region16: #{transformer_forward.33} parent=11 // pred_fallthru
        _
      // Predicated region
      $region17: #{transformer_forward.33} parent=11 // pred_check
        %p209 = pneg %p81
      $region18: #{transformer_forward.33} parent=11 // pred_check_branch
        %211 = sbr.rel (%p209) target = $region20
      $region19: #{transformer_forward.33} parent=11 // pred_region
        _
      $region20: #{transformer_forward.33} parent=11 // pred_fallthru
        _
      // Predicated region
      $region21: #{transformer_forward.33} parent=11 // pred_check
        %p212 = pneg %p102
      $region22: #{transformer_forward.33} parent=11 // pred_check_branch
        %214 = sbr.rel (%p212) target = $region24
      $region23: #{transformer_forward.33} parent=11 // pred_region
        _
      $region24: #{transformer_forward.33} parent=11 // pred_fallthru
        _
      // Predicated region
      $region25: #{transformer_forward.33} parent=11 // pred_check
        %p215 = pneg %p123
      $region26: #{transformer_forward.33} parent=11 // pred_check_branch
        %217 = sbr.rel (%p215) target = $region28
      $region27: #{transformer_forward.33} parent=11 // pred_region
        _
      $region28: #{transformer_forward.33} parent=11 // pred_fallthru
        _
      // Predicated region
      $region29: #{transformer_forward.33} parent=11 // pred_check
        %p218 = pneg %p144
      $region30: #{transformer_forward.33} parent=11 // pred_check_branch
        %220 = sbr.rel (%p218) target = $region32
      $region31: #{transformer_forward.33} parent=11 // pred_region
        _
      $region32: #{transformer_forward.33} parent=11 // pred_fallthru
        _
      // Predicated region
      $region33: #{transformer_forward.33} parent=11 // pred_check
        %p221 = pneg %p165
      $region34: #{transformer_forward.33} parent=11 // pred_check_branch
        %223 = sbr.rel (%p221) target = $region36
      $region35: #{transformer_forward.33} parent=11 // pred_region
        _
      $region36: #{transformer_forward.33} parent=11 // pred_fallthru
        _
    $region12: #{transformer_forward.33} parent=5 // pred_fallthru
      _
    %p224 = scmp.lt.s32.totalorder %s13, 2
    // Predicated region
    $region37: #{transformer_forward.33} parent=5 // pred_check
      %p225 = pneg %p224
    $region38: #{transformer_forward.33} parent=5 // pred_check_branch
      %227 = sbr.rel (%p225) target = $region40
    $region39: #{transformer_forward.33} parent=5 // pred_region
      // Predicated region
      $region41: #{transformer_forward.33} parent=39 // pred_check
        %p228 = pneg %p33
      $region42: #{transformer_forward.33} parent=39 // pred_check_branch
        %230 = sbr.rel (%p228) target = $region44
      $region43: #{transformer_forward.33} parent=39 // pred_region
        %p231 = scmp.lt.s32.totalorder %s13, 1
        %s232 = scalar_select %p231, %s13, 1
        %s233 = smul.addr %s232, 8
        %s234 = scalar_lea.vmem %s0, %s233
      $region44: #{transformer_forward.33} parent=39 // pred_fallthru
        _
    $region40: #{transformer_forward.33} parent=5 // pred_fallthru
      _
    %p235 = scmp.le.s32.totalorder 1, %s13
    %p236 = scmp.lt.s32.totalorder %s13, 3
    %p237 = pnand %p235, %p236
    %p238 = pneg %p237
    // Predicated region
    $region45: #{transformer_forward.33} parent=5 // pred_check
      _
    $region46: #{transformer_forward.33} parent=5 // pred_check_branch
      %240 = sbr.rel (%p237) target = $region48
    $region47: #{transformer_forward.33} parent=5 // pred_region
      %s241 = ssub.s32 %s13, 1
      %p242 = scmp.lt.s32.totalorder %s18, 1
      %s243 = scalar_select %p242, %s18, 1
      %s244 = smul.addr %s243, 8
      %s245 = scalar_lea.vmem %s0, %s244
      %p246 = pneg %p39
      %p247 = pneg %p36
      %p248 = pneg %p60
      %p249 = pneg %p57
      %p250 = pneg %p81
      %p251 = pneg %p78
      %p252 = pneg %p102
      %p253 = pneg %p99
      %p254 = pneg %p123
      %p255 = pneg %p120
      %p256 = pneg %p144
      %p257 = pneg %p141
      %p258 = pneg %p165
      %p259 = pneg %p162
      %p260 = pneg %p191
      %p261 = pneg %p188
      %p262 = scmp.lt.s32.totalorder %s18, 1
      %s263 = scalar_select %p262, %s18, 1
      %s264 = smul.addr %s263, 8
      %s265 = scalar_lea.vmem %s7, %s264
      %p266 = scmp.lt.s32.totalorder %s18, 1
      %s267 = scalar_select %p266, %s18, 1
      %s268 = smul.addr %s267, 8
      %s269 = scalar_lea.vmem %s0, %s268
      %p270 = scmp.lt.s32.totalorder %s18, 1
      %s271 = scalar_select %p270, %s18, 1
      %s272 = smul.addr %s271, 8
      %s273 = scalar_lea.vmem %s7, %s272
      %v274 = vld [vmem:[%s269] sm:$0xff]
      %v275 = vpack.c.bf16 %v274, %v274
      %v276 = vld [vmem:[%s1] sm:$0xff]
      %v277 = vld [vmem:[%s1 + $0x8] sm:$0xff]
      %v278 = vld [vmem:[%s1 + $0x10] sm:$0xff]
      %v279 = vld [vmem:[%s1 + $0x18] sm:$0xff]
      %v280 = vld [vmem:[%s1 + $0x20] sm:$0xff]
      %v281 = vld [vmem:[%s1 + $0x28] sm:$0xff]
      %v282 = vld [vmem:[%s1 + $0x30] sm:$0xff]
      %v283 = vld [vmem:[%s1 + $0x38] sm:$0xff]
      %v284 = vld [vmem:[%s1 + $0x40] sm:$0xff]
      %v285 = vld [vmem:[%s1 + $0x48] sm:$0xff]
      %v286 = vld [vmem:[%s1 + $0x50] sm:$0xff]
      %v287 = vld [vmem:[%s1 + $0x58] sm:$0xff]
      %v288 = vld [vmem:[%s1 + $0x60] sm:$0xff]
      %v289 = vld [vmem:[%s1 + $0x68] sm:$0xff]
      %v290 = vld [vmem:[%s1 + $0x70] sm:$0xff]
      %v291 = vld [vmem:[%s1 + $0x78] sm:$0xff]
      %v292 = vld [vmem:[%s2] sm:$0x3]
      %v294 = vperm.slane %v292, 0
      %v295 = vperm.slane %v292, 1
      %v314 = vunpack.c.l.b16 %v276
      %v315 = vunpack.c.h.b16 %v276
      %v316 = vunpack.c.l.b16 %v277
      %v317 = vunpack.c.h.b16 %v277
      %v318 = vunpack.c.l.b16 %v278
      %v319 = vunpack.c.h.b16 %v278
      %v320 = vunpack.c.l.b16 %v279
      %v321 = vunpack.c.h.b16 %v279
      %v322 = vunpack.c.l.b16 %v280
      %v323 = vunpack.c.h.b16 %v280
      %v324 = vunpack.c.l.b16 %v281
      %v325 = vunpack.c.h.b16 %v281
      %v326 = vunpack.c.l.b16 %v282
      %v327 = vunpack.c.h.b16 %v282
      %v328 = vunpack.c.l.b16 %v283
      %v329 = vunpack.c.h.b16 %v283
      %v330 = vunpack.c.l.b16 %v284
      %v331 = vunpack.c.h.b16 %v284
      %v332 = vunpack.c.l.b16 %v285
      %v333 = vunpack.c.h.b16 %v285
      %v334 = vunpack.c.l.b16 %v286
      %v335 = vunpack.c.h.b16 %v286
      %v336 = vunpack.c.l.b16 %v287
      %v337 = vunpack.c.h.b16 %v287
      %v338 = vunpack.c.l.b16 %v288
      %v339 = vunpack.c.h.b16 %v288
      %v340 = vunpack.c.l.b16 %v289
      %v341 = vunpack.c.h.b16 %v289
      %v342 = vunpack.c.l.b16 %v290
      %v343 = vunpack.c.h.b16 %v290
      %v344 = vunpack.c.l.b16 %v291
      %v345 = vunpack.c.h.b16 %v291
      %v346 = vpack.c.b16 %v316, %v314
      %v347 = vpack.c.b16 %v317, %v315
      %v348 = vpack.c.b16 %v320, %v318
      %v349 = vpack.c.b16 %v321, %v319
      %v350 = vpack.c.b16 %v324, %v322
      %v351 = vpack.c.b16 %v325, %v323
      %v352 = vpack.c.b16 %v328, %v326
      %v353 = vpack.c.b16 %v329, %v327
      %v354 = vpack.c.b16 %v332, %v330
      %v355 = vpack.c.b16 %v333, %v331
      %v356 = vpack.c.b16 %v336, %v334
      %v357 = vpack.c.b16 %v337, %v335
      %v358 = vpack.c.b16 %v340, %v338
      %v359 = vpack.c.b16 %v341, %v339
      %v360 = vpack.c.b16 %v344, %v342
      %v361 = vpack.c.b16 %v345, %v343
      %378 = vmatpush.bf16.msra.mxu0 %v360
      %379 = vmatpush.bf16.msra.mxu0 %v358
      %380 = vmatpush.bf16.msra.mxu0 %v356
      %381 = vmatpush.bf16.msra.mxu0 %v354
      %382 = vmatpush.bf16.msra.mxu0 %v352
      %383 = vmatpush.bf16.msra.mxu0 %v350
      %384 = vmatpush.bf16.msra.mxu0 %v348
      %385 = vmatpush.bf16.msra.mxu0 %v346
      %386 = vmatmul.bf16.gmra.mxu0 %v275
      %v387 = vpop.f32.mrf.mxu0
      %v388 = vadd.f32 %v294, %v387
      %v389 = vpop.f32.mrf.mxu0
      %390 = vdwg.mxu0
      %391 = vmatpush.bf16.msra.mxu0 %v361
      %392 = vmatpush.bf16.msra.mxu0 %v359
      %393 = vmatpush.bf16.msra.mxu0 %v357
      %394 = vmatpush.bf16.msra.mxu0 %v355
      %395 = vmatpush.bf16.msra.mxu0 %v353
      %396 = vmatpush.bf16.msra.mxu0 %v351
      %397 = vmatpush.bf16.msra.mxu0 %v349
      %398 = vmatpush.bf16.msra.mxu0 %v347
      %399 = vmatmul.bf16.gmra.mxu0 %v275
      %v400 = vpop.f32.mrf.mxu0
      %v401 = vadd.f32 %v295, %v400
      %v402 = vpop.f32.mrf.mxu0
      %403 = vdwg.mxu0
      %v404 = vmax.f32 %v388, 0.0
      %v405 = vmax.f32 %v401, 0.0
      %v406 = vpack.c.bf16 %v404, %v404
      %v407 = vpack.c.bf16 %v405, %v405
      %v408 = vld [vmem:[%s3] sm:$0xf]
      %v409 = vld [vmem:[%s3 + $0x4] sm:$0xf]
      %v410 = vld [vmem:[%s3 + $0x8] sm:$0xf]
      %v411 = vld [vmem:[%s3 + $0xc] sm:$0xf]
      %v412 = vld [vmem:[%s3 + $0x10] sm:$0xf]
      %v413 = vld [vmem:[%s3 + $0x14] sm:$0xf]
      %v414 = vld [vmem:[%s3 + $0x18] sm:$0xf]
      %v415 = vld [vmem:[%s3 + $0x1c] sm:$0xf]
      %v416 = vld [vmem:[%s3 + $0x20] sm:$0xf]
      %v417 = vld [vmem:[%s3 + $0x24] sm:$0xf]
      %v418 = vld [vmem:[%s3 + $0x28] sm:$0xf]
      %v419 = vld [vmem:[%s3 + $0x2c] sm:$0xf]
      %v420 = vld [vmem:[%s3 + $0x30] sm:$0xf]
      %v421 = vld [vmem:[%s3 + $0x34] sm:$0xf]
      %v422 = vld [vmem:[%s3 + $0x38] sm:$0xf]
      %v423 = vld [vmem:[%s3 + $0x3c] sm:$0xf]
      %v424 = vld [vmem:[%s3 + $0x40] sm:$0xf]
      %v425 = vld [vmem:[%s3 + $0x44] sm:$0xf]
      %v426 = vld [vmem:[%s3 + $0x48] sm:$0xf]
      %v427 = vld [vmem:[%s3 + $0x4c] sm:$0xf]
      %v428 = vld [vmem:[%s3 + $0x50] sm:$0xf]
      %v429 = vld [vmem:[%s3 + $0x54] sm:$0xf]
      %v430 = vld [vmem:[%s3 + $0x58] sm:$0xf]
      %v431 = vld [vmem:[%s3 + $0x5c] sm:$0xf]
      %v432 = vld [vmem:[%s3 + $0x60] sm:$0xf]
      %v433 = vld [vmem:[%s3 + $0x64] sm:$0xf]
      %v434 = vld [vmem:[%s3 + $0x68] sm:$0xf]
      %v435 = vld [vmem:[%s3 + $0x6c] sm:$0xf]
      %v436 = vld [vmem:[%s3 + $0x70] sm:$0xf]
      %v437 = vld [vmem:[%s3 + $0x74] sm:$0xf]
      %v438 = vld [vmem:[%s3 + $0x78] sm:$0xf]
      %v439 = vld [vmem:[%s3 + $0x7c] sm:$0xf]
      %v440 = vld [vmem:[%s4] sm:$0x1]
      %v442 = vperm.slane %v440, 0
      %v476 = vunpack.c.l.b16 %v408
      %v477 = vunpack.c.l.b16 %v409
      %v478 = vunpack.c.l.b16 %v410
      %v479 = vunpack.c.l.b16 %v411
      %v480 = vunpack.c.l.b16 %v412
      %v481 = vunpack.c.l.b16 %v413
      %v482 = vunpack.c.l.b16 %v414
      %v483 = vunpack.c.l.b16 %v415
      %v484 = vunpack.c.l.b16 %v416
      %v485 = vunpack.c.l.b16 %v417
      %v486 = vunpack.c.l.b16 %v418
      %v487 = vunpack.c.l.b16 %v419
      %v488 = vunpack.c.l.b16 %v420
      %v489 = vunpack.c.l.b16 %v421
      %v490 = vunpack.c.l.b16 %v422
      %v491 = vunpack.c.l.b16 %v423
      %v492 = vunpack.c.l.b16 %v424
      %v493 = vunpack.c.l.b16 %v425
      %v494 = vunpack.c.l.b16 %v426
      %v495 = vunpack.c.l.b16 %v427
      %v496 = vunpack.c.l.b16 %v428
      %v497 = vunpack.c.l.b16 %v429
      %v498 = vunpack.c.l.b16 %v430
      %v499 = vunpack.c.l.b16 %v431
      %v500 = vunpack.c.l.b16 %v432
      %v501 = vunpack.c.l.b16 %v433
      %v502 = vunpack.c.l.b16 %v434
      %v503 = vunpack.c.l.b16 %v435
      %v504 = vunpack.c.l.b16 %v436
      %v505 = vunpack.c.l.b16 %v437
      %v506 = vunpack.c.l.b16 %v438
      %v507 = vunpack.c.l.b16 %v439
      %v508 = vpack.c.b16 %v477, %v476
      %v509 = vpack.c.b16 %v479, %v478
      %v510 = vpack.c.b16 %v481, %v480
      %v511 = vpack.c.b16 %v483, %v482
      %v512 = vpack.c.b16 %v485, %v484
      %v513 = vpack.c.b16 %v487, %v486
      %v514 = vpack.c.b16 %v489, %v488
      %v515 = vpack.c.b16 %v491, %v490
      %v516 = vpack.c.b16 %v493, %v492
      %v517 = vpack.c.b16 %v495, %v494
      %v518 = vpack.c.b16 %v497, %v496
      %v519 = vpack.c.b16 %v499, %v498
      %v520 = vpack.c.b16 %v501, %v500
      %v521 = vpack.c.b16 %v503, %v502
      %v522 = vpack.c.b16 %v505, %v504
      %v523 = vpack.c.b16 %v507, %v506
      %540 = vmatpush.bf16.msra.mxu0 %v515
      %541 = vmatpush.bf16.msra.mxu0 %v514
      %542 = vmatpush.bf16.msra.mxu0 %v513
      %543 = vmatpush.bf16.msra.mxu0 %v512
      %544 = vmatpush.bf16.msra.mxu0 %v511
      %545 = vmatpush.bf16.msra.mxu0 %v510
      %546 = vmatpush.bf16.msra.mxu0 %v509
      %547 = vmatpush.bf16.msra.mxu0 %v508
      %548 = vmatmul.bf16.gmra.mxu0 %v406
      %v549 = vpop.f32.mrf.mxu0
      %v550 = vadd.f32 %v442, %v549
      %v551 = vpop.f32.mrf.mxu0
      %552 = vdwg.mxu0
      %553 = vmatpush.bf16.msra.mxu0 %v523
      %554 = vmatpush.bf16.msra.mxu0 %v522
      %555 = vmatpush.bf16.msra.mxu0 %v521
      %556 = vmatpush.bf16.msra.mxu0 %v520
      %557 = vmatpush.bf16.msra.mxu0 %v519
      %558 = vmatpush.bf16.msra.mxu0 %v518
      %559 = vmatpush.bf16.msra.mxu0 %v517
      %560 = vmatpush.bf16.msra.mxu0 %v516
      %561 = vmatmul.bf16.gmra.mxu0 %v407
      %v562 = vpop.f32.mrf.mxu0
      %v563 = vadd.f32 %v550, %v562
      %v564 = vpop.f32.mrf.mxu0
      %565 = vdwg.mxu0
      %v566 = vadd.f32 %v274, %v563
      %v567 = vld [vmem:[%s5] sm:$0x1]
      %v568 = vld [vmem:[%s6] sm:$0x1]
      %569 = vadd.xlane.f32.xlu0 %v566
      %v570 = vpop.xlane.xlu0 %569
      %v571 = vrcp.pop 128.0
      %v572 = vmul.f32 128.0, %v571
      %v573 = vsub.f32 1.0, %v572
      %v574 = vmul.f32 %v571, %v573
      %v575 = vadd.f32 %v571, %v574
      %vm576 = vweird.f32 %v571
      %v577 = vsel %vm576, %v571, %v575
      %v578 = vmul.f32 %v570, %v577
      %v579 = vsub.f32 %v566, %v578
      %v580 = vmul.f32 %v579, %v579
      %581 = vadd.xlane.f32.xlu0 %v580
      %v582 = vpop.xlane.xlu0 %581
      %v583 = vmul.f32 %v582, %v577
      %v584 = vadd.f32 %v583, 1e-05
      %v585 = vrsqrt.pop %v584
      %v586 = vmul.f32 %v585, %v584
      %v587 = vmul.f32 %v586, %v585
      %v588 = vmul.f32 0.5, %v587
      %v589 = vsub.f32 1.5, %v588
      %v590 = vmul.f32 %v585, %v589
      %vm591 = vweird.f32 %v584
      %vm592 = vweird.f32 %v585
      %vm593 = vmor %vm591, %vm592
      %v594 = vsel %vm593, %v585, %v590
      %v595 = vmul.f32 %v579, %v594
      %v597 = vperm.slane %v567, 0
      %v599 = vmul.f32 %v595, %v597
      %v601 = vperm.slane %v568, 0
      %v603 = vadd.f32 %v599, %v601
      %604 = vst [vmem:[%s273] sm:$0xff] %v603
      %p605 = scmp.lt.s32.totalorder %s18, 1
      %s606 = scalar_select %p605, %s18, 1
      %s607 = smul.addr %s606, 8
      %s608 = scalar_lea.vmem %s7, %s607
      // Predicated region
      $region49: #{transformer_forward.33} parent=47 // pred_check
        %p609 = pneg %p188
      $region50: #{transformer_forward.33} parent=47 // pred_check_branch
        %611 = sbr.rel (%p609) target = $region52
      $region51: #{transformer_forward.33} parent=47 // pred_region
        _
      $region52: #{transformer_forward.33} parent=47 // pred_fallthru
        _
    $region48: #{transformer_forward.33} parent=5 // pred_fallthru
      _
    %p612 = scmp.le.s32.totalorder 2, %s13
    // Predicated region
    $region53: #{transformer_forward.33} parent=5 // pred_check
      %p613 = pneg %p612
    $region54: #{transformer_forward.33} parent=5 // pred_check_branch
      %615 = sbr.rel (%p613) target = $region56
    $region55: #{transformer_forward.33} parent=5 // pred_region
      %s616 = ssub.s32 %s13, 2
      // Predicated region
      $region57: #{transformer_forward.33} parent=55 // pred_check
        %p617 = pneg %p194
      $region58: #{transformer_forward.33} parent=55 // pred_check_branch
        %619 = sbr.rel (%p617) target = $region60
      $region59: #{transformer_forward.33} parent=55 // pred_region
        %p620 = scmp.lt.s32.totalorder %s19, 1
        %s621 = scalar_select %p620, %s19, 1
        %s622 = smul.addr %s621, 8
        %s623 = scalar_lea.vmem %s7, %s622
      $region60: #{transformer_forward.33} parent=55 // pred_fallthru
        _
    $region56: #{transformer_forward.33} parent=5 // pred_fallthru
      _
  $region6: #{transformer_forward.33} parent=0 // loop_footer
    %s17 = sadd.s32 1, %s13
  $region7: #{transformer_forward.33} parent=0 // loop_footer_branch
    %12 = sbr.rel target = $region3
  $region8: #{transformer_forward.33} parent=0 // loop_exit
    _

// kernel: transformer_forward.43
$region0: #{transformer_forward.43}
  #allocation0 [shape = 'u32[]', space=smem, size = 0x4, offset = 0x4, fixed_abs, tag = 'smem constant byte address 0x4 - core index']
  #allocation1 [shape = 'u32[72,128]{1,0:T(1,128)}', space=vmem, size = 0x9000, scoped, tag = 'internal scratch']
  #allocation2 [shape = 'f32[8,256]{1,0:T(8,128)}', space=vmem, size = 0x2000, scoped, tag = 'scratch operand']
  %s0 = inlined_call_operand.vmem [shape: f32[16,128], index: 0, kind: input, shape index: {}]
  %s1 = inlined_call_operand.vmem [shape: bf16[128,256], index: 1, kind: input, shape index: {}]
  %s2 = inlined_call_operand.vmem [shape: f32[1,256], index: 2, kind: input, shape index: {}]
  %s3 = inlined_call_operand.vmem [shape: f32[16,256], index: 3, kind: output, shape index: {}]
  %s4 = sld [smem:[#allocation0]]
  $region53: #{transformer_forward.43} parent=0
    _
  %s6 = ssub.s32 1, %s4
  %s7 = scalar_select 0, %s6, %s4
  loop: start=0, step=1, limit=4
  $region2: #{transformer_forward.43} parent=0 // loop_pre_header
    _
  $region3: #{transformer_forward.43} parent=0 // loop_header
    %s9 = sphi 0, %s13
    %p10 = scmp.ge.s32.totalorder %s9, 4
    %s16 = sphi 0, %s35
    %s17 = sphi 0, %s31
    %s18 = sphi 0, %s27
    %s19 = sphi 0, %s16
    %s20 = sphi 0, %s17
    %s21 = sphi 0, %s18
    %s22 = sphi 0, %s19
    %s23 = sphi 0, %s20
    %s24 = sphi 0, %s21
    %s40 = sphi 0, %s42
    %s43 = sphi 0, %s40
    %s44 = sphi 0, %s43
    %s60 = sphi 0, %s44
    %s68 = sphi 0, %s70
    %s71 = sphi 0, %s68
    %s72 = sphi 0, %s71
    %s88 = sphi 0, %s72
    %s94 = sphi 0, %s96
    %s97 = sphi 0, %s94
    %s98 = sphi 0, %s97
    %s114 = sphi 0, %s98
    %s122 = sphi 0, %s124
    %s125 = sphi 0, %s122
    %s126 = sphi 0, %s125
    %s142 = sphi 0, %s126
  $region4: #{transformer_forward.43} parent=0 // loop_header_branch
    %12 = sbr.rel (%p10) target = $region8
  $region5: #{transformer_forward.43} parent=0 // loop_body
    %s14 = ssub.s32 %s9, 1
    %s15 = ssub.s32 %s9, 2
    %s25 = sadd.s32 1, %s18
    %p26 = scmp.ge.s32.totalorder %s25, 1
    %s27 = scalar_select %p26, 0, %s25
    %s28 = sadd.s32 1, %s17
    %s29 = scalar_select %p26, %s28, %s17
    %p30 = scmp.ge.s32.totalorder %s29, 1
    %s31 = scalar_select %p30, 0, %s29
    %s32 = sadd.s32 1, %s16
    %s33 = scalar_select %p30, %s32, %s16
    %p34 = scmp.ge.s32.totalorder %s33, 2
    %s35 = scalar_select %p34, 0, %s33
    %s36 = ssub.s32 %s16, %s35
    %s37 = ssub.s32 %s18, %s27
    %s38 = sor.u32 %s36, %s37
    %p39 = scmp.eq.s32.totalorder %s38, 0
    %s41 = sadd.s32 %s40, 1
    %s42 = scalar_select %p39, %s40, %s41
    %p45 = pneg %p39
    %p46 = scmp.eq.s32.totalorder %s9, 1
    %p47 = por %p45, %p46
    %p48 = scmp.ne.s32.totalorder %s40, %s43
    %p49 = scmp.eq.s32.totalorder %s9, 0
    %p50 = por %p48, %p49
    %p51 = scmp.ne.s32.totalorder %s40, %s43
    %p52 = scmp.eq.s32.totalorder %s14, 1
    %p53 = por %p51, %p52
    %p54 = scmp.ne.s32.totalorder %s43, %s44
    %p55 = scmp.eq.s32.totalorder %s14, 0
    %p56 = por %p54, %p55
    %p57 = scmp.ne.s32.totalorder %s43, %s44
    %p58 = scmp.eq.s32.totalorder %s15, 1
    %p59 = por %p57, %p58
    %p61 = scmp.ne.s32.totalorder %s44, %s60
    %p62 = scmp.eq.s32.totalorder %s15, 0
    %p63 = por %p61, %p62
    %s64 = ssub.s32 %s18, %s27
    %s65 = ssub.s32 %s17, %s31
    %s66 = sor.u32 %s64, %s65
    %p67 = scmp.eq.s32.totalorder %s66, 0
    %s69 = sadd.s32 %s68, 1
    %s70 = scalar_select %p67, %s68, %s69
    %p73 = pneg %p67
    %p74 = scmp.eq.s32.totalorder %s9, 1
    %p75 = por %p73, %p74
    %p76 = scmp.ne.s32.totalorder %s68, %s71
    %p77 = scmp.eq.s32.totalorder %s9, 0
    %p78 = por %p76, %p77
    %p79 = scmp.ne.s32.totalorder %s68, %s71
    %p80 = scmp.eq.s32.totalorder %s14, 1
    %p81 = por %p79, %p80
    %p82 = scmp.ne.s32.totalorder %s71, %s72
    %p83 = scmp.eq.s32.totalorder %s14, 0
    %p84 = por %p82, %p83
    %p85 = scmp.ne.s32.totalorder %s71, %s72
    %p86 = scmp.eq.s32.totalorder %s15, 1
    %p87 = por %p85, %p86
    %p89 = scmp.ne.s32.totalorder %s72, %s88
    %p90 = scmp.eq.s32.totalorder %s15, 0
    %p91 = por %p89, %p90
    %s92 = ssub.s32 %s17, %s31
    %p93 = scmp.eq.s32.totalorder %s92, 0
    %s95 = sadd.s32 %s94, 1
    %s96 = scalar_select %p93, %s94, %s95
    %p99 = pneg %p93
    %p100 = scmp.eq.s32.totalorder %s9, 1
    %p101 = por %p99, %p100
    %p102 = scmp.ne.s32.totalorder %s94, %s97
    %p103 = scmp.eq.s32.totalorder %s9, 0
    %p104 = por %p102, %p103
    %p105 = scmp.ne.s32.totalorder %s94, %s97
    %p106 = scmp.eq.s32.totalorder %s14, 1
    %p107 = por %p105, %p106
    %p108 = scmp.ne.s32.totalorder %s97, %s98
    %p109 = scmp.eq.s32.totalorder %s14, 0
    %p110 = por %p108, %p109
    %p111 = scmp.ne.s32.totalorder %s97, %s98
    %p112 = scmp.eq.s32.totalorder %s15, 1
    %p113 = por %p111, %p112
    %p115 = scmp.ne.s32.totalorder %s98, %s114
    %p116 = scmp.eq.s32.totalorder %s15, 0
    %p117 = por %p115, %p116
    %s118 = ssub.s32 %s16, %s35
    %s119 = ssub.s32 %s17, %s31
    %s120 = sor.u32 %s118, %s119
    %p121 = scmp.eq.s32.totalorder %s120, 0
    %s123 = sadd.s32 %s122, 1
    %s124 = scalar_select %p121, %s122, %s123
    %p127 = pneg %p121
    %p128 = scmp.eq.s32.totalorder %s9, 1
    %p129 = por %p127, %p128
    %p130 = scmp.ne.s32.totalorder %s122, %s125
    %p131 = scmp.eq.s32.totalorder %s9, 0
    %p132 = por %p130, %p131
    %p133 = scmp.ne.s32.totalorder %s122, %s125
    %p134 = scmp.eq.s32.totalorder %s14, 1
    %p135 = por %p133, %p134
    %p136 = scmp.ne.s32.totalorder %s125, %s126
    %p137 = scmp.eq.s32.totalorder %s14, 0
    %p138 = por %p136, %p137
    %p139 = scmp.ne.s32.totalorder %s125, %s126
    %p140 = scmp.eq.s32.totalorder %s15, 1
    %p141 = por %p139, %p140
    %p143 = scmp.ne.s32.totalorder %s126, %s142
    %p144 = scmp.eq.s32.totalorder %s15, 0
    %p145 = por %p143, %p144
    %p146 = scmp.le.s32.totalorder 1, %s9
    %p147 = scmp.lt.s32.totalorder %s9, 3
    %p148 = pnand %p146, %p147
    %p149 = pneg %p148
    // Predicated region
    $region9: #{transformer_forward.43} parent=5 // pred_check
      _
    $region10: #{transformer_forward.43} parent=5 // pred_check_branch
      %151 = sbr.rel (%p148) target = $region12
    $region11: #{transformer_forward.43} parent=5 // pred_region
      %s152 = ssub.s32 %s9, 1
      // Predicated region
      $region13: #{transformer_forward.43} parent=11 // pred_check
        %p153 = pneg %p84
      $region14: #{transformer_forward.43} parent=11 // pred_check_branch
        %155 = sbr.rel (%p153) target = $region16
      $region15: #{transformer_forward.43} parent=11 // pred_region
        %s156 = smul.u32 16, %s21
        %s157 = smul.u32 2, %s20
        %p158 = scmp.lt.s32.totalorder %s156, 15
        %s159 = scalar_select %p158, %s156, 15
        %p160 = scmp.lt.s32.totalorder %s157, 1
        %s161 = scalar_select %p160, %s157, 1
        %s162 = smul.addr %s159, 2
        %s163 = sadd.s32 %s161, %s162
        %s164 = smul.addr %s163, 4
        %s165 = scalar_lea.vmem %s1, %s164
        %s166 = smul.u32 16, %s21
        %s167 = smul.u32 2, %s20
      $region16: #{transformer_forward.43} parent=11 // pred_fallthru
        _
      // Predicated region
      $region17: #{transformer_forward.43} parent=11 // pred_check
        %p168 = pneg %p110
      $region18: #{transformer_forward.43} parent=11 // pred_check_branch
        %170 = sbr.rel (%p168) target = $region20
      $region19: #{transformer_forward.43} parent=11 // pred_region
        %s171 = smul.u32 2, %s20
        %p172 = scmp.lt.s32.totalorder %s171, 1
        %s173 = scalar_select %p172, %s171, 1
        %s174 = scalar_lea.vmem %s2, %s173
        %s175 = smul.u32 2, %s20
      $region20: #{transformer_forward.43} parent=11 // pred_fallthru
        _
    $region12: #{transformer_forward.43} parent=5 // pred_fallthru
      _
    %p176 = scmp.lt.s32.totalorder %s9, 2
    // Predicated region
    $region21: #{transformer_forward.43} parent=5 // pred_check
      %p177 = pneg %p176
    $region22: #{transformer_forward.43} parent=5 // pred_check_branch
      %179 = sbr.rel (%p177) target = $region24
    $region23: #{transformer_forward.43} parent=5 // pred_region
      // Predicated region
      $region25: #{transformer_forward.43} parent=23 // pred_check
        %p180 = pneg %p50
      $region26: #{transformer_forward.43} parent=23 // pred_check_branch
        %182 = sbr.rel (%p180) target = $region28
      $region27: #{transformer_forward.43} parent=23 // pred_region
        %p183 = scmp.lt.s32.totalorder %s16, 1
        %s184 = scalar_select %p183, %s16, 1
        %p185 = scmp.lt.s32.totalorder %s18, 0
        %s186 = scalar_select %p185, %s18, 0
        %s187 = sadd.s32 %s186, %s184
        %s188 = smul.addr %s187, 8
        %s189 = scalar_lea.vmem %s0, %s188
      $region28: #{transformer_forward.43} parent=23 // pred_fallthru
        _
    $region24: #{transformer_forward.43} parent=5 // pred_fallthru
      _
    %p190 = scmp.le.s32.totalorder 1, %s9
    %p191 = scmp.lt.s32.totalorder %s9, 3
    %p192 = pnand %p190, %p191
    %p193 = pneg %p192
    // Predicated region
    $region29: #{transformer_forward.43} parent=5 // pred_check
      _
    $region30: #{transformer_forward.43} parent=5 // pred_check_branch
      %195 = sbr.rel (%p192) target = $region32
    $region31: #{transformer_forward.43} parent=5 // pred_region
      %s196 = ssub.s32 %s9, 1
      %p197 = scmp.lt.s32.totalorder %s19, 1
      %s198 = scalar_select %p197, %s19, 1
      %p199 = scmp.lt.s32.totalorder %s21, 0
      %s200 = scalar_select %p199, %s21, 0
      %s201 = sadd.s32 %s200, %s198
      %s202 = smul.addr %s201, 8
      %s203 = scalar_lea.vmem %s0, %s202
      %p204 = pneg %p56
      %p205 = pneg %p53
      %s206 = smul.u32 16, %s21
      %s207 = smul.u32 2, %s20
      %p208 = scmp.lt.s32.totalorder %s206, 15
      %s209 = scalar_select %p208, %s206, 15
      %p210 = scmp.lt.s32.totalorder %s207, 1
      %s211 = scalar_select %p210, %s207, 1
      %s212 = smul.addr %s209, 2
      %s213 = sadd.s32 %s211, %s212
      %s214 = smul.addr %s213, 4
      %s215 = scalar_lea.vmem %s1, %s214
      %p216 = pneg %p84
      %p217 = pneg %p81
      %s218 = smul.u32 2, %s20
      %p219 = scmp.lt.s32.totalorder %s218, 1
      %s220 = scalar_select %p219, %s218, 1
      %s221 = scalar_lea.vmem %s2, %s220
      %p222 = pneg %p110
      %p223 = pneg %p107
      %p224 = pneg %p138
      %p225 = pneg %p135
      %s226 = smul.u32 2, %s20
      %p227 = scmp.lt.s32.totalorder %s19, 1
      %s228 = scalar_select %p227, %s19, 1
      %p229 = scmp.lt.s32.totalorder %s226, 1
      %s230 = scalar_select %p229, %s226, 1
      %s231 = smul.addr %s228, 2
      %s232 = sadd.s32 %s230, %s231
      %s233 = smul.addr %s232, 8
      %s234 = scalar_lea.vmem %s3, %s233
      %p235 = scmp.lt.s32.totalorder %s19, 1
      %s236 = scalar_select %p235, %s19, 1
      %p237 = scmp.lt.s32.totalorder %s21, 0
      %s238 = scalar_select %p237, %s21, 0
      %s239 = sadd.s32 %s238, %s236
      %s240 = smul.addr %s239, 8
      %s241 = scalar_lea.vmem %s0, %s240
      %s242 = smul.u32 16, %s21
      %s243 = smul.u32 2, %s20
      %p244 = scmp.lt.s32.totalorder %s242, 15
      %s245 = scalar_select %p244, %s242, 15
      %p246 = scmp.lt.s32.totalorder %s243, 1
      %s247 = scalar_select %p246, %s243, 1
      %s248 = smul.addr %s245, 2
      %s249 = sadd.s32 %s247, %s248
      %s250 = smul.addr %s249, 4
      %s251 = scalar_lea.vmem %s1, %s250
      %s252 = smul.u32 16, %s21
      %s253 = smul.u32 2, %s20
      %s254 = smul.u32 2, %s20
      %p255 = scmp.lt.s32.totalorder %s254, 1
      %s256 = scalar_select %p255, %s254, 1
      %s257 = scalar_lea.vmem %s2, %s256
      %s258 = smul.u32 2, %s20
      %s259 = smul.u32 2, %s20
      %p260 = scmp.lt.s32.totalorder %s19, 1
      %s261 = scalar_select %p260, %s19, 1
      %p262 = scmp.lt.s32.totalorder %s259, 1
      %s263 = scalar_select %p262, %s259, 1
      %s264 = smul.addr %s261, 2
      %s265 = sadd.s32 %s263, %s264
      %s266 = smul.addr %s265, 8
      %s267 = scalar_lea.vmem %s3, %s266
      %s268 = smul.u32 2, %s20
      %p269 = scmp.eq.s32.totalorder %s21, 0
      // Predicated region
      $region33: #{transformer_forward.43} parent=31 // pred_check
        %p270 = pneg %p269
      $region34: #{transformer_forward.43} parent=31 // pred_check_branch
        %272 = sbr.rel (%p270) target = $region36
      $region35: #{transformer_forward.43} parent=31 // pred_region
        %273 = vst [vmem:[#allocation2] sm:$0xff] 0.0
        %274 = vst [vmem:[#allocation2 + $0x8] sm:$0xff] 0.0
      $region36: #{transformer_forward.43} parent=31 // pred_fallthru
        _
      %v275 = vld [vmem:[%s241] sm:$0xff]
      %v276 = vld [vmem:[#allocation2] sm:$0xff]
      %v277 = vld [vmem:[#allocation2 + $0x8] sm:$0xff]
      %v278 = vpack.c.bf16 %v275, %v275
      %v279 = vld [vmem:[%s251] sm:$0xff]
      %v280 = vld [vmem:[%s251 + $0x8] sm:$0xff]
      %v281 = vld [vmem:[%s251 + $0x10] sm:$0xff]
      %v282 = vld [vmem:[%s251 + $0x18] sm:$0xff]
      %v283 = vld [vmem:[%s251 + $0x20] sm:$0xff]
      %v284 = vld [vmem:[%s251 + $0x28] sm:$0xff]
      %v285 = vld [vmem:[%s251 + $0x30] sm:$0xff]
      %v286 = vld [vmem:[%s251 + $0x38] sm:$0xff]
      %v287 = vld [vmem:[%s251 + $0x40] sm:$0xff]
      %v288 = vld [vmem:[%s251 + $0x48] sm:$0xff]
      %v289 = vld [vmem:[%s251 + $0x50] sm:$0xff]
      %v290 = vld [vmem:[%s251 + $0x58] sm:$0xff]
      %v291 = vld [vmem:[%s251 + $0x60] sm:$0xff]
      %v292 = vld [vmem:[%s251 + $0x68] sm:$0xff]
      %v293 = vld [vmem:[%s251 + $0x70] sm:$0xff]
      %v294 = vld [vmem:[%s251 + $0x78] sm:$0xff]
      %v311 = vunpack.c.l.b16 %v279
      %v312 = vunpack.c.h.b16 %v279
      %v313 = vunpack.c.l.b16 %v280
      %v314 = vunpack.c.h.b16 %v280
      %v315 = vunpack.c.l.b16 %v281
      %v316 = vunpack.c.h.b16 %v281
      %v317 = vunpack.c.l.b16 %v282
      %v318 = vunpack.c.h.b16 %v282
      %v319 = vunpack.c.l.b16 %v283
      %v320 = vunpack.c.h.b16 %v283
      %v321 = vunpack.c.l.b16 %v284
      %v322 = vunpack.c.h.b16 %v284
      %v323 = vunpack.c.l.b16 %v285
      %v324 = vunpack.c.h.b16 %v285
      %v325 = vunpack.c.l.b16 %v286
      %v326 = vunpack.c.h.b16 %v286
      %v327 = vunpack.c.l.b16 %v287
      %v328 = vunpack.c.h.b16 %v287
      %v329 = vunpack.c.l.b16 %v288
      %v330 = vunpack.c.h.b16 %v288
      %v331 = vunpack.c.l.b16 %v289
      %v332 = vunpack.c.h.b16 %v289
      %v333 = vunpack.c.l.b16 %v290
      %v334 = vunpack.c.h.b16 %v290
      %v335 = vunpack.c.l.b16 %v291
      %v336 = vunpack.c.h.b16 %v291
      %v337 = vunpack.c.l.b16 %v292
      %v338 = vunpack.c.h.b16 %v292
      %v339 = vunpack.c.l.b16 %v293
      %v340 = vunpack.c.h.b16 %v293
      %v341 = vunpack.c.l.b16 %v294
      %v342 = vunpack.c.h.b16 %v294
      %v343 = vpack.c.b16 %v313, %v311
      %v344 = vpack.c.b16 %v314, %v312
      %v345 = vpack.c.b16 %v317, %v315
      %v346 = vpack.c.b16 %v318, %v316
      %v347 = vpack.c.b16 %v321, %v319
      %v348 = vpack.c.b16 %v322, %v320
      %v349 = vpack.c.b16 %v325, %v323
      %v350 = vpack.c.b16 %v326, %v324
      %v351 = vpack.c.b16 %v329, %v327
      %v352 = vpack.c.b16 %v330, %v328
      %v353 = vpack.c.b16 %v333, %v331
      %v354 = vpack.c.b16 %v334, %v332
      %v355 = vpack.c.b16 %v337, %v335
      %v356 = vpack.c.b16 %v338, %v336
      %v357 = vpack.c.b16 %v341, %v339
      %v358 = vpack.c.b16 %v342, %v340
      %375 = vmatpush.bf16.msra.mxu0 %v357
      %376 = vmatpush.bf16.msra.mxu0 %v355
      %377 = vmatpush.bf16.msra.mxu0 %v353
      %378 = vmatpush.bf16.msra.mxu0 %v351
      %379 = vmatpush.bf16.msra.mxu0 %v349
      %380 = vmatpush.bf16.msra.mxu0 %v347
      %381 = vmatpush.bf16.msra.mxu0 %v345
      %382 = vmatpush.bf16.msra.mxu0 %v343
      %383 = vmatmul.bf16.gmra.mxu0 %v278
      %v384 = vpop.f32.mrf.mxu0
      %v385 = vadd.f32 0.0, %v384
      %v386 = vpop.f32.mrf.mxu0
      %387 = vdwg.mxu0
      %388 = vmatpush.bf16.msra.mxu0 %v358
      %389 = vmatpush.bf16.msra.mxu0 %v356
      %390 = vmatpush.bf16.msra.mxu0 %v354
      %391 = vmatpush.bf16.msra.mxu0 %v352
      %392 = vmatpush.bf16.msra.mxu0 %v350
      %393 = vmatpush.bf16.msra.mxu0 %v348
      %394 = vmatpush.bf16.msra.mxu0 %v346
      %395 = vmatpush.bf16.msra.mxu0 %v344
      %396 = vmatmul.bf16.gmra.mxu0 %v278
      %v397 = vpop.f32.mrf.mxu0
      %v398 = vadd.f32 0.0, %v397
      %v399 = vpop.f32.mrf.mxu0
      %400 = vdwg.mxu0
      %v401 = vadd.f32 %v276, %v385
      %v402 = vadd.f32 %v277, %v398
      %403 = vst [vmem:[#allocation2] sm:$0xff] %v401
      %404 = vst [vmem:[#allocation2 + $0x8] sm:$0xff] %v402
      // Predicated region
      $region37: #{transformer_forward.43} parent=31 // pred_check
        %p405 = pneg %p269
      $region38: #{transformer_forward.43} parent=31 // pred_check_branch
        %407 = sbr.rel (%p405) target = $region40
      $region39: #{transformer_forward.43} parent=31 // pred_region
        %v408 = vld [vmem:[#allocation2] sm:$0xff]
        %v409 = vld [vmem:[#allocation2 + $0x8] sm:$0xff]
        %v410 = vld [vmem:[%s257] sm:$0x3]
        %v412 = vperm.slane %v410, 0
        %v413 = vperm.slane %v410, 1
        %v416 = vadd.f32 %v408, %v412
        %v417 = vadd.f32 %v409, %v413
        %418 = vst [vmem:[%s267] sm:$0xff] %v416
        %419 = vst [vmem:[%s267 + $0x8] sm:$0xff] %v417
      $region40: #{transformer_forward.43} parent=31 // pred_fallthru
        _
      %s420 = smul.u32 2, %s20
      %p421 = scmp.lt.s32.totalorder %s19, 1
      %s422 = scalar_select %p421, %s19, 1
      %p423 = scmp.lt.s32.totalorder %s420, 1
      %s424 = scalar_select %p423, %s420, 1
      %s425 = smul.addr %s422, 2
      %s426 = sadd.s32 %s424, %s425
      %s427 = smul.addr %s426, 8
      %s428 = scalar_lea.vmem %s3, %s427
      // Predicated region
      $region41: #{transformer_forward.43} parent=31 // pred_check
        %p429 = pneg %p135
      $region42: #{transformer_forward.43} parent=31 // pred_check_branch
        %431 = sbr.rel (%p429) target = $region44
      $region43: #{transformer_forward.43} parent=31 // pred_region
        %s432 = smul.u32 2, %s20
      $region44: #{transformer_forward.43} parent=31 // pred_fallthru
        _
    $region32: #{transformer_forward.43} parent=5 // pred_fallthru
      _
    %p433 = scmp.le.s32.totalorder 2, %s9
    // Predicated region
    $region45: #{transformer_forward.43} parent=5 // pred_check
      %p434 = pneg %p433
    $region46: #{transformer_forward.43} parent=5 // pred_check_branch
      %436 = sbr.rel (%p434) target = $region48
    $region47: #{transformer_forward.43} parent=5 // pred_region
      %s437 = ssub.s32 %s9, 2
      // Predicated region
      $region49: #{transformer_forward.43} parent=47 // pred_check
        %p438 = pneg %p141
      $region50: #{transformer_forward.43} parent=47 // pred_check_branch
        %440 = sbr.rel (%p438) target = $region52
      $region51: #{transformer_forward.43} parent=47 // pred_region
        %s441 = smul.u32 2, %s23
        %p442 = scmp.lt.s32.totalorder %s22, 1
        %s443 = scalar_select %p442, %s22, 1
        %p444 = scmp.lt.s32.totalorder %s441, 1
        %s445 = scalar_select %p444, %s441, 1
        %s446 = smul.addr %s443, 2
        %s447 = sadd.s32 %s445, %s446
        %s448 = smul.addr %s447, 8
        %s449 = scalar_lea.vmem %s3, %s448
      $region52: #{transformer_forward.43} parent=47 // pred_fallthru
        _
    $region48: #{transformer_forward.43} parent=5 // pred_fallthru
      _
  $region6: #{transformer_forward.43} parent=0 // loop_footer
    %s13 = sadd.s32 1, %s9
  $region7: #{transformer_forward.43} parent=0 // loop_footer_branch
    %8 = sbr.rel target = $region3
  $region8: #{transformer_forward.43} parent=0 // loop_exit
    _

// kernel: transformer_forward.40
$region0: #{transformer_forward.40}
  #allocation0 [shape = 'u32[]', space=smem, size = 0x4, offset = 0x4, fixed_abs, tag = 'smem constant byte address 0x4 - core index']
  #allocation1 [shape = 'u32[72,128]{1,0:T(1,128)}', space=vmem, size = 0x9000, scoped, tag = 'internal scratch']
  %s0 = inlined_call_operand.vmem [shape: f32[2,8,128], index: 0, kind: input, shape index: {}]
  %s1 = inlined_call_operand.vmem [shape: f32[2,8,128], index: 1, kind: input, shape index: {}]
  %s2 = inlined_call_operand.vmem [shape: f32[2,8,128], index: 2, kind: input, shape index: {}]
  %s3 = inlined_call_operand.vmem [shape: f32[2,8,128], index: 3, kind: output, shape index: {}]
  %s4 = sld [smem:[#allocation0]]
  $region45: #{transformer_forward.40} parent=0
    _
  %s6 = ssub.s32 1, %s4
  %s7 = scalar_select 0, %s6, %s4
  loop: start=0, step=1, limit=4
  $region2: #{transformer_forward.40} parent=0 // loop_pre_header
    _
  $region3: #{transformer_forward.40} parent=0 // loop_header
    %s9 = sphi 0, %s13
    %p10 = scmp.ge.s32.totalorder %s9, 4
    %s19 = sphi 0, %s21
    %s22 = sphi 0, %s19
    %s23 = sphi 0, %s22
    %s39 = sphi 0, %s23
    %s45 = sphi 0, %s47
    %s48 = sphi 0, %s45
    %s49 = sphi 0, %s48
    %s65 = sphi 0, %s49
    %s71 = sphi 0, %s73
    %s74 = sphi 0, %s71
    %s75 = sphi 0, %s74
    %s91 = sphi 0, %s75
    %s97 = sphi 0, %s99
    %s100 = sphi 0, %s97
    %s101 = sphi 0, %s100
    %s117 = sphi 0, %s101
  $region4: #{transformer_forward.40} parent=0 // loop_header_branch
    %12 = sbr.rel (%p10) target = $region8
  $region5: #{transformer_forward.40} parent=0 // loop_body
    %s14 = ssub.s32 %s9, 1
    %s15 = ssub.s32 %s9, 2
    %s16 = sadd.s32 %s9, 1
    %s17 = ssub.s32 %s9, %s16
    %p18 = scmp.eq.s32.totalorder %s17, 0
    %s20 = sadd.s32 %s19, 1
    %s21 = scalar_select %p18, %s19, %s20
    %p24 = pneg %p18
    %p25 = scmp.eq.s32.totalorder %s9, 1
    %p26 = por %p24, %p25
    %p27 = scmp.ne.s32.totalorder %s19, %s22
    %p28 = scmp.eq.s32.totalorder %s9, 0
    %p29 = por %p27, %p28
    %p30 = scmp.ne.s32.totalorder %s19, %s22
    %p31 = scmp.eq.s32.totalorder %s14, 1
    %p32 = por %p30, %p31
    %p33 = scmp.ne.s32.totalorder %s22, %s23
    %p34 = scmp.eq.s32.totalorder %s14, 0
    %p35 = por %p33, %p34
    %p36 = scmp.ne.s32.totalorder %s22, %s23
    %p37 = scmp.eq.s32.totalorder %s15, 1
    %p38 = por %p36, %p37
    %p40 = scmp.ne.s32.totalorder %s23, %s39
    %p41 = scmp.eq.s32.totalorder %s15, 0
    %p42 = por %p40, %p41
    %s43 = ssub.s32 %s9, %s16
    %p44 = scmp.eq.s32.totalorder %s43, 0
    %s46 = sadd.s32 %s45, 1
    %s47 = scalar_select %p44, %s45, %s46
    %p50 = pneg %p44
    %p51 = scmp.eq.s32.totalorder %s9, 1
    %p52 = por %p50, %p51
    %p53 = scmp.ne.s32.totalorder %s45, %s48
    %p54 = scmp.eq.s32.totalorder %s9, 0
    %p55 = por %p53, %p54
    %p56 = scmp.ne.s32.totalorder %s45, %s48
    %p57 = scmp.eq.s32.totalorder %s14, 1
    %p58 = por %p56, %p57
    %p59 = scmp.ne.s32.totalorder %s48, %s49
    %p60 = scmp.eq.s32.totalorder %s14, 0
    %p61 = por %p59, %p60
    %p62 = scmp.ne.s32.totalorder %s48, %s49
    %p63 = scmp.eq.s32.totalorder %s15, 1
    %p64 = por %p62, %p63
    %p66 = scmp.ne.s32.totalorder %s49, %s65
    %p67 = scmp.eq.s32.totalorder %s15, 0
    %p68 = por %p66, %p67
    %s69 = ssub.s32 %s9, %s16
    %p70 = scmp.eq.s32.totalorder %s69, 0
    %s72 = sadd.s32 %s71, 1
    %s73 = scalar_select %p70, %s71, %s72
    %p76 = pneg %p70
    %p77 = scmp.eq.s32.totalorder %s9, 1
    %p78 = por %p76, %p77
    %p79 = scmp.ne.s32.totalorder %s71, %s74
    %p80 = scmp.eq.s32.totalorder %s9, 0
    %p81 = por %p79, %p80
    %p82 = scmp.ne.s32.totalorder %s71, %s74
    %p83 = scmp.eq.s32.totalorder %s14, 1
    %p84 = por %p82, %p83
    %p85 = scmp.ne.s32.totalorder %s74, %s75
    %p86 = scmp.eq.s32.totalorder %s14, 0
    %p87 = por %p85, %p86
    %p88 = scmp.ne.s32.totalorder %s74, %s75
    %p89 = scmp.eq.s32.totalorder %s15, 1
    %p90 = por %p88, %p89
    %p92 = scmp.ne.s32.totalorder %s75, %s91
    %p93 = scmp.eq.s32.totalorder %s15, 0
    %p94 = por %p92, %p93
    %s95 = ssub.s32 %s9, %s16
    %p96 = scmp.eq.s32.totalorder %s95, 0
    %s98 = sadd.s32 %s97, 1
    %s99 = scalar_select %p96, %s97, %s98
    %p102 = pneg %p96
    %p103 = scmp.eq.s32.totalorder %s9, 1
    %p104 = por %p102, %p103
    %p105 = scmp.ne.s32.totalorder %s97, %s100
    %p106 = scmp.eq.s32.totalorder %s9, 0
    %p107 = por %p105, %p106
    %p108 = scmp.ne.s32.totalorder %s97, %s100
    %p109 = scmp.eq.s32.totalorder %s14, 1
    %p110 = por %p108, %p109
    %p111 = scmp.ne.s32.totalorder %s100, %s101
    %p112 = scmp.eq.s32.totalorder %s14, 0
    %p113 = por %p111, %p112
    %p114 = scmp.ne.s32.totalorder %s100, %s101
    %p115 = scmp.eq.s32.totalorder %s15, 1
    %p116 = por %p114, %p115
    %p118 = scmp.ne.s32.totalorder %s101, %s117
    %p119 = scmp.eq.s32.totalorder %s15, 0
    %p120 = por %p118, %p119
    %p121 = scmp.le.s32.totalorder 1, %s9
    %p122 = scmp.lt.s32.totalorder %s9, 3
    %p123 = pnand %p121, %p122
    %p124 = pneg %p123
    // Predicated region
    $region9: #{transformer_forward.40} parent=5 // pred_check
      _
    $region10: #{transformer_forward.40} parent=5 // pred_check_branch
      %126 = sbr.rel (%p123) target = $region12
    $region11: #{transformer_forward.40} parent=5 // pred_region
      %s127 = ssub.s32 %s9, 1
    $region12: #{transformer_forward.40} parent=5 // pred_fallthru
      _
    %p128 = scmp.lt.s32.totalorder %s9, 2
    // Predicated region
    $region13: #{transformer_forward.40} parent=5 // pred_check
      %p129 = pneg %p128
    $region14: #{transformer_forward.40} parent=5 // pred_check_branch
      %131 = sbr.rel (%p129) target = $region16
    $region15: #{transformer_forward.40} parent=5 // pred_region
      // Predicated region
      $region17: #{transformer_forward.40} parent=15 // pred_check
        %p132 = pneg %p29
      $region18: #{transformer_forward.40} parent=15 // pred_check_branch
        %134 = sbr.rel (%p132) target = $region20
      $region19: #{transformer_forward.40} parent=15 // pred_region
        %p135 = scmp.lt.s32.totalorder %s9, 1
        %s136 = scalar_select %p135, %s9, 1
        %s137 = smul.addr %s136, 8
        %s138 = scalar_lea.vmem %s0, %s137
      $region20: #{transformer_forward.40} parent=15 // pred_fallthru
        _
      // Predicated region
      $region21: #{transformer_forward.40} parent=15 // pred_check
        %p139 = pneg %p55
      $region22: #{transformer_forward.40} parent=15 // pred_check_branch
        %141 = sbr.rel (%p139) target = $region24
      $region23: #{transformer_forward.40} parent=15 // pred_region
        %p142 = scmp.lt.s32.totalorder %s9, 1
        %s143 = scalar_select %p142, %s9, 1
        %s144 = smul.addr %s143, 8
        %s145 = scalar_lea.vmem %s1, %s144
      $region24: #{transformer_forward.40} parent=15 // pred_fallthru
        _
      // Predicated region
      $region25: #{transformer_forward.40} parent=15 // pred_check
        %p146 = pneg %p81
      $region26: #{transformer_forward.40} parent=15 // pred_check_branch
        %148 = sbr.rel (%p146) target = $region28
      $region27: #{transformer_forward.40} parent=15 // pred_region
        %p149 = scmp.lt.s32.totalorder %s9, 1
        %s150 = scalar_select %p149, %s9, 1
        %s151 = smul.addr %s150, 8
        %s152 = scalar_lea.vmem %s2, %s151
      $region28: #{transformer_forward.40} parent=15 // pred_fallthru
        _
    $region16: #{transformer_forward.40} parent=5 // pred_fallthru
      _
    %p153 = scmp.le.s32.totalorder 1, %s9
    %p154 = scmp.lt.s32.totalorder %s9, 3
    %p155 = pnand %p153, %p154
    %p156 = pneg %p155
    // Predicated region
    $region29: #{transformer_forward.40} parent=5 // pred_check
      _
    $region30: #{transformer_forward.40} parent=5 // pred_check_branch
      %158 = sbr.rel (%p155) target = $region32
    $region31: #{transformer_forward.40} parent=5 // pred_region
      %s159 = ssub.s32 %s9, 1
      %p160 = scmp.lt.s32.totalorder %s14, 1
      %s161 = scalar_select %p160, %s14, 1
      %s162 = smul.addr %s161, 8
      %s163 = scalar_lea.vmem %s0, %s162
      %p164 = pneg %p35
      %p165 = pneg %p32
      %p166 = scmp.lt.s32.totalorder %s14, 1
      %s167 = scalar_select %p166, %s14, 1
      %s168 = smul.addr %s167, 8
      %s169 = scalar_lea.vmem %s1, %s168
      %p170 = pneg %p61
      %p171 = pneg %p58
      %p172 = scmp.lt.s32.totalorder %s14, 1
      %s173 = scalar_select %p172, %s14, 1
      %s174 = smul.addr %s173, 8
      %s175 = scalar_lea.vmem %s2, %s174
      %p176 = pneg %p87
      %p177 = pneg %p84
      %p178 = pneg %p113
      %p179 = pneg %p110
      %p180 = scmp.lt.s32.totalorder %s14, 1
      %s181 = scalar_select %p180, %s14, 1
      %s182 = smul.addr %s181, 8
      %s183 = scalar_lea.vmem %s3, %s182
      %p184 = scmp.lt.s32.totalorder %s14, 1
      %s185 = scalar_select %p184, %s14, 1
      %s186 = smul.addr %s185, 8
      %s187 = scalar_lea.vmem %s0, %s186
      %p188 = scmp.lt.s32.totalorder %s14, 1
      %s189 = scalar_select %p188, %s14, 1
      %s190 = smul.addr %s189, 8
      %s191 = scalar_lea.vmem %s1, %s190
      %p192 = scmp.lt.s32.totalorder %s14, 1
      %s193 = scalar_select %p192, %s14, 1
      %s194 = smul.addr %s193, 8
      %s195 = scalar_lea.vmem %s2, %s194
      %p196 = scmp.lt.s32.totalorder %s14, 1
      %s197 = scalar_select %p196, %s14, 1
      %s198 = smul.addr %s197, 8
      %s199 = scalar_lea.vmem %s3, %s198
      %v201 = vld [vmem:[%s187] sm:$0xff]
      %v202 = vld [vmem:[%s191] sm:$0xff]
      %v203 = vld [vmem:[%s195] sm:$0xff]
      %v204 = vlaneseq
      %v205 = vshrl.u32 %v204, 7
      %v206 = vlaneseq
      %v207 = vand.u32 %v206, 127
      %vm208 = vcmp.le.s32.totalorder %v207, %v205
      %v209 = vpack.c.bf16 %v201, %v201
      %v210 = vpack.c.bf16 %v202, %v202
      %v211 = vpack.c.bf16 %v203, %v203
      %vm212 = vcmask 261120
      %v214 = vsel %vm212, %v209, 0
      %v217 = vsel %vm212, %v210, 0
      %219 = vmatpush.bf16.xpose.msra.mxu0 0
      %220 = vmatpush.bf16.xpose.msra.mxu0 0
      %221 = vmatpush.bf16.xpose.msra.mxu0 0
      %222 = vmatpush.bf16.xpose.msra.mxu0 0
      %223 = vmatpush.bf16.xpose.msra.mxu0 0
      %224 = vmatpush.bf16.xpose.msra.mxu0 0
      %225 = vmatpush.bf16.xpose.msra.mxu0 0
      %226 = vmatpush.bf16.xpose.msra.mxu0 %v217
      %227 = vmatmul.bf16.gmra.mxu0 %v214
      %v228 = vpop.f32.mrf.mxu0
      %v229 = vadd.f32 0.0, %v228
      %v230 = vpop.f32.mrf.mxu0
      %231 = vdwg.mxu0
      %v232 = vmul.f32 %v229, 0.17677669
      %v233 = vsel %vm208, %v232, -1e+30
      %vm234 = vcmask 64512
      %v235 = vsel %vm234, %v233, -inf
      %236 = vmax.xlane.f32.xlu0 %v235
      %v237 = vpop.xlane.xlu0 %236
      %v238 = vsub.f32 %v233, %v237
      %v239 = vmul.f32 %v238, 1.442695
      %v240 = vpow.pop %v239
      %v241 = vsel %vm234, %v240, 0.0
      %242 = vadd.xlane.f32.xlu0 %v241
      %v243 = vpop.xlane.xlu0 %242
      %v244 = vpack.c.bf16 %v240, %v240
      %v246 = vsel %vm234, %v244, 0
      %vm248 = vcmask 1043456
      %v250 = vsel %vm248, %v211, 0
      %252 = vmatpush.bf16.msra.mxu0 0
      %253 = vmatpush.bf16.msra.mxu0 0
      %254 = vmatpush.bf16.msra.mxu0 0
      %255 = vmatpush.bf16.msra.mxu0 0
      %256 = vmatpush.bf16.msra.mxu0 0
      %257 = vmatpush.bf16.msra.mxu0 0
      %258 = vmatpush.bf16.msra.mxu0 0
      %259 = vmatpush.bf16.msra.mxu0 %v250
      %260 = vmatmul.bf16.gmra.mxu0 %v246
      %v261 = vpop.f32.mrf.mxu0
      %v262 = vadd.f32 0.0, %v261
      %v263 = vpop.f32.mrf.mxu0
      %264 = vdwg.mxu0
      %v265 = vrcp.pop %v243
      %v266 = vmul.f32 %v262, %v265
      %268 = vrot.lane.b32.xlu0 %v209, 96
      %v269 = vpop.permute.xlu0 %268
      %271 = vrot.lane.b32.xlu0 %v210, 96
      %v272 = vpop.permute.xlu0 %271
      %v274 = vsel %vm212, %v269, 0
      %v277 = vsel %vm212, %v272, 0
      %279 = vmatpush.bf16.xpose.msra.mxu0 0
      %280 = vmatpush.bf16.xpose.msra.mxu0 0
      %281 = vmatpush.bf16.xpose.msra.mxu0 0
      %282 = vmatpush.bf16.xpose.msra.mxu0 0
      %283 = vmatpush.bf16.xpose.msra.mxu0 0
      %284 = vmatpush.bf16.xpose.msra.mxu0 0
      %285 = vmatpush.bf16.xpose.msra.mxu0 0
      %286 = vmatpush.bf16.xpose.msra.mxu0 %v277
      %287 = vmatmul.bf16.gmra.mxu0 %v274
      %v288 = vpop.f32.mrf.mxu0
      %v289 = vadd.f32 0.0, %v288
      %v290 = vpop.f32.mrf.mxu0
      %291 = vdwg.mxu0
      %v292 = vmul.f32 %v289, 0.17677669
      %v293 = vsel %vm208, %v292, -1e+30
      %v294 = vsel %vm234, %v293, -inf
      %295 = vmax.xlane.f32.xlu0 %v294
      %v296 = vpop.xlane.xlu0 %295
      %v297 = vsub.f32 %v293, %v296
      %v298 = vmul.f32 %v297, 1.442695
      %v299 = vpow.pop %v298
      %v300 = vsel %vm234, %v299, 0.0
      %301 = vadd.xlane.f32.xlu0 %v300
      %v302 = vpop.xlane.xlu0 %301
      %v303 = vpack.c.bf16 %v299, %v299
      %305 = vrot.lane.b32.xlu0 %v211, 96
      %v306 = vpop.permute.xlu0 %305
      %v308 = vsel %vm234, %v303, 0
      %v311 = vsel %vm248, %v306, 0
      %313 = vmatpush.bf16.msra.mxu0 0
      %314 = vmatpush.bf16.msra.mxu0 0
      %315 = vmatpush.bf16.msra.mxu0 0
      %316 = vmatpush.bf16.msra.mxu0 0
      %317 = vmatpush.bf16.msra.mxu0 0
      %318 = vmatpush.bf16.msra.mxu0 0
      %319 = vmatpush.bf16.msra.mxu0 0
      %320 = vmatpush.bf16.msra.mxu0 %v311
      %321 = vmatmul.bf16.gmra.mxu0 %v308
      %v322 = vpop.f32.mrf.mxu0
      %v323 = vadd.f32 0.0, %v322
      %v324 = vpop.f32.mrf.mxu0
      %325 = vdwg.mxu0
      %v326 = vrcp.pop %v302
      %v327 = vmul.f32 %v323, %v326
      %328 = vrot.lane.b32.xlu0 %v209, 64
      %v329 = vpop.permute.xlu0 %328
      %330 = vrot.lane.b32.xlu0 %v210, 64
      %v331 = vpop.permute.xlu0 %330
      %v333 = vsel %vm212, %v329, 0
      %v336 = vsel %vm212, %v331, 0
      %338 = vmatpush.bf16.xpose.msra.mxu0 0
      %339 = vmatpush.bf16.xpose.msra.mxu0 0
      %340 = vmatpush.bf16.xpose.msra.mxu0 0
      %341 = vmatpush.bf16.xpose.msra.mxu0 0
      %342 = vmatpush.bf16.xpose.msra.mxu0 0
      %343 = vmatpush.bf16.xpose.msra.mxu0 0
      %344 = vmatpush.bf16.xpose.msra.mxu0 0
      %345 = vmatpush.bf16.xpose.msra.mxu0 %v336
      %346 = vmatmul.bf16.gmra.mxu0 %v333
      %v347 = vpop.f32.mrf.mxu0
      %v348 = vadd.f32 0.0, %v347
      %v349 = vpop.f32.mrf.mxu0
      %350 = vdwg.mxu0
      %v351 = vmul.f32 %v348, 0.17677669
      %v352 = vsel %vm208, %v351, -1e+30
      %v353 = vsel %vm234, %v352, -inf
      %354 = vmax.xlane.f32.xlu0 %v353
      %v355 = vpop.xlane.xlu0 %354
      %v356 = vsub.f32 %v352, %v355
      %v357 = vmul.f32 %v356, 1.442695
      %v358 = vpow.pop %v357
      %v359 = vsel %vm234, %v358, 0.0
      %360 = vadd.xlane.f32.xlu0 %v359
      %v361 = vpop.xlane.xlu0 %360
      %v362 = vpack.c.bf16 %v358, %v358
      %363 = vrot.lane.b32.xlu0 %v211, 64
      %v364 = vpop.permute.xlu0 %363
      %v366 = vsel %vm234, %v362, 0
      %v369 = vsel %vm248, %v364, 0
      %371 = vmatpush.bf16.msra.mxu0 0
      %372 = vmatpush.bf16.msra.mxu0 0
      %373 = vmatpush.bf16.msra.mxu0 0
      %374 = vmatpush.bf16.msra.mxu0 0
      %375 = vmatpush.bf16.msra.mxu0 0
      %376 = vmatpush.bf16.msra.mxu0 0
      %377 = vmatpush.bf16.msra.mxu0 0
      %378 = vmatpush.bf16.msra.mxu0 %v369
      %379 = vmatmul.bf16.gmra.mxu0 %v366
      %v380 = vpop.f32.mrf.mxu0
      %v381 = vadd.f32 0.0, %v380
      %v382 = vpop.f32.mrf.mxu0
      %383 = vdwg.mxu0
      %v384 = vrcp.pop %v361
      %v385 = vmul.f32 %v381, %v384
      %386 = vrot.lane.b32.xlu0 %v209, 32
      %v387 = vpop.permute.xlu0 %386
      %388 = vrot.lane.b32.xlu0 %v210, 32
      %v389 = vpop.permute.xlu0 %388
      %v391 = vsel %vm212, %v387, 0
      %v394 = vsel %vm212, %v389, 0
      %396 = vmatpush.bf16.xpose.msra.mxu0 0
      %397 = vmatpush.bf16.xpose.msra.mxu0 0
      %398 = vmatpush.bf16.xpose.msra.mxu0 0
      %399 = vmatpush.bf16.xpose.msra.mxu0 0
      %400 = vmatpush.bf16.xpose.msra.mxu0 0
      %401 = vmatpush.bf16.xpose.msra.mxu0 0
      %402 = vmatpush.bf16.xpose.msra.mxu0 0
      %403 = vmatpush.bf16.xpose.msra.mxu0 %v394
      %404 = vmatmul.bf16.gmra.mxu0 %v391
      %v405 = vpop.f32.mrf.mxu0
      %v406 = vadd.f32 0.0, %v405
      %v407 = vpop.f32.mrf.mxu0
      %408 = vdwg.mxu0
      %v409 = vmul.f32 %v406, 0.17677669
      %v410 = vsel %vm208, %v409, -1e+30
      %v411 = vsel %vm234, %v410, -inf
      %412 = vmax.xlane.f32.xlu0 %v411
      %v413 = vpop.xlane.xlu0 %412
      %v414 = vsub.f32 %v410, %v413
      %v415 = vmul.f32 %v414, 1.442695
      %v416 = vpow.pop %v415
      %v417 = vsel %vm234, %v416, 0.0
      %418 = vadd.xlane.f32.xlu0 %v417
      %v419 = vpop.xlane.xlu0 %418
      %v420 = vpack.c.bf16 %v416, %v416
      %421 = vrot.lane.b32.xlu0 %v211, 32
      %v422 = vpop.permute.xlu0 %421
      %v424 = vsel %vm234, %v420, 0
      %v427 = vsel %vm248, %v422, 0
      %429 = vmatpush.bf16.msra.mxu0 0
      %430 = vmatpush.bf16.msra.mxu0 0
      %431 = vmatpush.bf16.msra.mxu0 0
      %432 = vmatpush.bf16.msra.mxu0 0
      %433 = vmatpush.bf16.msra.mxu0 0
      %434 = vmatpush.bf16.msra.mxu0 0
      %435 = vmatpush.bf16.msra.mxu0 0
      %436 = vmatpush.bf16.msra.mxu0 %v427
      %437 = vmatmul.bf16.gmra.mxu0 %v424
      %v438 = vpop.f32.mrf.mxu0
      %v439 = vadd.f32 0.0, %v438
      %v440 = vpop.f32.mrf.mxu0
      %441 = vdwg.mxu0
      %v442 = vrcp.pop %v419
      %v443 = vmul.f32 %v439, %v442
      %445 = vrot.lane.b32.xlu0 %v327, 32
      %v446 = vpop.permute.xlu0 %445
      %449 = vrot.lane.b32.xlu0 %v385, 64
      %v450 = vpop.permute.xlu0 %449
      %453 = vrot.lane.b32.xlu0 %v443, 96
      %v454 = vpop.permute.xlu0 %453
      %v456 = vsel %vm212, %v266, %v446
      %vm457 = vcmask 523264
      %v458 = vsel %vm457, %v456, %v450
      %vm459 = vcmask 785408
      %v460 = vsel %vm459, %v458, %v454
      %461 = vst [vmem:[%s199] sm:$0xff] %v460
      %p462 = scmp.lt.s32.totalorder %s14, 1
      %s463 = scalar_select %p462, %s14, 1
      %s464 = smul.addr %s463, 8
      %s465 = scalar_lea.vmem %s3, %s464
      // Predicated region
      $region33: #{transformer_forward.40} parent=31 // pred_check
        %p466 = pneg %p110
      $region34: #{transformer_forward.40} parent=31 // pred_check_branch
        %468 = sbr.rel (%p466) target = $region36
      $region35: #{transformer_forward.40} parent=31 // pred_region
        _
      $region36: #{transformer_forward.40} parent=31 // pred_fallthru
        _
    $region32: #{transformer_forward.40} parent=5 // pred_fallthru
      _
    %p469 = scmp.le.s32.totalorder 2, %s9
    // Predicated region
    $region37: #{transformer_forward.40} parent=5 // pred_check
      %p470 = pneg %p469
    $region38: #{transformer_forward.40} parent=5 // pred_check_branch
      %472 = sbr.rel (%p470) target = $region40
    $region39: #{transformer_forward.40} parent=5 // pred_region
      %s473 = ssub.s32 %s9, 2
      // Predicated region
      $region41: #{transformer_forward.40} parent=39 // pred_check
        %p474 = pneg %p116
      $region42: #{transformer_forward.40} parent=39 // pred_check_branch
        %476 = sbr.rel (%p474) target = $region44
      $region43: #{transformer_forward.40} parent=39 // pred_region
        %p477 = scmp.lt.s32.totalorder %s15, 1
        %s478 = scalar_select %p477, %s15, 1
        %s479 = smul.addr %s478, 8
        %s480 = scalar_lea.vmem %s3, %s479
      $region44: #{transformer_forward.40} parent=39 // pred_fallthru
        _
    $region40: #{transformer_forward.40} parent=5 // pred_fallthru
      _
  $region6: #{transformer_forward.40} parent=0 // loop_footer
    %s13 = sadd.s32 1, %s9
  $region7: #{transformer_forward.40} parent=0 // loop_footer_branch
    %8 = sbr.rel target = $region3
  $region8: #{transformer_forward.40} parent=0 // loop_exit
    _

// kernel: transformer_forward.42
$region0: #{transformer_forward.42}
  #allocation0 [shape = 'u32[]', space=smem, size = 0x4, offset = 0x4, fixed_abs, tag = 'smem constant byte address 0x4 - core index']
  #allocation1 [shape = 'u32[72,128]{1,0:T(1,128)}', space=vmem, size = 0x9000, scoped, tag = 'internal scratch']
  #allocation2 [shape = 'f32[8,128]{1,0:T(8,128)}', space=vmem, size = 0x1000, scoped, tag = 'scratch operand']
  %s0 = inlined_call_operand.vmem [shape: f32[16,128], index: 0, kind: input, shape index: {}]
  %s1 = inlined_call_operand.vmem [shape: bf16[128,128], index: 1, kind: input, shape index: {}]
  %s2 = inlined_call_operand.vmem [shape: f32[1,128], index: 2, kind: input, shape index: {}]
  %s3 = inlined_call_operand.vmem [shape: f32[16,128], index: 3, kind: output, shape index: {}]
  %s4 = sld [smem:[#allocation0]]
  $region53: #{transformer_forward.42} parent=0
    _
  %s6 = ssub.s32 1, %s4
  %s7 = scalar_select 0, %s6, %s4
  loop: start=0, step=1, limit=4
  $region2: #{transformer_forward.42} parent=0 // loop_pre_header
    _
  $region3: #{transformer_forward.42} parent=0 // loop_header
    %s9 = sphi 0, %s13
    %p10 = scmp.ge.s32.totalorder %s9, 4
    %s16 = sphi 0, %s35
    %s17 = sphi 0, %s31
    %s18 = sphi 0, %s27
    %s19 = sphi 0, %s16
    %s20 = sphi 0, %s17
    %s21 = sphi 0, %s18
    %s22 = sphi 0, %s19
    %s23 = sphi 0, %s20
    %s24 = sphi 0, %s21
    %s40 = sphi 0, %s42
    %s43 = sphi 0, %s40
    %s44 = sphi 0, %s43
    %s60 = sphi 0, %s44
    %s68 = sphi 0, %s70
    %s71 = sphi 0, %s68
    %s72 = sphi 0, %s71
    %s88 = sphi 0, %s72
    %s94 = sphi 0, %s96
    %s97 = sphi 0, %s94
    %s98 = sphi 0, %s97
    %s114 = sphi 0, %s98
    %s122 = sphi 0, %s124
    %s125 = sphi 0, %s122
    %s126 = sphi 0, %s125
    %s142 = sphi 0, %s126
  $region4: #{transformer_forward.42} parent=0 // loop_header_branch
    %12 = sbr.rel (%p10) target = $region8
  $region5: #{transformer_forward.42} parent=0 // loop_body
    %s14 = ssub.s32 %s9, 1
    %s15 = ssub.s32 %s9, 2
    %s25 = sadd.s32 1, %s18
    %p26 = scmp.ge.s32.totalorder %s25, 1
    %s27 = scalar_select %p26, 0, %s25
    %s28 = sadd.s32 1, %s17
    %s29 = scalar_select %p26, %s28, %s17
    %p30 = scmp.ge.s32.totalorder %s29, 1
    %s31 = scalar_select %p30, 0, %s29
    %s32 = sadd.s32 1, %s16
    %s33 = scalar_select %p30, %s32, %s16
    %p34 = scmp.ge.s32.totalorder %s33, 2
    %s35 = scalar_select %p34, 0, %s33
    %s36 = ssub.s32 %s16, %s35
    %s37 = ssub.s32 %s18, %s27
    %s38 = sor.u32 %s36, %s37
    %p39 = scmp.eq.s32.totalorder %s38, 0
    %s41 = sadd.s32 %s40, 1
    %s42 = scalar_select %p39, %s40, %s41
    %p45 = pneg %p39
    %p46 = scmp.eq.s32.totalorder %s9, 1
    %p47 = por %p45, %p46
    %p48 = scmp.ne.s32.totalorder %s40, %s43
    %p49 = scmp.eq.s32.totalorder %s9, 0
    %p50 = por %p48, %p49
    %p51 = scmp.ne.s32.totalorder %s40, %s43
    %p52 = scmp.eq.s32.totalorder %s14, 1
    %p53 = por %p51, %p52
    %p54 = scmp.ne.s32.totalorder %s43, %s44
    %p55 = scmp.eq.s32.totalorder %s14, 0
    %p56 = por %p54, %p55
    %p57 = scmp.ne.s32.totalorder %s43, %s44
    %p58 = scmp.eq.s32.totalorder %s15, 1
    %p59 = por %p57, %p58
    %p61 = scmp.ne.s32.totalorder %s44, %s60
    %p62 = scmp.eq.s32.totalorder %s15, 0
    %p63 = por %p61, %p62
    %s64 = ssub.s32 %s18, %s27
    %s65 = ssub.s32 %s17, %s31
    %s66 = sor.u32 %s64, %s65
    %p67 = scmp.eq.s32.totalorder %s66, 0
    %s69 = sadd.s32 %s68, 1
    %s70 = scalar_select %p67, %s68, %s69
    %p73 = pneg %p67
    %p74 = scmp.eq.s32.totalorder %s9, 1
    %p75 = por %p73, %p74
    %p76 = scmp.ne.s32.totalorder %s68, %s71
    %p77 = scmp.eq.s32.totalorder %s9, 0
    %p78 = por %p76, %p77
    %p79 = scmp.ne.s32.totalorder %s68, %s71
    %p80 = scmp.eq.s32.totalorder %s14, 1
    %p81 = por %p79, %p80
    %p82 = scmp.ne.s32.totalorder %s71, %s72
    %p83 = scmp.eq.s32.totalorder %s14, 0
    %p84 = por %p82, %p83
    %p85 = scmp.ne.s32.totalorder %s71, %s72
    %p86 = scmp.eq.s32.totalorder %s15, 1
    %p87 = por %p85, %p86
    %p89 = scmp.ne.s32.totalorder %s72, %s88
    %p90 = scmp.eq.s32.totalorder %s15, 0
    %p91 = por %p89, %p90
    %s92 = ssub.s32 %s17, %s31
    %p93 = scmp.eq.s32.totalorder %s92, 0
    %s95 = sadd.s32 %s94, 1
    %s96 = scalar_select %p93, %s94, %s95
    %p99 = pneg %p93
    %p100 = scmp.eq.s32.totalorder %s9, 1
    %p101 = por %p99, %p100
    %p102 = scmp.ne.s32.totalorder %s94, %s97
    %p103 = scmp.eq.s32.totalorder %s9, 0
    %p104 = por %p102, %p103
    %p105 = scmp.ne.s32.totalorder %s94, %s97
    %p106 = scmp.eq.s32.totalorder %s14, 1
    %p107 = por %p105, %p106
    %p108 = scmp.ne.s32.totalorder %s97, %s98
    %p109 = scmp.eq.s32.totalorder %s14, 0
    %p110 = por %p108, %p109
    %p111 = scmp.ne.s32.totalorder %s97, %s98
    %p112 = scmp.eq.s32.totalorder %s15, 1
    %p113 = por %p111, %p112
    %p115 = scmp.ne.s32.totalorder %s98, %s114
    %p116 = scmp.eq.s32.totalorder %s15, 0
    %p117 = por %p115, %p116
    %s118 = ssub.s32 %s16, %s35
    %s119 = ssub.s32 %s17, %s31
    %s120 = sor.u32 %s118, %s119
    %p121 = scmp.eq.s32.totalorder %s120, 0
    %s123 = sadd.s32 %s122, 1
    %s124 = scalar_select %p121, %s122, %s123
    %p127 = pneg %p121
    %p128 = scmp.eq.s32.totalorder %s9, 1
    %p129 = por %p127, %p128
    %p130 = scmp.ne.s32.totalorder %s122, %s125
    %p131 = scmp.eq.s32.totalorder %s9, 0
    %p132 = por %p130, %p131
    %p133 = scmp.ne.s32.totalorder %s122, %s125
    %p134 = scmp.eq.s32.totalorder %s14, 1
    %p135 = por %p133, %p134
    %p136 = scmp.ne.s32.totalorder %s125, %s126
    %p137 = scmp.eq.s32.totalorder %s14, 0
    %p138 = por %p136, %p137
    %p139 = scmp.ne.s32.totalorder %s125, %s126
    %p140 = scmp.eq.s32.totalorder %s15, 1
    %p141 = por %p139, %p140
    %p143 = scmp.ne.s32.totalorder %s126, %s142
    %p144 = scmp.eq.s32.totalorder %s15, 0
    %p145 = por %p143, %p144
    %p146 = scmp.le.s32.totalorder 1, %s9
    %p147 = scmp.lt.s32.totalorder %s9, 3
    %p148 = pnand %p146, %p147
    %p149 = pneg %p148
    // Predicated region
    $region9: #{transformer_forward.42} parent=5 // pred_check
      _
    $region10: #{transformer_forward.42} parent=5 // pred_check_branch
      %151 = sbr.rel (%p148) target = $region12
    $region11: #{transformer_forward.42} parent=5 // pred_region
      %s152 = ssub.s32 %s9, 1
      // Predicated region
      $region13: #{transformer_forward.42} parent=11 // pred_check
        %p153 = pneg %p84
      $region14: #{transformer_forward.42} parent=11 // pred_check_branch
        %155 = sbr.rel (%p153) target = $region16
      $region15: #{transformer_forward.42} parent=11 // pred_region
        %s156 = smul.u32 16, %s21
        %p157 = scmp.lt.s32.totalorder %s156, 15
        %s158 = scalar_select %p157, %s156, 15
        %p159 = scmp.lt.s32.totalorder %s20, 0
        %s160 = scalar_select %p159, %s20, 0
        %s161 = sadd.s32 %s160, %s158
        %s162 = smul.addr %s161, 4
        %s163 = scalar_lea.vmem %s1, %s162
        %s164 = smul.u32 16, %s21
      $region16: #{transformer_forward.42} parent=11 // pred_fallthru
        _
      // Predicated region
      $region17: #{transformer_forward.42} parent=11 // pred_check
        %p165 = pneg %p110
      $region18: #{transformer_forward.42} parent=11 // pred_check_branch
        %167 = sbr.rel (%p165) target = $region20
      $region19: #{transformer_forward.42} parent=11 // pred_region
        %p168 = scmp.lt.s32.totalorder %s20, 0
        %s169 = scalar_select %p168, %s20, 0
        %s170 = scalar_lea.vmem %s2, %s169
      $region20: #{transformer_forward.42} parent=11 // pred_fallthru
        _
    $region12: #{transformer_forward.42} parent=5 // pred_fallthru
      _
    %p171 = scmp.lt.s32.totalorder %s9, 2
    // Predicated region
    $region21: #{transformer_forward.42} parent=5 // pred_check
      %p172 = pneg %p171
    $region22: #{transformer_forward.42} parent=5 // pred_check_branch
      %174 = sbr.rel (%p172) target = $region24
    $region23: #{transformer_forward.42} parent=5 // pred_region
      // Predicated region
      $region25: #{transformer_forward.42} parent=23 // pred_check
        %p175 = pneg %p50
      $region26: #{transformer_forward.42} parent=23 // pred_check_branch
        %177 = sbr.rel (%p175) target = $region28
      $region27: #{transformer_forward.42} parent=23 // pred_region
        %p178 = scmp.lt.s32.totalorder %s16, 1
        %s179 = scalar_select %p178, %s16, 1
        %p180 = scmp.lt.s32.totalorder %s18, 0
        %s181 = scalar_select %p180, %s18, 0
        %s182 = sadd.s32 %s181, %s179
        %s183 = smul.addr %s182, 8
        %s184 = scalar_lea.vmem %s0, %s183
      $region28: #{transformer_forward.42} parent=23 // pred_fallthru
        _
    $region24: #{transformer_forward.42} parent=5 // pred_fallthru
      _
    %p185 = scmp.le.s32.totalorder 1, %s9
    %p186 = scmp.lt.s32.totalorder %s9, 3
    %p187 = pnand %p185, %p186
    %p188 = pneg %p187
    // Predicated region
    $region29: #{transformer_forward.42} parent=5 // pred_check
      _
    $region30: #{transformer_forward.42} parent=5 // pred_check_branch
      %190 = sbr.rel (%p187) target = $region32
    $region31: #{transformer_forward.42} parent=5 // pred_region
      %s191 = ssub.s32 %s9, 1
      %p192 = scmp.lt.s32.totalorder %s19, 1
      %s193 = scalar_select %p192, %s19, 1
      %p194 = scmp.lt.s32.totalorder %s21, 0
      %s195 = scalar_select %p194, %s21, 0
      %s196 = sadd.s32 %s195, %s193
      %s197 = smul.addr %s196, 8
      %s198 = scalar_lea.vmem %s0, %s197
      %p199 = pneg %p56
      %p200 = pneg %p53
      %s201 = smul.u32 16, %s21
      %p202 = scmp.lt.s32.totalorder %s201, 15
      %s203 = scalar_select %p202, %s201, 15
      %p204 = scmp.lt.s32.totalorder %s20, 0
      %s205 = scalar_select %p204, %s20, 0
      %s206 = sadd.s32 %s205, %s203
      %s207 = smul.addr %s206, 4
      %s208 = scalar_lea.vmem %s1, %s207
      %p209 = pneg %p84
      %p210 = pneg %p81
      %p211 = scmp.lt.s32.totalorder %s20, 0
      %s212 = scalar_select %p211, %s20, 0
      %s213 = scalar_lea.vmem %s2, %s212
      %p214 = pneg %p110
      %p215 = pneg %p107
      %p216 = pneg %p138
      %p217 = pneg %p135
      %p218 = scmp.lt.s32.totalorder %s19, 1
      %s219 = scalar_select %p218, %s19, 1
      %p220 = scmp.lt.s32.totalorder %s20, 0
      %s221 = scalar_select %p220, %s20, 0
      %s222 = sadd.s32 %s221, %s219
      %s223 = smul.addr %s222, 8
      %s224 = scalar_lea.vmem %s3, %s223
      %p225 = scmp.lt.s32.totalorder %s19, 1
      %s226 = scalar_select %p225, %s19, 1
      %p227 = scmp.lt.s32.totalorder %s21, 0
      %s228 = scalar_select %p227, %s21, 0
      %s229 = sadd.s32 %s228, %s226
      %s230 = smul.addr %s229, 8
      %s231 = scalar_lea.vmem %s0, %s230
      %s232 = smul.u32 16, %s21
      %p233 = scmp.lt.s32.totalorder %s232, 15
      %s234 = scalar_select %p233, %s232, 15
      %p235 = scmp.lt.s32.totalorder %s20, 0
      %s236 = scalar_select %p235, %s20, 0
      %s237 = sadd.s32 %s236, %s234
      %s238 = smul.addr %s237, 4
      %s239 = scalar_lea.vmem %s1, %s238
      %s240 = smul.u32 16, %s21
      %p241 = scmp.lt.s32.totalorder %s20, 0
      %s242 = scalar_select %p241, %s20, 0
      %s243 = scalar_lea.vmem %s2, %s242
      %p244 = scmp.lt.s32.totalorder %s19, 1
      %s245 = scalar_select %p244, %s19, 1
      %p246 = scmp.lt.s32.totalorder %s20, 0
      %s247 = scalar_select %p246, %s20, 0
      %s248 = sadd.s32 %s247, %s245
      %s249 = smul.addr %s248, 8
      %s250 = scalar_lea.vmem %s3, %s249
      %p251 = scmp.eq.s32.totalorder %s21, 0
      // Predicated region
      $region33: #{transformer_forward.42} parent=31 // pred_check
        %p252 = pneg %p251
      $region34: #{transformer_forward.42} parent=31 // pred_check_branch
        %254 = sbr.rel (%p252) target = $region36
      $region35: #{transformer_forward.42} parent=31 // pred_region
        %255 = vst [vmem:[#allocation2] sm:$0xff] 0.0
      $region36: #{transformer_forward.42} parent=31 // pred_fallthru
        _
      %v256 = vld [vmem:[%s231] sm:$0xff]
      %v257 = vld [vmem:[#allocation2] sm:$0xff]
      %v258 = vpack.c.bf16 %v256, %v256
      %v259 = vld [vmem:[%s239] sm:$0xf]
      %v260 = vld [vmem:[%s239 + $0x4] sm:$0xf]
      %v261 = vld [vmem:[%s239 + $0x8] sm:$0xf]
      %v262 = vld [vmem:[%s239 + $0xc] sm:$0xf]
      %v263 = vld [vmem:[%s239 + $0x10] sm:$0xf]
      %v264 = vld [vmem:[%s239 + $0x14] sm:$0xf]
      %v265 = vld [vmem:[%s239 + $0x18] sm:$0xf]
      %v266 = vld [vmem:[%s239 + $0x1c] sm:$0xf]
      %v267 = vld [vmem:[%s239 + $0x20] sm:$0xf]
      %v268 = vld [vmem:[%s239 + $0x24] sm:$0xf]
      %v269 = vld [vmem:[%s239 + $0x28] sm:$0xf]
      %v270 = vld [vmem:[%s239 + $0x2c] sm:$0xf]
      %v271 = vld [vmem:[%s239 + $0x30] sm:$0xf]
      %v272 = vld [vmem:[%s239 + $0x34] sm:$0xf]
      %v273 = vld [vmem:[%s239 + $0x38] sm:$0xf]
      %v274 = vld [vmem:[%s239 + $0x3c] sm:$0xf]
      %v291 = vunpack.c.l.b16 %v259
      %v292 = vunpack.c.l.b16 %v260
      %v293 = vunpack.c.l.b16 %v261
      %v294 = vunpack.c.l.b16 %v262
      %v295 = vunpack.c.l.b16 %v263
      %v296 = vunpack.c.l.b16 %v264
      %v297 = vunpack.c.l.b16 %v265
      %v298 = vunpack.c.l.b16 %v266
      %v299 = vunpack.c.l.b16 %v267
      %v300 = vunpack.c.l.b16 %v268
      %v301 = vunpack.c.l.b16 %v269
      %v302 = vunpack.c.l.b16 %v270
      %v303 = vunpack.c.l.b16 %v271
      %v304 = vunpack.c.l.b16 %v272
      %v305 = vunpack.c.l.b16 %v273
      %v306 = vunpack.c.l.b16 %v274
      %v307 = vpack.c.b16 %v292, %v291
      %v308 = vpack.c.b16 %v294, %v293
      %v309 = vpack.c.b16 %v296, %v295
      %v310 = vpack.c.b16 %v298, %v297
      %v311 = vpack.c.b16 %v300, %v299
      %v312 = vpack.c.b16 %v302, %v301
      %v313 = vpack.c.b16 %v304, %v303
      %v314 = vpack.c.b16 %v306, %v305
      %323 = vmatpush.bf16.msra.mxu0 %v314
      %324 = vmatpush.bf16.msra.mxu0 %v313
      %325 = vmatpush.bf16.msra.mxu0 %v312
      %326 = vmatpush.bf16.msra.mxu0 %v311
      %327 = vmatpush.bf16.msra.mxu0 %v310
      %328 = vmatpush.bf16.msra.mxu0 %v309
      %329 = vmatpush.bf16.msra.mxu0 %v308
      %330 = vmatpush.bf16.msra.mxu0 %v307
      %331 = vmatmul.bf16.gmra.mxu0 %v258
      %v332 = vpop.f32.mrf.mxu0
      %v333 = vadd.f32 0.0, %v332
      %v334 = vpop.f32.mrf.mxu0
      %335 = vdwg.mxu0
      %v336 = vadd.f32 %v257, %v333
      %337 = vst [vmem:[#allocation2] sm:$0xff] %v336
      // Predicated region
      $region37: #{transformer_forward.42} parent=31 // pred_check
        %p338 = pneg %p251
      $region38: #{transformer_forward.42} parent=31 // pred_check_branch
        %340 = sbr.rel (%p338) target = $region40
      $region39: #{transformer_forward.42} parent=31 // pred_region
        %v341 = vld [vmem:[#allocation2] sm:$0xff]
        %v342 = vld [vmem:[%s243] sm:$0x1]
        %v344 = vperm.slane %v342, 0
        %v346 = vadd.f32 %v341, %v344
        %347 = vst [vmem:[%s250] sm:$0xff] %v346
      $region40: #{transformer_forward.42} parent=31 // pred_fallthru
        _
      %p348 = scmp.lt.s32.totalorder %s19, 1
      %s349 = scalar_select %p348, %s19, 1
      %p350 = scmp.lt.s32.totalorder %s20, 0
      %s351 = scalar_select %p350, %s20, 0
      %s352 = sadd.s32 %s351, %s349
      %s353 = smul.addr %s352, 8
      %s354 = scalar_lea.vmem %s3, %s353
      // Predicated region
      $region41: #{transformer_forward.42} parent=31 // pred_check
        %p355 = pneg %p135
      $region42: #{transformer_forward.42} parent=31 // pred_check_branch
        %357 = sbr.rel (%p355) target = $region44
      $region43: #{transformer_forward.42} parent=31 // pred_region
        _
      $region44: #{transformer_forward.42} parent=31 // pred_fallthru
        _
    $region32: #{transformer_forward.42} parent=5 // pred_fallthru
      _
    %p358 = scmp.le.s32.totalorder 2, %s9
    // Predicated region
    $region45: #{transformer_forward.42} parent=5 // pred_check
      %p359 = pneg %p358
    $region46: #{transformer_forward.42} parent=5 // pred_check_branch
      %361 = sbr.rel (%p359) target = $region48
    $region47: #{transformer_forward.42} parent=5 // pred_region
      %s362 = ssub.s32 %s9, 2
      // Predicated region
      $region49: #{transformer_forward.42} parent=47 // pred_check
        %p363 = pneg %p141
      $region50: #{transformer_forward.42} parent=47 // pred_check_branch
        %365 = sbr.rel (%p363) target = $region52
      $region51: #{transformer_forward.42} parent=47 // pred_region
        %p366 = scmp.lt.s32.totalorder %s22, 1
        %s367 = scalar_select %p366, %s22, 1
        %p368 = scmp.lt.s32.totalorder %s23, 0
        %s369 = scalar_select %p368, %s23, 0
        %s370 = sadd.s32 %s369, %s367
        %s371 = smul.addr %s370, 8
        %s372 = scalar_lea.vmem %s3, %s371
      $region52: #{transformer_forward.42} parent=47 // pred_fallthru
        _
    $region48: #{transformer_forward.42} parent=5 // pred_fallthru
      _
  $region6: #{transformer_forward.42} parent=0 // loop_footer
    %s13 = sadd.s32 1, %s9
  $region7: #{transformer_forward.42} parent=0 // loop_footer_branch
    %8 = sbr.rel target = $region3
  $region8: #{transformer_forward.42} parent=0 // loop_exit
    _

// kernel: transformer_forward.55
$region0: #{transformer_forward.55}
  #allocation0 [shape = 'u32[]', space=smem, size = 0x4, offset = 0x4, fixed_abs, tag = 'smem constant byte address 0x4 - core index']
  #allocation1 [shape = 'u32[72,128]{1,0:T(1,128)}', space=vmem, size = 0x9000, scoped, tag = 'internal scratch']
  #allocation2 [shape = 'f32[8,128]{1,0:T(8,128)}', space=vmem, size = 0x1000, scoped, tag = 'scratch operand']
  %s0 = inlined_call_operand.vmem [shape: f32[16,128], index: 0, kind: input, shape index: {}]
  %s1 = inlined_call_operand.vmem [shape: bf16[128,128], index: 1, kind: input, shape index: {}]
  %s2 = inlined_call_operand.vmem [shape: f32[1,128], index: 2, kind: input, shape index: {}]
  %s3 = inlined_call_operand.vmem [shape: f32[1,128], index: 3, kind: input, shape index: {}]
  %s4 = inlined_call_operand.vmem [shape: f32[1,128], index: 4, kind: input, shape index: {}]
  %s5 = inlined_call_operand.hbm [shape: f32[16,128], index: 5, kind: output, shape index: {}]
  %s6 = sld [smem:[#allocation0]]
  $region61: #{transformer_forward.55} parent=0
    _
  %s8 = ssub.s32 1, %s6
  %s9 = scalar_select 0, %s8, %s6
  $region1: #{transformer_forward.55} parent=0
    #allocation3 [shape = 'u8[8192]{0}', space=vmem, size = 0x2000, scoped, tag = 'output window, operand 0']
    #allocation4 [shape = 's32[2]{0}', space=sflag, size = 0x8, scoped, tag = 'scoped memory for transformer_forward.55']
    %10 = vsyncpa [#allocation4], 0
    %s11 = scalar_lea.sflag [#allocation4], 1
    %12 = vsyncpa %s11, 0
    loop: start=0, step=1, limit=4
    $region2: #{transformer_forward.55} parent=1 // loop_pre_header
      _
    $region3: #{transformer_forward.55} parent=1 // loop_header
      %s14 = sphi 0, %s18
      %p15 = scmp.ge.s32.totalorder %s14, 4
      %s21 = sphi 0, %s40
      %s22 = sphi 0, %s36
      %s23 = sphi 0, %s32
      %s24 = sphi 0, %s21
      %s25 = sphi 0, %s22
      %s26 = sphi 0, %s23
      %s27 = sphi 0, %s24
      %s28 = sphi 0, %s25
      %s29 = sphi 0, %s26
      %s45 = sphi 0, %s47
      %s48 = sphi 0, %s45
      %s49 = sphi 0, %s48
      %s65 = sphi 0, %s49
      %s73 = sphi 0, %s75
      %s76 = sphi 0, %s73
      %s77 = sphi 0, %s76
      %s93 = sphi 0, %s77
      %s99 = sphi 0, %s101
      %s102 = sphi 0, %s99
      %s103 = sphi 0, %s102
      %s119 = sphi 0, %s103
      %s125 = sphi 0, %s127
      %s128 = sphi 0, %s125
      %s129 = sphi 0, %s128
      %s145 = sphi 0, %s129
      %s151 = sphi 0, %s153
      %s154 = sphi 0, %s151
      %s155 = sphi 0, %s154
      %s171 = sphi 0, %s155
      %s179 = sphi 0, %s181
      %s182 = sphi 0, %s179
      %s183 = sphi 0, %s182
      %s199 = sphi 0, %s183
    $region4: #{transformer_forward.55} parent=1 // loop_header_branch
      %17 = sbr.rel (%p15) target = $region8
    $region5: #{transformer_forward.55} parent=1 // loop_body
      %s19 = ssub.s32 %s14, 1
      %s20 = ssub.s32 %s14, 2
      %s30 = sadd.s32 1, %s23
      %p31 = scmp.ge.s32.totalorder %s30, 1
      %s32 = scalar_select %p31, 0, %s30
      %s33 = sadd.s32 1, %s22
      %s34 = scalar_select %p31, %s33, %s22
      %p35 = scmp.ge.s32.totalorder %s34, 1
      %s36 = scalar_select %p35, 0, %s34
      %s37 = sadd.s32 1, %s21
      %s38 = scalar_select %p35, %s37, %s21
      %p39 = scmp.ge.s32.totalorder %s38, 2
      %s40 = scalar_select %p39, 0, %s38
      %s41 = ssub.s32 %s21, %s40
      %s42 = ssub.s32 %s23, %s32
      %s43 = sor.u32 %s41, %s42
      %p44 = scmp.eq.s32.totalorder %s43, 0
      %s46 = sadd.s32 %s45, 1
      %s47 = scalar_select %p44, %s45, %s46
      %p50 = pneg %p44
      %p51 = scmp.eq.s32.totalorder %s14, 1
      %p52 = por %p50, %p51
      %p53 = scmp.ne.s32.totalorder %s45, %s48
      %p54 = scmp.eq.s32.totalorder %s14, 0
      %p55 = por %p53, %p54
      %p56 = scmp.ne.s32.totalorder %s45, %s48
      %p57 = scmp.eq.s32.totalorder %s19, 1
      %p58 = por %p56, %p57
      %p59 = scmp.ne.s32.totalorder %s48, %s49
      %p60 = scmp.eq.s32.totalorder %s19, 0
      %p61 = por %p59, %p60
      %p62 = scmp.ne.s32.totalorder %s48, %s49
      %p63 = scmp.eq.s32.totalorder %s20, 1
      %p64 = por %p62, %p63
      %p66 = scmp.ne.s32.totalorder %s49, %s65
      %p67 = scmp.eq.s32.totalorder %s20, 0
      %p68 = por %p66, %p67
      %s69 = ssub.s32 %s23, %s32
      %s70 = ssub.s32 %s22, %s36
      %s71 = sor.u32 %s69, %s70
      %p72 = scmp.eq.s32.totalorder %s71, 0
      %s74 = sadd.s32 %s73, 1
      %s75 = scalar_select %p72, %s73, %s74
      %p78 = pneg %p72
      %p79 = scmp.eq.s32.totalorder %s14, 1
      %p80 = por %p78, %p79
      %p81 = scmp.ne.s32.totalorder %s73, %s76
      %p82 = scmp.eq.s32.totalorder %s14, 0
      %p83 = por %p81, %p82
      %p84 = scmp.ne.s32.totalorder %s73, %s76
      %p85 = scmp.eq.s32.totalorder %s19, 1
      %p86 = por %p84, %p85
      %p87 = scmp.ne.s32.totalorder %s76, %s77
      %p88 = scmp.eq.s32.totalorder %s19, 0
      %p89 = por %p87, %p88
      %p90 = scmp.ne.s32.totalorder %s76, %s77
      %p91 = scmp.eq.s32.totalorder %s20, 1
      %p92 = por %p90, %p91
      %p94 = scmp.ne.s32.totalorder %s77, %s93
      %p95 = scmp.eq.s32.totalorder %s20, 0
      %p96 = por %p94, %p95
      %s97 = ssub.s32 %s22, %s36
      %p98 = scmp.eq.s32.totalorder %s97, 0
      %s100 = sadd.s32 %s99, 1
      %s101 = scalar_select %p98, %s99, %s100
      %p104 = pneg %p98
      %p105 = scmp.eq.s32.totalorder %s14, 1
      %p106 = por %p104, %p105
      %p107 = scmp.ne.s32.totalorder %s99, %s102
      %p108 = scmp.eq.s32.totalorder %s14, 0
      %p109 = por %p107, %p108
      %p110 = scmp.ne.s32.totalorder %s99, %s102
      %p111 = scmp.eq.s32.totalorder %s19, 1
      %p112 = por %p110, %p111
      %p113 = scmp.ne.s32.totalorder %s102, %s103
      %p114 = scmp.eq.s32.totalorder %s19, 0
      %p115 = por %p113, %p114
      %p116 = scmp.ne.s32.totalorder %s102, %s103
      %p117 = scmp.eq.s32.totalorder %s20, 1
      %p118 = por %p116, %p117
      %p120 = scmp.ne.s32.totalorder %s103, %s119
      %p121 = scmp.eq.s32.totalorder %s20, 0
      %p122 = por %p120, %p121
      %s123 = ssub.s32 %s23, %s32
      %p124 = scmp.eq.s32.totalorder %s123, 0
      %s126 = sadd.s32 %s125, 1
      %s127 = scalar_select %p124, %s125, %s126
      %p130 = pneg %p124
      %p131 = scmp.eq.s32.totalorder %s14, 1
      %p132 = por %p130, %p131
      %p133 = scmp.ne.s32.totalorder %s125, %s128
      %p134 = scmp.eq.s32.totalorder %s14, 0
      %p135 = por %p133, %p134
      %p136 = scmp.ne.s32.totalorder %s125, %s128
      %p137 = scmp.eq.s32.totalorder %s19, 1
      %p138 = por %p136, %p137
      %p139 = scmp.ne.s32.totalorder %s128, %s129
      %p140 = scmp.eq.s32.totalorder %s19, 0
      %p141 = por %p139, %p140
      %p142 = scmp.ne.s32.totalorder %s128, %s129
      %p143 = scmp.eq.s32.totalorder %s20, 1
      %p144 = por %p142, %p143
      %p146 = scmp.ne.s32.totalorder %s129, %s145
      %p147 = scmp.eq.s32.totalorder %s20, 0
      %p148 = por %p146, %p147
      %s149 = ssub.s32 %s23, %s32
      %p150 = scmp.eq.s32.totalorder %s149, 0
      %s152 = sadd.s32 %s151, 1
      %s153 = scalar_select %p150, %s151, %s152
      %p156 = pneg %p150
      %p157 = scmp.eq.s32.totalorder %s14, 1
      %p158 = por %p156, %p157
      %p159 = scmp.ne.s32.totalorder %s151, %s154
      %p160 = scmp.eq.s32.totalorder %s14, 0
      %p161 = por %p159, %p160
      %p162 = scmp.ne.s32.totalorder %s151, %s154
      %p163 = scmp.eq.s32.totalorder %s19, 1
      %p164 = por %p162, %p163
      %p165 = scmp.ne.s32.totalorder %s154, %s155
      %p166 = scmp.eq.s32.totalorder %s19, 0
      %p167 = por %p165, %p166
      %p168 = scmp.ne.s32.totalorder %s154, %s155
      %p169 = scmp.eq.s32.totalorder %s20, 1
      %p170 = por %p168, %p169
      %p172 = scmp.ne.s32.totalorder %s155, %s171
      %p173 = scmp.eq.s32.totalorder %s20, 0
      %p174 = por %p172, %p173
      %s175 = ssub.s32 %s21, %s40
      %s176 = ssub.s32 %s22, %s36
      %s177 = sor.u32 %s175, %s176
      %p178 = scmp.eq.s32.totalorder %s177, 0
      %s180 = sadd.s32 %s179, 1
      %s181 = scalar_select %p178, %s179, %s180
      %p184 = pneg %p178
      %p185 = scmp.eq.s32.totalorder %s14, 1
      %p186 = por %p184, %p185
      %p187 = scmp.ne.s32.totalorder %s179, %s182
      %p188 = scmp.eq.s32.totalorder %s14, 0
      %p189 = por %p187, %p188
      %p190 = scmp.ne.s32.totalorder %s179, %s182
      %p191 = scmp.eq.s32.totalorder %s19, 1
      %p192 = por %p190, %p191
      %p193 = scmp.ne.s32.totalorder %s182, %s183
      %p194 = scmp.eq.s32.totalorder %s19, 0
      %p195 = por %p193, %p194
      %p196 = scmp.ne.s32.totalorder %s182, %s183
      %p197 = scmp.eq.s32.totalorder %s20, 1
      %p198 = por %p196, %p197
      %p200 = scmp.ne.s32.totalorder %s183, %s199
      %p201 = scmp.eq.s32.totalorder %s20, 0
      %p202 = por %p200, %p201
      %p203 = scmp.le.s32.totalorder 1, %s14
      %p204 = scmp.lt.s32.totalorder %s14, 3
      %p205 = pnand %p203, %p204
      %p206 = pneg %p205
      // Predicated region
      $region9: #{transformer_forward.55} parent=5 // pred_check
        _
      $region10: #{transformer_forward.55} parent=5 // pred_check_branch
        %208 = sbr.rel (%p205) target = $region12
      $region11: #{transformer_forward.55} parent=5 // pred_region
        %s209 = ssub.s32 %s14, 1
        // Predicated region
        $region13: #{transformer_forward.55} parent=11 // pred_check
          %p210 = pneg %p89
        $region14: #{transformer_forward.55} parent=11 // pred_check_branch
          %212 = sbr.rel (%p210) target = $region16
        $region15: #{transformer_forward.55} parent=11 // pred_region
          %s213 = smul.u32 16, %s26
          %p214 = scmp.lt.s32.totalorder %s213, 15
          %s215 = scalar_select %p214, %s213, 15
          %p216 = scmp.lt.s32.totalorder %s25, 0
          %s217 = scalar_select %p216, %s25, 0
          %s218 = sadd.s32 %s217, %s215
          %s219 = smul.addr %s218, 4
          %s220 = scalar_lea.vmem %s1, %s219
          %s221 = smul.u32 16, %s26
        $region16: #{transformer_forward.55} parent=11 // pred_fallthru
          _
        // Predicated region
        $region17: #{transformer_forward.55} parent=11 // pred_check
          %p222 = pneg %p115
        $region18: #{transformer_forward.55} parent=11 // pred_check_branch
          %224 = sbr.rel (%p222) target = $region20
        $region19: #{transformer_forward.55} parent=11 // pred_region
          %p225 = scmp.lt.s32.totalorder %s25, 0
          %s226 = scalar_select %p225, %s25, 0
          %s227 = scalar_lea.vmem %s2, %s226
        $region20: #{transformer_forward.55} parent=11 // pred_fallthru
          _
        // Predicated region
        $region21: #{transformer_forward.55} parent=11 // pred_check
          %p228 = pneg %p141
        $region22: #{transformer_forward.55} parent=11 // pred_check_branch
          %230 = sbr.rel (%p228) target = $region24
        $region23: #{transformer_forward.55} parent=11 // pred_region
          %p231 = scmp.lt.s32.totalorder %s26, 0
          %s232 = scalar_select %p231, %s26, 0
          %s233 = scalar_lea.vmem %s3, %s232
        $region24: #{transformer_forward.55} parent=11 // pred_fallthru
          _
        // Predicated region
        $region25: #{transformer_forward.55} parent=11 // pred_check
          %p234 = pneg %p167
        $region26: #{transformer_forward.55} parent=11 // pred_check_branch
          %236 = sbr.rel (%p234) target = $region28
        $region27: #{transformer_forward.55} parent=11 // pred_region
          %p237 = scmp.lt.s32.totalorder %s26, 0
          %s238 = scalar_select %p237, %s26, 0
          %s239 = scalar_lea.vmem %s4, %s238
        $region28: #{transformer_forward.55} parent=11 // pred_fallthru
          _
      $region12: #{transformer_forward.55} parent=5 // pred_fallthru
        _
      %p240 = scmp.lt.s32.totalorder %s14, 2
      // Predicated region
      $region29: #{transformer_forward.55} parent=5 // pred_check
        %p241 = pneg %p240
      $region30: #{transformer_forward.55} parent=5 // pred_check_branch
        %243 = sbr.rel (%p241) target = $region32
      $region31: #{transformer_forward.55} parent=5 // pred_region
        // Predicated region
        $region33: #{transformer_forward.55} parent=31 // pred_check
          %p244 = pneg %p55
        $region34: #{transformer_forward.55} parent=31 // pred_check_branch
          %246 = sbr.rel (%p244) target = $region36
        $region35: #{transformer_forward.55} parent=31 // pred_region
          %p247 = scmp.lt.s32.totalorder %s21, 1
          %s248 = scalar_select %p247, %s21, 1
          %p249 = scmp.lt.s32.totalorder %s23, 0
          %s250 = scalar_select %p249, %s23, 0
          %s251 = sadd.s32 %s250, %s248
          %s252 = smul.addr %s251, 8
          %s253 = scalar_lea.vmem %s0, %s252
        $region36: #{transformer_forward.55} parent=31 // pred_fallthru
          _
      $region32: #{transformer_forward.55} parent=5 // pred_fallthru
        _
      %p254 = scmp.le.s32.totalorder 1, %s14
      %p255 = scmp.lt.s32.totalorder %s14, 3
      %p256 = pnand %p254, %p255
      %p257 = pneg %p256
      // Predicated region
      $region37: #{transformer_forward.55} parent=5 // pred_check
        _
      $region38: #{transformer_forward.55} parent=5 // pred_check_branch
        %259 = sbr.rel (%p256) target = $region40
      $region39: #{transformer_forward.55} parent=5 // pred_region
        %s260 = ssub.s32 %s14, 1
        %p261 = scmp.lt.s32.totalorder %s24, 1
        %s262 = scalar_select %p261, %s24, 1
        %p263 = scmp.lt.s32.totalorder %s26, 0
        %s264 = scalar_select %p263, %s26, 0
        %s265 = sadd.s32 %s264, %s262
        %s266 = smul.addr %s265, 8
        %s267 = scalar_lea.vmem %s0, %s266
        %p268 = pneg %p61
        %p269 = pneg %p58
        %s270 = smul.u32 16, %s26
        %p271 = scmp.lt.s32.totalorder %s270, 15
        %s272 = scalar_select %p271, %s270, 15
        %p273 = scmp.lt.s32.totalorder %s25, 0
        %s274 = scalar_select %p273, %s25, 0
        %s275 = sadd.s32 %s274, %s272
        %s276 = smul.addr %s275, 4
        %s277 = scalar_lea.vmem %s1, %s276
        %p278 = pneg %p89
        %p279 = pneg %p86
        %p280 = scmp.lt.s32.totalorder %s25, 0
        %s281 = scalar_select %p280, %s25, 0
        %s282 = scalar_lea.vmem %s2, %s281
        %p283 = pneg %p115
        %p284 = pneg %p112
        %p285 = scmp.lt.s32.totalorder %s26, 0
        %s286 = scalar_select %p285, %s26, 0
        %s287 = scalar_lea.vmem %s3, %s286
        %p288 = pneg %p141
        %p289 = pneg %p138
        %p290 = scmp.lt.s32.totalorder %s26, 0
        %s291 = scalar_select %p290, %s26, 0
        %s292 = scalar_lea.vmem %s4, %s291
        %p293 = pneg %p167
        %p294 = pneg %p164
        %p295 = pneg %p195
        %p296 = pneg %p192
        %s297 = sand.u32 %s182, 1
        %s298 = scalar_lea.sflag [#allocation4], %s297
        %s299 = sand.u32 %s182, 1
        %s300 = smul.addr %s299, 8
        %s301 = scalar_lea.vmem [#allocation3], %s300
        %p302 = scmp.lt.s32.totalorder %s24, 1
        %s303 = scalar_select %p302, %s24, 1
        %p304 = scmp.lt.s32.totalorder %s26, 0
        %s305 = scalar_select %p304, %s26, 0
        %s306 = sadd.s32 %s305, %s303
        %s307 = smul.addr %s306, 8
        %s308 = scalar_lea.vmem %s0, %s307
        %s309 = smul.u32 16, %s26
        %p310 = scmp.lt.s32.totalorder %s309, 15
        %s311 = scalar_select %p310, %s309, 15
        %p312 = scmp.lt.s32.totalorder %s25, 0
        %s313 = scalar_select %p312, %s25, 0
        %s314 = sadd.s32 %s313, %s311
        %s315 = smul.addr %s314, 4
        %s316 = scalar_lea.vmem %s1, %s315
        %s317 = smul.u32 16, %s26
        %p318 = scmp.lt.s32.totalorder %s25, 0
        %s319 = scalar_select %p318, %s25, 0
        %s320 = scalar_lea.vmem %s2, %s319
        %p321 = scmp.lt.s32.totalorder %s26, 0
        %s322 = scalar_select %p321, %s26, 0
        %s323 = scalar_lea.vmem %s3, %s322
        %p324 = scmp.lt.s32.totalorder %s26, 0
        %s325 = scalar_select %p324, %s26, 0
        %s326 = scalar_lea.vmem %s4, %s325
        %p327 = scmp.eq.s32.totalorder %s26, 0
        // Predicated region
        $region41: #{transformer_forward.55} parent=39 // pred_check
          %p328 = pneg %p327
        $region42: #{transformer_forward.55} parent=39 // pred_check_branch
          %330 = sbr.rel (%p328) target = $region44
        $region43: #{transformer_forward.55} parent=39 // pred_region
          %331 = vst [vmem:[#allocation2] sm:$0xff] 0.0
        $region44: #{transformer_forward.55} parent=39 // pred_fallthru
          _
        %v332 = vld [vmem:[%s308] sm:$0xff]
        %v333 = vld [vmem:[%s323] sm:$0x1]
        %v334 = vld [vmem:[%s326] sm:$0x1]
        %335 = vadd.xlane.f32.xlu0 %v332
        %v336 = vpop.xlane.xlu0 %335
        %v337 = vrcp.pop 128.0
        %v338 = vmul.f32 128.0, %v337
        %v339 = vsub.f32 1.0, %v338
        %v340 = vmul.f32 %v337, %v339
        %v341 = vadd.f32 %v337, %v340
        %vm342 = vweird.f32 %v337
        %v343 = vsel %vm342, %v337, %v341
        %v344 = vmul.f32 %v336, %v343
        %v345 = vsub.f32 %v332, %v344
        %v346 = vmul.f32 %v345, %v345
        %347 = vadd.xlane.f32.xlu0 %v346
        %v348 = vpop.xlane.xlu0 %347
        %v349 = vmul.f32 %v348, %v343
        %v350 = vadd.f32 %v349, 1e-05
        %v351 = vrsqrt.pop %v350
        %v352 = vmul.f32 %v351, %v350
        %v353 = vmul.f32 %v352, %v351
        %v354 = vmul.f32 0.5, %v353
        %v355 = vsub.f32 1.5, %v354
        %v356 = vmul.f32 %v351, %v355
        %vm357 = vweird.f32 %v350
        %vm358 = vweird.f32 %v351
        %vm359 = vmor %vm357, %vm358
        %v360 = vsel %vm359, %v351, %v356
        %v361 = vmul.f32 %v345, %v360
        %v363 = vperm.slane %v333, 0
        %v365 = vmul.f32 %v361, %v363
        %v367 = vperm.slane %v334, 0
        %v369 = vadd.f32 %v365, %v367
        %v370 = vld [vmem:[#allocation2] sm:$0xff]
        %v371 = vpack.c.bf16 %v369, %v369
        %v372 = vld [vmem:[%s316] sm:$0xf]
        %v373 = vld [vmem:[%s316 + $0x4] sm:$0xf]
        %v374 = vld [vmem:[%s316 + $0x8] sm:$0xf]
        %v375 = vld [vmem:[%s316 + $0xc] sm:$0xf]
        %v376 = vld [vmem:[%s316 + $0x10] sm:$0xf]
        %v377 = vld [vmem:[%s316 + $0x14] sm:$0xf]
        %v378 = vld [vmem:[%s316 + $0x18] sm:$0xf]
        %v379 = vld [vmem:[%s316 + $0x1c] sm:$0xf]
        %v380 = vld [vmem:[%s316 + $0x20] sm:$0xf]
        %v381 = vld [vmem:[%s316 + $0x24] sm:$0xf]
        %v382 = vld [vmem:[%s316 + $0x28] sm:$0xf]
        %v383 = vld [vmem:[%s316 + $0x2c] sm:$0xf]
        %v384 = vld [vmem:[%s316 + $0x30] sm:$0xf]
        %v385 = vld [vmem:[%s316 + $0x34] sm:$0xf]
        %v386 = vld [vmem:[%s316 + $0x38] sm:$0xf]
        %v387 = vld [vmem:[%s316 + $0x3c] sm:$0xf]
        %v404 = vunpack.c.l.b16 %v372
        %v405 = vunpack.c.l.b16 %v373
        %v406 = vunpack.c.l.b16 %v374
        %v407 = vunpack.c.l.b16 %v375
        %v408 = vunpack.c.l.b16 %v376
        %v409 = vunpack.c.l.b16 %v377
        %v410 = vunpack.c.l.b16 %v378
        %v411 = vunpack.c.l.b16 %v379
        %v412 = vunpack.c.l.b16 %v380
        %v413 = vunpack.c.l.b16 %v381
        %v414 = vunpack.c.l.b16 %v382
        %v415 = vunpack.c.l.b16 %v383
        %v416 = vunpack.c.l.b16 %v384
        %v417 = vunpack.c.l.b16 %v385
        %v418 = vunpack.c.l.b16 %v386
        %v419 = vunpack.c.l.b16 %v387
        %v420 = vpack.c.b16 %v405, %v404
        %v421 = vpack.c.b16 %v407, %v406
        %v422 = vpack.c.b16 %v409, %v408
        %v423 = vpack.c.b16 %v411, %v410
        %v424 = vpack.c.b16 %v413, %v412
        %v425 = vpack.c.b16 %v415, %v414
        %v426 = vpack.c.b16 %v417, %v416
        %v427 = vpack.c.b16 %v419, %v418
        %436 = vmatpush.bf16.msra.mxu0 %v427
        %437 = vmatpush.bf16.msra.mxu0 %v426
        %438 = vmatpush.bf16.msra.mxu0 %v425
        %439 = vmatpush.bf16.msra.mxu0 %v424
        %440 = vmatpush.bf16.msra.mxu0 %v423
        %441 = vmatpush.bf16.msra.mxu0 %v422
        %442 = vmatpush.bf16.msra.mxu0 %v421
        %443 = vmatpush.bf16.msra.mxu0 %v420
        %444 = vmatmul.bf16.gmra.mxu0 %v371
        %v445 = vpop.f32.mrf.mxu0
        %v446 = vadd.f32 0.0, %v445
        %v447 = vpop.f32.mrf.mxu0
        %448 = vdwg.mxu0
        %v449 = vadd.f32 %v370, %v446
        %450 = vst [vmem:[#allocation2] sm:$0xff] %v449
        // Predicated region
        $region45: #{transformer_forward.55} parent=39 // pred_check
          %p451 = pneg %p327
        $region46: #{transformer_forward.55} parent=39 // pred_check_branch
          %453 = sbr.rel (%p451) target = $region48
        $region47: #{transformer_forward.55} parent=39 // pred_region
          %v454 = vld [vmem:[#allocation2] sm:$0xff]
          %v455 = vld [vmem:[%s320] sm:$0x1]
          %v457 = vperm.slane %v455, 0
          %v459 = vadd.f32 %v454, %v457
          %460 = vst [vmem:[%s301] sm:$0xff] %v459
        $region48: #{transformer_forward.55} parent=39 // pred_fallthru
          _
        %s461 = sand.u32 %s182, 1
        %s462 = scalar_lea.sflag [#allocation4], %s461
        %s463 = sand.u32 %s182, 1
        %s464 = smul.addr %s463, 8
        %s465 = scalar_lea.vmem [#allocation3], %s464
        // Predicated region
        $region49: #{transformer_forward.55} parent=39 // pred_check
          %p466 = pneg %p192
        $region50: #{transformer_forward.55} parent=39 // pred_check_branch
          %468 = sbr.rel (%p466) target = $region52
        $region51: #{transformer_forward.55} parent=39 // pred_region
          %470 = vsyncadd %s462, 0
          %s471 = sadd.s32 %s25, %s24
          %s472 = smul.addr %s471, 8
          %s473 = scalar_lea.hbm %s5, %s472
          %s475 = sshll.u32 %s465, 4
          %s476 = int_to_ptr.vmem [resolvable:$true] %s475
          %s477 = sshll.u32 %s473, 4
          %s478 = int_to_ptr.hbm [resolvable:$true] %s477
          %480 = dma.vmem_to_hbm [thread:$0]  %s476, 128, %s478, %s462
        $region52: #{transformer_forward.55} parent=39 // pred_fallthru
          _
      $region40: #{transformer_forward.55} parent=5 // pred_fallthru
        _
      %p481 = scmp.le.s32.totalorder 2, %s14
      // Predicated region
      $region53: #{transformer_forward.55} parent=5 // pred_check
        %p482 = pneg %p481
      $region54: #{transformer_forward.55} parent=5 // pred_check_branch
        %484 = sbr.rel (%p482) target = $region56
      $region55: #{transformer_forward.55} parent=5 // pred_region
        %s485 = ssub.s32 %s14, 2
        // Predicated region
        $region57: #{transformer_forward.55} parent=55 // pred_check
          %p486 = pneg %p198
        $region58: #{transformer_forward.55} parent=55 // pred_check_branch
          %488 = sbr.rel (%p486) target = $region60
        $region59: #{transformer_forward.55} parent=55 // pred_region
          %s489 = sand.u32 %s183, 1
          %s490 = scalar_lea.sflag [#allocation4], %s489
          %s491 = sand.u32 %s183, 1
          %s492 = smul.addr %s491, 8
          %s493 = scalar_lea.vmem [#allocation3], %s492
          %495 = dma.done %s490, 128
        $region60: #{transformer_forward.55} parent=55 // pred_fallthru
          _
      $region56: #{transformer_forward.55} parent=5 // pred_fallthru
        _
    $region6: #{transformer_forward.55} parent=1 // loop_footer
      %s18 = sadd.s32 1, %s14
    $region7: #{transformer_forward.55} parent=1 // loop_footer_branch
      %13 = sbr.rel target = $region3
    $region8: #{transformer_forward.55} parent=1 // loop_exit
      _
    %496 = vsyncpa [#allocation4], 1
    %s497 = scalar_lea.sflag [#allocation4], 1
    %498 = vsyncpa %s497, 1

</llo_original>
